<compile_context>
chip_gen: v7x
topology: tpu7x:2x2x1
jax: 0.10.0
libtpu: 0.0.40
codegen_flags: <defaults>
</compile_context>

<pallas_src>
import functools

import jax
import jax.numpy as jnp
from jax.experimental import pallas as pl
from jax.experimental.pallas import tpu as pltpu


_VMEM_BUDGET = 40 * 1024 * 1024   # budget used when picking TB
_VMEM_LIMIT = 48 * 1024 * 1024    # scoped VMEM limit (safe under v7x's 64 MiB)


def _round_up(x, m):
    return ((x + m - 1) // m) * m


def _vmem_bytes(tb, bp, i_dim, hp):
    """Rough per-grid-step VMEM footprint (f32, default double buffering)."""
    f = 4
    x_blk = 2 * tb * bp * i_dim * f          # x input block (double buffered)
    wih = 2 * i_dim * 4 * hp * f             # W_ih^T (constant block index)
    whh = 2 * hp * 4 * hp * f                # W_hh^T (constant block index)
    bias = 2 * 8 * 4 * hp * f                # fused bias (sublane-padded)
    h_out = 2 * tb * bp * hp * f             # output block (double buffered)
    gx_scr = tb * bp * 4 * hp * f            # gate pre-activation scratch
    state = 2 * bp * hp * f                  # h / c scratch
    return x_blk + wih + whh + bias + h_out + gx_scr + state


def _pick_time_block(t, bp, i_dim, hp, budget=_VMEM_BUDGET):
    """Largest divisor of T (<=128) whose VMEM footprint fits the budget."""
    best = 1
    for tb in range(1, min(t, 128) + 1):
        if t % tb == 0 and _vmem_bytes(tb, bp, i_dim, hp) <= budget:
            best = tb
    return best


def _sigmoid(x):
    # Exactly logistic(x), but guaranteed to lower as a single EUP tanh push.
    return 0.5 * jnp.tanh(0.5 * x) + 0.5


def lstm_fused_kernel(x_ref, wih_ref, whh_ref, b_ref, h_out_ref,
                      gx_scr, h_scr, c_scr, *, hp, tb, bp, i_dim, unroll):
    """Fused input projection + `tb` sequential LSTM steps.

    x_ref    : (tb, bp, I)    raw inputs for this time block (time-major, B padded)
    wih_ref  : (I, 4*hp)      W_ih^T, gate-padded
    whh_ref  : (hp, 4*hp)     W_hh^T, gate-padded
    b_ref    : (1, 4*hp)      b_ih + b_hh, gate-padded
    h_out_ref: (tb, bp, hp)   hidden state for every step in this time block
    gx_scr   : (tb, bp, 4*hp) block-level gate pre-activations (VMEM scratch)
    h_scr/c_scr : (bp, hp)    recurrent state, persists across grid steps
    """
    # h0 = c0 = 0, as in nn.LSTM when no initial state is supplied.
    @pl.when(pl.program_id(0) == 0)
    def _():
        h_scr[...] = jnp.zeros_like(h_scr)
        c_scr[...] = jnp.zeros_like(c_scr)

    # (1) Block-level input projection: one (tb*bp, I) x (I, 4*hp) MXU matmul,
    #     off the serial critical path.  Bias fused here.
    x2d = x_ref[...].reshape(tb * bp, i_dim)
    gx = jnp.dot(x2d, wih_ref[...], preferred_element_type=jnp.float32)
    gx = gx + b_ref[...]
    gx_scr[...] = gx.reshape(tb, bp, 4 * hp)

    # (2) The irreducible recurrence: only h @ W_hh^T remains per step.
    def step(s, carry):
        h_prev = h_scr[...]                      # (bp, hp)
        c_prev = c_scr[...]                      # (bp, hp)
        gates = gx_scr[s] + jnp.dot(
            h_prev, whh_ref[...], preferred_element_type=jnp.float32)
        # Gate slices are 128-lane aligned (hp is a multiple of 128).
        i_g = _sigmoid(gates[:, 0 * hp:1 * hp])
        f_g = _sigmoid(gates[:, 1 * hp:2 * hp])
        g_g = jnp.tanh(gates[:, 2 * hp:3 * hp])
        o_g = _sigmoid(gates[:, 3 * hp:4 * hp])
        c_new = f_g * c_prev + i_g * g_g
        h_new = o_g * jnp.tanh(c_new)
        c_scr[...] = c_new
        h_scr[...] = h_new
        h_out_ref[s] = h_new                     # lane-dense (bp, hp) store
        return carry

    jax.lax.fori_loop(0, tb, step, 0, unroll=unroll)


def lstm_model_forward(x, prepared):
    """Forward of LSTMModel: out = fc(lstm(x)[0]).  x: (B, T, I) batch_first."""
    wih_p = prepared["w_ih_p"]   # (I, 4*Hp)
    whh_p = prepared["w_hh_p"]   # (Hp, 4*Hp)
    b_p = prepared["b_p"]        # (1, 4*Hp)
    wfc_p = prepared["w_fc_p"]   # (Hp, O)
    b_fc = prepared["b_fc"]      # (O,)

    B, T, I = x.shape
    Hp = whh_p.shape[0]
    Bp = _round_up(B, 8)                       # sublane-pad the batch
    TB = _pick_time_block(T, Bp, I, Hp)
    unroll = min(TB, 8)

    # Time-major, batch-padded input for the kernel (small: raw x, not gx).
    x_t = jnp.transpose(x.astype(jnp.float32), (1, 0, 2))        # (T, B, I)
    if Bp != B:
        x_t = jnp.pad(x_t, ((0, 0), (0, Bp - B), (0, 0)))        # (T, Bp, I)

    kernel = functools.partial(
        lstm_fused_kernel, hp=Hp, tb=TB, bp=Bp, i_dim=I, unroll=unroll)

    h_seq = pl.pallas_call(
        kernel,
        out_shape=jax.ShapeDtypeStruct((T, Bp, Hp), jnp.float32),
        grid_spec=pltpu.PrefetchScalarGridSpec(
            num_scalar_prefetch=0,
            grid=(T // TB,),
            in_specs=[
                pl.BlockSpec((TB, Bp, I), lambda t: (t, 0, 0)),    # x block
                pl.BlockSpec((I, 4 * Hp), lambda t: (0, 0)),       # W_ih^T
                pl.BlockSpec((Hp, 4 * Hp), lambda t: (0, 0)),      # W_hh^T
                pl.BlockSpec((1, 4 * Hp), lambda t: (0, 0)),       # fused bias
            ],
            out_specs=pl.BlockSpec((TB, Bp, Hp), lambda t: (t, 0, 0)),
            scratch_shapes=[
                pltpu.VMEM((TB, Bp, 4 * Hp), jnp.float32),  # gx block
                pltpu.VMEM((Bp, Hp), jnp.float32),          # h state
                pltpu.VMEM((Bp, Hp), jnp.float32),          # c state
            ],
        ),
        compiler_params=pltpu.CompilerParams(
            dimension_semantics=("arbitrary",),   # time recurrence is serial
            vmem_limit_bytes=_VMEM_LIMIT,
        ),
    )(x_t, wih_p, whh_p, b_p)

    # fc hoisted out of the recurrence: one (T*B, Hp) x (Hp, O) matmul producing
    # the batch_first output directly.  Default MXU precision (perf review);
    # padded batch rows are dropped here.
    h_seq = h_seq[:, :B, :]
    out = jnp.einsum("tbh,ho->bto", h_seq, wfc_p) + b_fc          # (B, T, O)
    return out


lstm_model_forward = jax.jit(lstm_model_forward)


def prepare_params(params, hidden_size):
    """Pad / transpose PyTorch-layout weights for the TPU kernel.

    The per-gate hidden dim is padded to a multiple of 128 (Hp) so every gate
    slice is a whole-vreg view; padded hidden units provably stay exactly 0, so
    the computation is numerically identical to the unpadded model.  Gate order
    is PyTorch's (i, f, g, o); b_ih + b_hh is fused.
    """
    w_ih = params["w_ih"]   # (4H, I)
    w_hh = params["w_hh"]   # (4H, H)
    b_ih = params["b_ih"]   # (4H,)
    b_hh = params["b_hh"]   # (4H,)
    w_fc = params["w_fc"]   # (O, H)
    b_fc = params["b_fc"]   # (O,)

    H = hidden_size
    I = w_ih.shape[1]
    O = w_fc.shape[0]
    Hp = _round_up(H, 128)

    wih_p = jnp.zeros((I, 4 * Hp), jnp.float32)
    whh_p = jnp.zeros((Hp, 4 * Hp), jnp.float32)
    b_p = jnp.zeros((4 * Hp,), jnp.float32)
    bias = b_ih + b_hh
    for g in range(4):
        wih_p = wih_p.at[:, g * Hp:g * Hp + H].set(w_ih[g * H:(g + 1) * H, :].T)
        whh_p = whh_p.at[:H, g * Hp:g * Hp + H].set(w_hh[g * H:(g + 1) * H, :].T)
        b_p = b_p.at[g * Hp:g * Hp + H].set(bias[g * H:(g + 1) * H])

    wfc_p = jnp.zeros((Hp, O), jnp.float32).at[:H, :].set(w_fc.T)

    return {"w_ih_p": wih_p, "w_hh_p": whh_p, "b_p": b_p.reshape(1, 4 * Hp),
            "w_fc_p": wfc_p, "b_fc": b_fc.astype(jnp.float32)}


def reference_forward(x, params, hidden_size):
    """Pure-JAX f32 reference of the PyTorch forward (LSTM + Linear), unpadded."""
    hi = jax.lax.Precision.HIGHEST
    w_ih = params["w_ih"]
    w_hh = params["w_hh"]
    b = params["b_ih"] + params["b_hh"]
    w_fc = params["w_fc"]
    b_fc = params["b_fc"]
    H = hidden_size
    B, T, I = x.shape

    def step(carry, x_t):
        h, c = carry
        gates = (jnp.dot(x_t, w_ih.T, precision=hi)
                 + jnp.dot(h, w_hh.T, precision=hi) + b)
        i_g = jax.nn.sigmoid(gates[:, 0 * H:1 * H])
        f_g = jax.nn.sigmoid(gates[:, 1 * H:2 * H])
        g_g = jnp.tanh(gates[:, 2 * H:3 * H])
        o_g = jax.nn.sigmoid(gates[:, 3 * H:4 * H])
        c = f_g * c + i_g * g_g
        h = o_g * jnp.tanh(c)
        return (h, c), h

    h0 = jnp.zeros((B, H), jnp.float32)
    c0 = jnp.zeros((B, H), jnp.float32)
    _, hs = jax.lax.scan(step, (h0, c0), jnp.transpose(x, (1, 0, 2)))
    out = jnp.dot(hs, w_fc.T, precision=hi) + b_fc   # (T, B, O)
    return jnp.transpose(out, (1, 0, 2))             # (B, T, O)


def init_params(key, input_size, hidden_size, output_size):
    """PyTorch-shaped parameters, uniform(-1/sqrt(H), 1/sqrt(H)) like defaults."""
    k = 1.0 / jnp.sqrt(jnp.float32(hidden_size))
    keys = jax.random.split(key, 6)
    return {
        "w_ih": jax.random.uniform(keys[0], (4 * hidden_size, input_size),
                                   jnp.float32, -k, k),
        "w_hh": jax.random.uniform(keys[1], (4 * hidden_size, hidden_size),
                                   jnp.float32, -k, k),
        "b_ih": jax.random.uniform(keys[2], (4 * hidden_size,), jnp.float32, -k, k),
        "b_hh": jax.random.uniform(keys[3], (4 * hidden_size,), jnp.float32, -k, k),
        "w_fc": jax.random.uniform(keys[4], (output_size, hidden_size),
                                   jnp.float32, -k, k),
        "b_fc": jax.random.uniform(keys[5], (output_size,), jnp.float32, -k, k),
    }


if __name__ == "__main__":
    B, T = 2, 8
    input_size, hidden_size, output_size = 16, 32, 8

    key = jax.random.PRNGKey(0)
    k_x, k_p = jax.random.split(key)
    x = jax.random.normal(k_x, (B, T, input_size), jnp.float32)
    params = init_params(k_p, input_size, hidden_size, output_size)
    prepared = prepare_params(params, hidden_size)

    out = lstm_model_forward(x, prepared)
    out = jax.block_until_ready(out)

    ref = reference_forward(x, params, hidden_size)
    assert out.shape == (B, T, output_size), out.shape
    err = float(jnp.max(jnp.abs(out - ref)))
    # Everything in the kernel path is f32; the only deviation from the HIGHEST-
    # precision reference is the hoisted fc matmul running at default TPU MXU
    # precision (per perf review), which bounds the max-abs error well under 2e-3.
    assert err < 2e-3, err

    print("KERNEL_OK")
</pallas_src>

<mosaic_0001>
module attributes {stable_mosaic.version = 11 : i64} {
  func.func @lstm_fused_kernel(%arg0: i32, %arg1: memref<8x8x16xf32, #tpu.memory_space<vmem>>, %arg2: memref<16x512xf32, #tpu.memory_space<vmem>>, %arg3: memref<128x512xf32, #tpu.memory_space<vmem>>, %arg4: memref<1x512xf32, #tpu.memory_space<vmem>>, %arg5: memref<8x8x128xf32, #tpu.memory_space<vmem>>, %arg6: memref<8x8x512xf32, #tpu.memory_space<vmem>>, %arg7: memref<8x128xf32, #tpu.memory_space<vmem>>, %arg8: memref<8x128xf32, #tpu.memory_space<vmem>>) attributes {dimension_semantics = [#tpu.dimension_semantics<arbitrary>], iteration_bounds = array<i64: 1>, scalar_prefetch = 0 : i64, scratch_operands = 3 : i64, tpu.core_type = #tpu.core_type<tc>, window_params = [{transform_indices = @transform_0, window_bounds = array<i64: 8, 8, 16>}, {pipeline_mode = #tpu.pipeline_mode<synchronous>, transform_indices = @transform_1, window_bounds = array<i64: 16, 512>}, {pipeline_mode = #tpu.pipeline_mode<synchronous>, transform_indices = @transform_2, window_bounds = array<i64: 128, 512>}, {pipeline_mode = #tpu.pipeline_mode<synchronous>, transform_indices = @transform_3, window_bounds = array<i64: 1, 512>}, {transform_indices = @transform_4, window_bounds = array<i64: 8, 8, 128>}]} {
    %c0_i32 = arith.constant 0 : i32
    %0 = arith.cmpi eq, %arg0, %c0_i32 : i32
    %1 = arith.extui %0 : i1 to i32
    %c0_i32_0 = arith.constant 0 : i32
    %2 = arith.cmpi ne, %1, %c0_i32_0 : i32
    scf.if %2 {
      %cst_203 = arith.constant 0.000000e+00 : f32
      %372 = vector.broadcast %cst_203 : f32 to vector<8x128xf32>
      %c0_204 = arith.constant 0 : index
      %c0_205 = arith.constant 0 : index
      %373 = vector.load %arg7[%c0_204, %c0_205] : memref<8x128xf32, #tpu.memory_space<vmem>>, vector<8x128xf32>
      tpu.vector_store %arg7[%c0_204, %c0_205], %372 {strides = array<i32>} : memref<8x128xf32, #tpu.memory_space<vmem>>, vector<8x128xf32>,
      %cst_206 = arith.constant 0.000000e+00 : f32
      %374 = vector.broadcast %cst_206 : f32 to vector<8x128xf32>
      %c0_207 = arith.constant 0 : index
      %c0_208 = arith.constant 0 : index
      %375 = vector.load %arg8[%c0_207, %c0_208] : memref<8x128xf32, #tpu.memory_space<vmem>>, vector<8x128xf32>
      tpu.vector_store %arg8[%c0_207, %c0_208], %374 {strides = array<i32>} : memref<8x128xf32, #tpu.memory_space<vmem>>, vector<8x128xf32>,
    } else {
    }
    %c0 = arith.constant 0 : index
    %c0_1 = arith.constant 0 : index
    %c0_2 = arith.constant 0 : index
    %3 = vector.load %arg1[%c0, %c0_1, %c0_2] : memref<8x8x16xf32, #tpu.memory_space<vmem>>, vector<8x8x16xf32>
    %4 = vector.shape_cast %3 : vector<8x8x16xf32> to vector<64x16xf32>
    %c0_3 = arith.constant 0 : index
    %c0_4 = arith.constant 0 : index
    %5 = vector.load %arg2[%c0_3, %c0_4] : memref<16x512xf32, #tpu.memory_space<vmem>>, vector<16x512xf32>
    %cst = arith.constant dense<0.000000e+00> : vector<64x512xf32>
    %6 = tpu.matmul %4, %5, %cst {dimension_numbers = #tpu.dot_dimension_numbers<[1], [0], [0], [1], [0, 0, 1, 1], [], []>} : vector<64x16xf32>, vector<16x512xf32>, vector<64x512xf32> -> vector<64x512xf32>
    %c0_5 = arith.constant 0 : index
    %c0_6 = arith.constant 0 : index
    %7 = vector.load %arg4[%c0_5, %c0_6] : memref<1x512xf32, #tpu.memory_space<vmem>>, vector<1x512xf32>
    %8 = vector.broadcast %7 : vector<1x512xf32> to vector<64x512xf32>
    %9 = arith.addf %6, %8 : vector<64x512xf32>
    %10 = vector.shape_cast %9 : vector<64x512xf32> to vector<8x8x512xf32>
    %c0_7 = arith.constant 0 : index
    %c0_8 = arith.constant 0 : index
    %c0_9 = arith.constant 0 : index
    %11 = vector.load %arg6[%c0_7, %c0_8, %c0_9] : memref<8x8x512xf32, #tpu.memory_space<vmem>>, vector<8x8x512xf32>
    tpu.vector_store %arg6[%c0_7, %c0_8, %c0_9], %10 {strides = array<i32>} : memref<8x8x512xf32, #tpu.memory_space<vmem>>, vector<8x8x512xf32>,
    %c0_i32_10 = arith.constant 0 : i32
    %c0_11 = arith.constant 0 : index
    %c0_12 = arith.constant 0 : index
    %12 = vector.load %arg7[%c0_11, %c0_12] : memref<8x128xf32, #tpu.memory_space<vmem>>, vector<8x128xf32>
    %c0_13 = arith.constant 0 : index
    %c0_14 = arith.constant 0 : index
    %13 = vector.load %arg8[%c0_13, %c0_14] : memref<8x128xf32, #tpu.memory_space<vmem>>, vector<8x128xf32>
    %14 = arith.index_cast %c0_i32_10 : i32 to index
    %c0_15 = arith.constant 0 : index
    %c0_16 = arith.constant 0 : index
    %15 = vector.load %arg6[%14, %c0_15, %c0_16] : memref<8x8x512xf32, #tpu.memory_space<vmem>>, vector<1x8x512xf32>
    %16 = vector.shape_cast %15 : vector<1x8x512xf32> to vector<8x512xf32>
    %c0_17 = arith.constant 0 : index
    %c0_18 = arith.constant 0 : index
    %17 = vector.load %arg3[%c0_17, %c0_18] : memref<128x512xf32, #tpu.memory_space<vmem>>, vector<128x512xf32>
    %cst_19 = arith.constant dense<0.000000e+00> : vector<8x512xf32>
    %18 = tpu.matmul %12, %17, %cst_19 {dimension_numbers = #tpu.dot_dimension_numbers<[1], [0], [0], [1], [0, 0, 1, 1], [], []>} : vector<8x128xf32>, vector<128x512xf32>, vector<8x512xf32> -> vector<8x512xf32>
    %19 = arith.addf %16, %18 : vector<8x512xf32>
    %20 = vector.extract_strided_slice %19 {offsets = [0, 0], sizes = [8, 128], strides = [1, 1]} : vector<8x512xf32> to vector<8x128xf32>
    %cst_20 = arith.constant 5.000000e-01 : f32
    %21 = vector.broadcast %cst_20 : f32 to vector<8x128xf32>
    %22 = arith.mulf %21, %20 : vector<8x128xf32>
    %23 = math.tanh %22 : vector<8x128xf32>
    %cst_21 = arith.constant 5.000000e-01 : f32
    %24 = vector.broadcast %cst_21 : f32 to vector<8x128xf32>
    %25 = arith.mulf %24, %23 : vector<8x128xf32>
    %cst_22 = arith.constant 5.000000e-01 : f32
    %26 = vector.broadcast %cst_22 : f32 to vector<8x128xf32>
    %27 = arith.addf %25, %26 : vector<8x128xf32>
    %28 = vector.extract_strided_slice %19 {offsets = [0, 128], sizes = [8, 128], strides = [1, 1]} : vector<8x512xf32> to vector<8x128xf32>
    %cst_23 = arith.constant 5.000000e-01 : f32
    %29 = vector.broadcast %cst_23 : f32 to vector<8x128xf32>
    %30 = arith.mulf %29, %28 : vector<8x128xf32>
    %31 = math.tanh %30 : vector<8x128xf32>
    %cst_24 = arith.constant 5.000000e-01 : f32
    %32 = vector.broadcast %cst_24 : f32 to vector<8x128xf32>
    %33 = arith.mulf %32, %31 : vector<8x128xf32>
    %cst_25 = arith.constant 5.000000e-01 : f32
    %34 = vector.broadcast %cst_25 : f32 to vector<8x128xf32>
    %35 = arith.addf %33, %34 : vector<8x128xf32>
    %36 = vector.extract_strided_slice %19 {offsets = [0, 256], sizes = [8, 128], strides = [1, 1]} : vector<8x512xf32> to vector<8x128xf32>
    %37 = math.tanh %36 : vector<8x128xf32>
    %38 = vector.extract_strided_slice %19 {offsets = [0, 384], sizes = [8, 128], strides = [1, 1]} : vector<8x512xf32> to vector<8x128xf32>
    %cst_26 = arith.constant 5.000000e-01 : f32
    %39 = vector.broadcast %cst_26 : f32 to vector<8x128xf32>
    %40 = arith.mulf %39, %38 : vector<8x128xf32>
    %41 = math.tanh %40 : vector<8x128xf32>
    %cst_27 = arith.constant 5.000000e-01 : f32
    %42 = vector.broadcast %cst_27 : f32 to vector<8x128xf32>
    %43 = arith.mulf %42, %41 : vector<8x128xf32>
    %cst_28 = arith.constant 5.000000e-01 : f32
    %44 = vector.broadcast %cst_28 : f32 to vector<8x128xf32>
    %45 = arith.addf %43, %44 : vector<8x128xf32>
    %46 = arith.mulf %35, %13 : vector<8x128xf32>
    %47 = arith.mulf %27, %37 : vector<8x128xf32>
    %48 = arith.addf %46, %47 : vector<8x128xf32>
    %49 = math.tanh %48 : vector<8x128xf32>
    %50 = arith.mulf %45, %49 : vector<8x128xf32>
    %c0_29 = arith.constant 0 : index
    %c0_30 = arith.constant 0 : index
    %51 = vector.load %arg8[%c0_29, %c0_30] : memref<8x128xf32, #tpu.memory_space<vmem>>, vector<8x128xf32>
    tpu.vector_store %arg8[%c0_29, %c0_30], %48 {strides = array<i32>} : memref<8x128xf32, #tpu.memory_space<vmem>>, vector<8x128xf32>,
    %c0_31 = arith.constant 0 : index
    %c0_32 = arith.constant 0 : index
    %52 = vector.load %arg7[%c0_31, %c0_32] : memref<8x128xf32, #tpu.memory_space<vmem>>, vector<8x128xf32>
    tpu.vector_store %arg7[%c0_31, %c0_32], %50 {strides = array<i32>} : memref<8x128xf32, #tpu.memory_space<vmem>>, vector<8x128xf32>,
    %53 = arith.index_cast %c0_i32_10 : i32 to index
    %c0_33 = arith.constant 0 : index
    %c0_34 = arith.constant 0 : index
    %54 = vector.load %arg5[%53, %c0_33, %c0_34] : memref<8x8x128xf32, #tpu.memory_space<vmem>>, vector<1x8x128xf32>
    %55 = vector.shape_cast %54 : vector<1x8x128xf32> to vector<8x128xf32>
    %56 = vector.shape_cast %50 : vector<8x128xf32> to vector<1x8x128xf32>
    tpu.vector_store %arg5[%53, %c0_33, %c0_34], %56 {strides = array<i32>} : memref<8x8x128xf32, #tpu.memory_space<vmem>>, vector<1x8x128xf32>,
    %c1_i32 = arith.constant 1 : i32
    %c0_35 = arith.constant 0 : index
    %c0_36 = arith.constant 0 : index
    %57 = vector.load %arg7[%c0_35, %c0_36] : memref<8x128xf32, #tpu.memory_space<vmem>>, vector<8x128xf32>
    %c0_37 = arith.constant 0 : index
    %c0_38 = arith.constant 0 : index
    %58 = vector.load %arg8[%c0_37, %c0_38] : memref<8x128xf32, #tpu.memory_space<vmem>>, vector<8x128xf32>
    %59 = arith.index_cast %c1_i32 : i32 to index
    %c0_39 = arith.constant 0 : index
    %c0_40 = arith.constant 0 : index
    %60 = vector.load %arg6[%59, %c0_39, %c0_40] : memref<8x8x512xf32, #tpu.memory_space<vmem>>, vector<1x8x512xf32>
    %61 = vector.shape_cast %60 : vector<1x8x512xf32> to vector<8x512xf32>
    %c0_41 = arith.constant 0 : index
    %c0_42 = arith.constant 0 : index
    %62 = vector.load %arg3[%c0_41, %c0_42] : memref<128x512xf32, #tpu.memory_space<vmem>>, vector<128x512xf32>
    %cst_43 = arith.constant dense<0.000000e+00> : vector<8x512xf32>
    %63 = tpu.matmul %57, %62, %cst_43 {dimension_numbers = #tpu.dot_dimension_numbers<[1], [0], [0], [1], [0, 0, 1, 1], [], []>} : vector<8x128xf32>, vector<128x512xf32>, vector<8x512xf32> -> vector<8x512xf32>
    %64 = arith.addf %61, %63 : vector<8x512xf32>
    %65 = vector.extract_strided_slice %64 {offsets = [0, 0], sizes = [8, 128], strides = [1, 1]} : vector<8x512xf32> to vector<8x128xf32>
    %cst_44 = arith.constant 5.000000e-01 : f32
    %66 = vector.broadcast %cst_44 : f32 to vector<8x128xf32>
    %67 = arith.mulf %66, %65 : vector<8x128xf32>
    %68 = math.tanh %67 : vector<8x128xf32>
    %cst_45 = arith.constant 5.000000e-01 : f32
    %69 = vector.broadcast %cst_45 : f32 to vector<8x128xf32>
    %70 = arith.mulf %69, %68 : vector<8x128xf32>
    %cst_46 = arith.constant 5.000000e-01 : f32
    %71 = vector.broadcast %cst_46 : f32 to vector<8x128xf32>
    %72 = arith.addf %70, %71 : vector<8x128xf32>
    %73 = vector.extract_strided_slice %64 {offsets = [0, 128], sizes = [8, 128], strides = [1, 1]} : vector<8x512xf32> to vector<8x128xf32>
    %cst_47 = arith.constant 5.000000e-01 : f32
    %74 = vector.broadcast %cst_47 : f32 to vector<8x128xf32>
    %75 = arith.mulf %74, %73 : vector<8x128xf32>
    %76 = math.tanh %75 : vector<8x128xf32>
    %cst_48 = arith.constant 5.000000e-01 : f32
    %77 = vector.broadcast %cst_48 : f32 to vector<8x128xf32>
    %78 = arith.mulf %77, %76 : vector<8x128xf32>
    %cst_49 = arith.constant 5.000000e-01 : f32
    %79 = vector.broadcast %cst_49 : f32 to vector<8x128xf32>
    %80 = arith.addf %78, %79 : vector<8x128xf32>
    %81 = vector.extract_strided_slice %64 {offsets = [0, 256], sizes = [8, 128], strides = [1, 1]} : vector<8x512xf32> to vector<8x128xf32>
    %82 = math.tanh %81 : vector<8x128xf32>
    %83 = vector.extract_strided_slice %64 {offsets = [0, 384], sizes = [8, 128], strides = [1, 1]} : vector<8x512xf32> to vector<8x128xf32>
    %cst_50 = arith.constant 5.000000e-01 : f32
    %84 = vector.broadcast %cst_50 : f32 to vector<8x128xf32>
    %85 = arith.mulf %84, %83 : vector<8x128xf32>
    %86 = math.tanh %85 : vector<8x128xf32>
    %cst_51 = arith.constant 5.000000e-01 : f32
    %87 = vector.broadcast %cst_51 : f32 to vector<8x128xf32>
    %88 = arith.mulf %87, %86 : vector<8x128xf32>
    %cst_52 = arith.constant 5.000000e-01 : f32
    %89 = vector.broadcast %cst_52 : f32 to vector<8x128xf32>
    %90 = arith.addf %88, %89 : vector<8x128xf32>
    %91 = arith.mulf %80, %58 : vector<8x128xf32>
    %92 = arith.mulf %72, %82 : vector<8x128xf32>
    %93 = arith.addf %91, %92 : vector<8x128xf32>
    %94 = math.tanh %93 : vector<8x128xf32>
    %95 = arith.mulf %90, %94 : vector<8x128xf32>
    %c0_53 = arith.constant 0 : index
    %c0_54 = arith.constant 0 : index
    %96 = vector.load %arg8[%c0_53, %c0_54] : memref<8x128xf32, #tpu.memory_space<vmem>>, vector<8x128xf32>
    tpu.vector_store %arg8[%c0_53, %c0_54], %93 {strides = array<i32>} : memref<8x128xf32, #tpu.memory_space<vmem>>, vector<8x128xf32>,
    %c0_55 = arith.constant 0 : index
    %c0_56 = arith.constant 0 : index
    %97 = vector.load %arg7[%c0_55, %c0_56] : memref<8x128xf32, #tpu.memory_space<vmem>>, vector<8x128xf32>
    tpu.vector_store %arg7[%c0_55, %c0_56], %95 {strides = array<i32>} : memref<8x128xf32, #tpu.memory_space<vmem>>, vector<8x128xf32>,
    %98 = arith.index_cast %c1_i32 : i32 to index
    %c0_57 = arith.constant 0 : index
    %c0_58 = arith.constant 0 : index
    %99 = vector.load %arg5[%98, %c0_57, %c0_58] : memref<8x8x128xf32, #tpu.memory_space<vmem>>, vector<1x8x128xf32>
    %100 = vector.shape_cast %99 : vector<1x8x128xf32> to vector<8x128xf32>
    %101 = vector.shape_cast %95 : vector<8x128xf32> to vector<1x8x128xf32>
    tpu.vector_store %arg5[%98, %c0_57, %c0_58], %101 {strides = array<i32>} : memref<8x8x128xf32, #tpu.memory_space<vmem>>, vector<1x8x128xf32>,
    %c2_i32 = arith.constant 2 : i32
    %c0_59 = arith.constant 0 : index
    %c0_60 = arith.constant 0 : index
    %102 = vector.load %arg7[%c0_59, %c0_60] : memref<8x128xf32, #tpu.memory_space<vmem>>, vector<8x128xf32>
    %c0_61 = arith.constant 0 : index
    %c0_62 = arith.constant 0 : index
    %103 = vector.load %arg8[%c0_61, %c0_62] : memref<8x128xf32, #tpu.memory_space<vmem>>, vector<8x128xf32>
    %104 = arith.index_cast %c2_i32 : i32 to index
    %c0_63 = arith.constant 0 : index
    %c0_64 = arith.constant 0 : index
    %105 = vector.load %arg6[%104, %c0_63, %c0_64] : memref<8x8x512xf32, #tpu.memory_space<vmem>>, vector<1x8x512xf32>
    %106 = vector.shape_cast %105 : vector<1x8x512xf32> to vector<8x512xf32>
    %c0_65 = arith.constant 0 : index
    %c0_66 = arith.constant 0 : index
    %107 = vector.load %arg3[%c0_65, %c0_66] : memref<128x512xf32, #tpu.memory_space<vmem>>, vector<128x512xf32>
    %cst_67 = arith.constant dense<0.000000e+00> : vector<8x512xf32>
    %108 = tpu.matmul %102, %107, %cst_67 {dimension_numbers = #tpu.dot_dimension_numbers<[1], [0], [0], [1], [0, 0, 1, 1], [], []>} : vector<8x128xf32>, vector<128x512xf32>, vector<8x512xf32> -> vector<8x512xf32>
    %109 = arith.addf %106, %108 : vector<8x512xf32>
    %110 = vector.extract_strided_slice %109 {offsets = [0, 0], sizes = [8, 128], strides = [1, 1]} : vector<8x512xf32> to vector<8x128xf32>
    %cst_68 = arith.constant 5.000000e-01 : f32
    %111 = vector.broadcast %cst_68 : f32 to vector<8x128xf32>
    %112 = arith.mulf %111, %110 : vector<8x128xf32>
    %113 = math.tanh %112 : vector<8x128xf32>
    %cst_69 = arith.constant 5.000000e-01 : f32
    %114 = vector.broadcast %cst_69 : f32 to vector<8x128xf32>
    %115 = arith.mulf %114, %113 : vector<8x128xf32>
    %cst_70 = arith.constant 5.000000e-01 : f32
    %116 = vector.broadcast %cst_70 : f32 to vector<8x128xf32>
    %117 = arith.addf %115, %116 : vector<8x128xf32>
    %118 = vector.extract_strided_slice %109 {offsets = [0, 128], sizes = [8, 128], strides = [1, 1]} : vector<8x512xf32> to vector<8x128xf32>
    %cst_71 = arith.constant 5.000000e-01 : f32
    %119 = vector.broadcast %cst_71 : f32 to vector<8x128xf32>
    %120 = arith.mulf %119, %118 : vector<8x128xf32>
    %121 = math.tanh %120 : vector<8x128xf32>
    %cst_72 = arith.constant 5.000000e-01 : f32
    %122 = vector.broadcast %cst_72 : f32 to vector<8x128xf32>
    %123 = arith.mulf %122, %121 : vector<8x128xf32>
    %cst_73 = arith.constant 5.000000e-01 : f32
    %124 = vector.broadcast %cst_73 : f32 to vector<8x128xf32>
    %125 = arith.addf %123, %124 : vector<8x128xf32>
    %126 = vector.extract_strided_slice %109 {offsets = [0, 256], sizes = [8, 128], strides = [1, 1]} : vector<8x512xf32> to vector<8x128xf32>
    %127 = math.tanh %126 : vector<8x128xf32>
    %128 = vector.extract_strided_slice %109 {offsets = [0, 384], sizes = [8, 128], strides = [1, 1]} : vector<8x512xf32> to vector<8x128xf32>
    %cst_74 = arith.constant 5.000000e-01 : f32
    %129 = vector.broadcast %cst_74 : f32 to vector<8x128xf32>
    %130 = arith.mulf %129, %128 : vector<8x128xf32>
    %131 = math.tanh %130 : vector<8x128xf32>
    %cst_75 = arith.constant 5.000000e-01 : f32
    %132 = vector.broadcast %cst_75 : f32 to vector<8x128xf32>
    %133 = arith.mulf %132, %131 : vector<8x128xf32>
    %cst_76 = arith.constant 5.000000e-01 : f32
    %134 = vector.broadcast %cst_76 : f32 to vector<8x128xf32>
    %135 = arith.addf %133, %134 : vector<8x128xf32>
    %136 = arith.mulf %125, %103 : vector<8x128xf32>
    %137 = arith.mulf %117, %127 : vector<8x128xf32>
    %138 = arith.addf %136, %137 : vector<8x128xf32>
    %139 = math.tanh %138 : vector<8x128xf32>
    %140 = arith.mulf %135, %139 : vector<8x128xf32>
    %c0_77 = arith.constant 0 : index
    %c0_78 = arith.constant 0 : index
    %141 = vector.load %arg8[%c0_77, %c0_78] : memref<8x128xf32, #tpu.memory_space<vmem>>, vector<8x128xf32>
    tpu.vector_store %arg8[%c0_77, %c0_78], %138 {strides = array<i32>} : memref<8x128xf32, #tpu.memory_space<vmem>>, vector<8x128xf32>,
    %c0_79 = arith.constant 0 : index
    %c0_80 = arith.constant 0 : index
    %142 = vector.load %arg7[%c0_79, %c0_80] : memref<8x128xf32, #tpu.memory_space<vmem>>, vector<8x128xf32>
    tpu.vector_store %arg7[%c0_79, %c0_80], %140 {strides = array<i32>} : memref<8x128xf32, #tpu.memory_space<vmem>>, vector<8x128xf32>,
    %143 = arith.index_cast %c2_i32 : i32 to index
    %c0_81 = arith.constant 0 : index
    %c0_82 = arith.constant 0 : index
    %144 = vector.load %arg5[%143, %c0_81, %c0_82] : memref<8x8x128xf32, #tpu.memory_space<vmem>>, vector<1x8x128xf32>
    %145 = vector.shape_cast %144 : vector<1x8x128xf32> to vector<8x128xf32>
    %146 = vector.shape_cast %140 : vector<8x128xf32> to vector<1x8x128xf32>
    tpu.vector_store %arg5[%143, %c0_81, %c0_82], %146 {strides = array<i32>} : memref<8x8x128xf32, #tpu.memory_space<vmem>>, vector<1x8x128xf32>,
    %c3_i32 = arith.constant 3 : i32
    %c0_83 = arith.constant 0 : index
    %c0_84 = arith.constant 0 : index
    %147 = vector.load %arg7[%c0_83, %c0_84] : memref<8x128xf32, #tpu.memory_space<vmem>>, vector<8x128xf32>
    %c0_85 = arith.constant 0 : index
    %c0_86 = arith.constant 0 : index
    %148 = vector.load %arg8[%c0_85, %c0_86] : memref<8x128xf32, #tpu.memory_space<vmem>>, vector<8x128xf32>
    %149 = arith.index_cast %c3_i32 : i32 to index
    %c0_87 = arith.constant 0 : index
    %c0_88 = arith.constant 0 : index
    %150 = vector.load %arg6[%149, %c0_87, %c0_88] : memref<8x8x512xf32, #tpu.memory_space<vmem>>, vector<1x8x512xf32>
    %151 = vector.shape_cast %150 : vector<1x8x512xf32> to vector<8x512xf32>
    %c0_89 = arith.constant 0 : index
    %c0_90 = arith.constant 0 : index
    %152 = vector.load %arg3[%c0_89, %c0_90] : memref<128x512xf32, #tpu.memory_space<vmem>>, vector<128x512xf32>
    %cst_91 = arith.constant dense<0.000000e+00> : vector<8x512xf32>
    %153 = tpu.matmul %147, %152, %cst_91 {dimension_numbers = #tpu.dot_dimension_numbers<[1], [0], [0], [1], [0, 0, 1, 1], [], []>} : vector<8x128xf32>, vector<128x512xf32>, vector<8x512xf32> -> vector<8x512xf32>
    %154 = arith.addf %151, %153 : vector<8x512xf32>
    %155 = vector.extract_strided_slice %154 {offsets = [0, 0], sizes = [8, 128], strides = [1, 1]} : vector<8x512xf32> to vector<8x128xf32>
    %cst_92 = arith.constant 5.000000e-01 : f32
    %156 = vector.broadcast %cst_92 : f32 to vector<8x128xf32>
    %157 = arith.mulf %156, %155 : vector<8x128xf32>
    %158 = math.tanh %157 : vector<8x128xf32>
    %cst_93 = arith.constant 5.000000e-01 : f32
    %159 = vector.broadcast %cst_93 : f32 to vector<8x128xf32>
    %160 = arith.mulf %159, %158 : vector<8x128xf32>
    %cst_94 = arith.constant 5.000000e-01 : f32
    %161 = vector.broadcast %cst_94 : f32 to vector<8x128xf32>
    %162 = arith.addf %160, %161 : vector<8x128xf32>
    %163 = vector.extract_strided_slice %154 {offsets = [0, 128], sizes = [8, 128], strides = [1, 1]} : vector<8x512xf32> to vector<8x128xf32>
    %cst_95 = arith.constant 5.000000e-01 : f32
    %164 = vector.broadcast %cst_95 : f32 to vector<8x128xf32>
    %165 = arith.mulf %164, %163 : vector<8x128xf32>
    %166 = math.tanh %165 : vector<8x128xf32>
    %cst_96 = arith.constant 5.000000e-01 : f32
    %167 = vector.broadcast %cst_96 : f32 to vector<8x128xf32>
    %168 = arith.mulf %167, %166 : vector<8x128xf32>
    %cst_97 = arith.constant 5.000000e-01 : f32
    %169 = vector.broadcast %cst_97 : f32 to vector<8x128xf32>
    %170 = arith.addf %168, %169 : vector<8x128xf32>
    %171 = vector.extract_strided_slice %154 {offsets = [0, 256], sizes = [8, 128], strides = [1, 1]} : vector<8x512xf32> to vector<8x128xf32>
    %172 = math.tanh %171 : vector<8x128xf32>
    %173 = vector.extract_strided_slice %154 {offsets = [0, 384], sizes = [8, 128], strides = [1, 1]} : vector<8x512xf32> to vector<8x128xf32>
    %cst_98 = arith.constant 5.000000e-01 : f32
    %174 = vector.broadcast %cst_98 : f32 to vector<8x128xf32>
    %175 = arith.mulf %174, %173 : vector<8x128xf32>
    %176 = math.tanh %175 : vector<8x128xf32>
    %cst_99 = arith.constant 5.000000e-01 : f32
    %177 = vector.broadcast %cst_99 : f32 to vector<8x128xf32>
    %178 = arith.mulf %177, %176 : vector<8x128xf32>
    %cst_100 = arith.constant 5.000000e-01 : f32
    %179 = vector.broadcast %cst_100 : f32 to vector<8x128xf32>
    %180 = arith.addf %178, %179 : vector<8x128xf32>
    %181 = arith.mulf %170, %148 : vector<8x128xf32>
    %182 = arith.mulf %162, %172 : vector<8x128xf32>
    %183 = arith.addf %181, %182 : vector<8x128xf32>
    %184 = math.tanh %183 : vector<8x128xf32>
    %185 = arith.mulf %180, %184 : vector<8x128xf32>
    %c0_101 = arith.constant 0 : index
    %c0_102 = arith.constant 0 : index
    %186 = vector.load %arg8[%c0_101, %c0_102] : memref<8x128xf32, #tpu.memory_space<vmem>>, vector<8x128xf32>
    tpu.vector_store %arg8[%c0_101, %c0_102], %183 {strides = array<i32>} : memref<8x128xf32, #tpu.memory_space<vmem>>, vector<8x128xf32>,
    %c0_103 = arith.constant 0 : index
    %c0_104 = arith.constant 0 : index
    %187 = vector.load %arg7[%c0_103, %c0_104] : memref<8x128xf32, #tpu.memory_space<vmem>>, vector<8x128xf32>
    tpu.vector_store %arg7[%c0_103, %c0_104], %185 {strides = array<i32>} : memref<8x128xf32, #tpu.memory_space<vmem>>, vector<8x128xf32>,
    %188 = arith.index_cast %c3_i32 : i32 to index
    %c0_105 = arith.constant 0 : index
    %c0_106 = arith.constant 0 : index
    %189 = vector.load %arg5[%188, %c0_105, %c0_106] : memref<8x8x128xf32, #tpu.memory_space<vmem>>, vector<1x8x128xf32>
    %190 = vector.shape_cast %189 : vector<1x8x128xf32> to vector<8x128xf32>
    %191 = vector.shape_cast %185 : vector<8x128xf32> to vector<1x8x128xf32>
    tpu.vector_store %arg5[%188, %c0_105, %c0_106], %191 {strides = array<i32>} : memref<8x8x128xf32, #tpu.memory_space<vmem>>, vector<1x8x128xf32>,
    %c4_i32 = arith.constant 4 : i32
    %c0_107 = arith.constant 0 : index
    %c0_108 = arith.constant 0 : index
    %192 = vector.load %arg7[%c0_107, %c0_108] : memref<8x128xf32, #tpu.memory_space<vmem>>, vector<8x128xf32>
    %c0_109 = arith.constant 0 : index
    %c0_110 = arith.constant 0 : index
    %193 = vector.load %arg8[%c0_109, %c0_110] : memref<8x128xf32, #tpu.memory_space<vmem>>, vector<8x128xf32>
    %194 = arith.index_cast %c4_i32 : i32 to index
    %c0_111 = arith.constant 0 : index
    %c0_112 = arith.constant 0 : index
    %195 = vector.load %arg6[%194, %c0_111, %c0_112] : memref<8x8x512xf32, #tpu.memory_space<vmem>>, vector<1x8x512xf32>
    %196 = vector.shape_cast %195 : vector<1x8x512xf32> to vector<8x512xf32>
    %c0_113 = arith.constant 0 : index
    %c0_114 = arith.constant 0 : index
    %197 = vector.load %arg3[%c0_113, %c0_114] : memref<128x512xf32, #tpu.memory_space<vmem>>, vector<128x512xf32>
    %cst_115 = arith.constant dense<0.000000e+00> : vector<8x512xf32>
    %198 = tpu.matmul %192, %197, %cst_115 {dimension_numbers = #tpu.dot_dimension_numbers<[1], [0], [0], [1], [0, 0, 1, 1], [], []>} : vector<8x128xf32>, vector<128x512xf32>, vector<8x512xf32> -> vector<8x512xf32>
    %199 = arith.addf %196, %198 : vector<8x512xf32>
    %200 = vector.extract_strided_slice %199 {offsets = [0, 0], sizes = [8, 128], strides = [1, 1]} : vector<8x512xf32> to vector<8x128xf32>
    %cst_116 = arith.constant 5.000000e-01 : f32
    %201 = vector.broadcast %cst_116 : f32 to vector<8x128xf32>
    %202 = arith.mulf %201, %200 : vector<8x128xf32>
    %203 = math.tanh %202 : vector<8x128xf32>
    %cst_117 = arith.constant 5.000000e-01 : f32
    %204 = vector.broadcast %cst_117 : f32 to vector<8x128xf32>
    %205 = arith.mulf %204, %203 : vector<8x128xf32>
    %cst_118 = arith.constant 5.000000e-01 : f32
    %206 = vector.broadcast %cst_118 : f32 to vector<8x128xf32>
    %207 = arith.addf %205, %206 : vector<8x128xf32>
    %208 = vector.extract_strided_slice %199 {offsets = [0, 128], sizes = [8, 128], strides = [1, 1]} : vector<8x512xf32> to vector<8x128xf32>
    %cst_119 = arith.constant 5.000000e-01 : f32
    %209 = vector.broadcast %cst_119 : f32 to vector<8x128xf32>
    %210 = arith.mulf %209, %208 : vector<8x128xf32>
    %211 = math.tanh %210 : vector<8x128xf32>
    %cst_120 = arith.constant 5.000000e-01 : f32
    %212 = vector.broadcast %cst_120 : f32 to vector<8x128xf32>
    %213 = arith.mulf %212, %211 : vector<8x128xf32>
    %cst_121 = arith.constant 5.000000e-01 : f32
    %214 = vector.broadcast %cst_121 : f32 to vector<8x128xf32>
    %215 = arith.addf %213, %214 : vector<8x128xf32>
    %216 = vector.extract_strided_slice %199 {offsets = [0, 256], sizes = [8, 128], strides = [1, 1]} : vector<8x512xf32> to vector<8x128xf32>
    %217 = math.tanh %216 : vector<8x128xf32>
    %218 = vector.extract_strided_slice %199 {offsets = [0, 384], sizes = [8, 128], strides = [1, 1]} : vector<8x512xf32> to vector<8x128xf32>
    %cst_122 = arith.constant 5.000000e-01 : f32
    %219 = vector.broadcast %cst_122 : f32 to vector<8x128xf32>
    %220 = arith.mulf %219, %218 : vector<8x128xf32>
    %221 = math.tanh %220 : vector<8x128xf32>
    %cst_123 = arith.constant 5.000000e-01 : f32
    %222 = vector.broadcast %cst_123 : f32 to vector<8x128xf32>
    %223 = arith.mulf %222, %221 : vector<8x128xf32>
    %cst_124 = arith.constant 5.000000e-01 : f32
    %224 = vector.broadcast %cst_124 : f32 to vector<8x128xf32>
    %225 = arith.addf %223, %224 : vector<8x128xf32>
    %226 = arith.mulf %215, %193 : vector<8x128xf32>
    %227 = arith.mulf %207, %217 : vector<8x128xf32>
    %228 = arith.addf %226, %227 : vector<8x128xf32>
    %229 = math.tanh %228 : vector<8x128xf32>
    %230 = arith.mulf %225, %229 : vector<8x128xf32>
    %c0_125 = arith.constant 0 : index
    %c0_126 = arith.constant 0 : index
    %231 = vector.load %arg8[%c0_125, %c0_126] : memref<8x128xf32, #tpu.memory_space<vmem>>, vector<8x128xf32>
    tpu.vector_store %arg8[%c0_125, %c0_126], %228 {strides = array<i32>} : memref<8x128xf32, #tpu.memory_space<vmem>>, vector<8x128xf32>,
    %c0_127 = arith.constant 0 : index
    %c0_128 = arith.constant 0 : index
    %232 = vector.load %arg7[%c0_127, %c0_128] : memref<8x128xf32, #tpu.memory_space<vmem>>, vector<8x128xf32>
    tpu.vector_store %arg7[%c0_127, %c0_128], %230 {strides = array<i32>} : memref<8x128xf32, #tpu.memory_space<vmem>>, vector<8x128xf32>,
    %233 = arith.index_cast %c4_i32 : i32 to index
    %c0_129 = arith.constant 0 : index
    %c0_130 = arith.constant 0 : index
    %234 = vector.load %arg5[%233, %c0_129, %c0_130] : memref<8x8x128xf32, #tpu.memory_space<vmem>>, vector<1x8x128xf32>
    %235 = vector.shape_cast %234 : vector<1x8x128xf32> to vector<8x128xf32>
    %236 = vector.shape_cast %230 : vector<8x128xf32> to vector<1x8x128xf32>
    tpu.vector_store %arg5[%233, %c0_129, %c0_130], %236 {strides = array<i32>} : memref<8x8x128xf32, #tpu.memory_space<vmem>>, vector<1x8x128xf32>,
    %c5_i32 = arith.constant 5 : i32
    %c0_131 = arith.constant 0 : index
    %c0_132 = arith.constant 0 : index
    %237 = vector.load %arg7[%c0_131, %c0_132] : memref<8x128xf32, #tpu.memory_space<vmem>>, vector<8x128xf32>
    %c0_133 = arith.constant 0 : index
    %c0_134 = arith.constant 0 : index
    %238 = vector.load %arg8[%c0_133, %c0_134] : memref<8x128xf32, #tpu.memory_space<vmem>>, vector<8x128xf32>
    %239 = arith.index_cast %c5_i32 : i32 to index
    %c0_135 = arith.constant 0 : index
    %c0_136 = arith.constant 0 : index
    %240 = vector.load %arg6[%239, %c0_135, %c0_136] : memref<8x8x512xf32, #tpu.memory_space<vmem>>, vector<1x8x512xf32>
    %241 = vector.shape_cast %240 : vector<1x8x512xf32> to vector<8x512xf32>
    %c0_137 = arith.constant 0 : index
    %c0_138 = arith.constant 0 : index
    %242 = vector.load %arg3[%c0_137, %c0_138] : memref<128x512xf32, #tpu.memory_space<vmem>>, vector<128x512xf32>
    %cst_139 = arith.constant dense<0.000000e+00> : vector<8x512xf32>
    %243 = tpu.matmul %237, %242, %cst_139 {dimension_numbers = #tpu.dot_dimension_numbers<[1], [0], [0], [1], [0, 0, 1, 1], [], []>} : vector<8x128xf32>, vector<128x512xf32>, vector<8x512xf32> -> vector<8x512xf32>
    %244 = arith.addf %241, %243 : vector<8x512xf32>
    %245 = vector.extract_strided_slice %244 {offsets = [0, 0], sizes = [8, 128], strides = [1, 1]} : vector<8x512xf32> to vector<8x128xf32>
    %cst_140 = arith.constant 5.000000e-01 : f32
    %246 = vector.broadcast %cst_140 : f32 to vector<8x128xf32>
    %247 = arith.mulf %246, %245 : vector<8x128xf32>
    %248 = math.tanh %247 : vector<8x128xf32>
    %cst_141 = arith.constant 5.000000e-01 : f32
    %249 = vector.broadcast %cst_141 : f32 to vector<8x128xf32>
    %250 = arith.mulf %249, %248 : vector<8x128xf32>
    %cst_142 = arith.constant 5.000000e-01 : f32
    %251 = vector.broadcast %cst_142 : f32 to vector<8x128xf32>
    %252 = arith.addf %250, %251 : vector<8x128xf32>
    %253 = vector.extract_strided_slice %244 {offsets = [0, 128], sizes = [8, 128], strides = [1, 1]} : vector<8x512xf32> to vector<8x128xf32>
    %cst_143 = arith.constant 5.000000e-01 : f32
    %254 = vector.broadcast %cst_143 : f32 to vector<8x128xf32>
    %255 = arith.mulf %254, %253 : vector<8x128xf32>
    %256 = math.tanh %255 : vector<8x128xf32>
    %cst_144 = arith.constant 5.000000e-01 : f32
    %257 = vector.broadcast %cst_144 : f32 to vector<8x128xf32>
    %258 = arith.mulf %257, %256 : vector<8x128xf32>
    %cst_145 = arith.constant 5.000000e-01 : f32
    %259 = vector.broadcast %cst_145 : f32 to vector<8x128xf32>
    %260 = arith.addf %258, %259 : vector<8x128xf32>
    %261 = vector.extract_strided_slice %244 {offsets = [0, 256], sizes = [8, 128], strides = [1, 1]} : vector<8x512xf32> to vector<8x128xf32>
    %262 = math.tanh %261 : vector<8x128xf32>
    %263 = vector.extract_strided_slice %244 {offsets = [0, 384], sizes = [8, 128], strides = [1, 1]} : vector<8x512xf32> to vector<8x128xf32>
    %cst_146 = arith.constant 5.000000e-01 : f32
    %264 = vector.broadcast %cst_146 : f32 to vector<8x128xf32>
    %265 = arith.mulf %264, %263 : vector<8x128xf32>
    %266 = math.tanh %265 : vector<8x128xf32>
    %cst_147 = arith.constant 5.000000e-01 : f32
    %267 = vector.broadcast %cst_147 : f32 to vector<8x128xf32>
    %268 = arith.mulf %267, %266 : vector<8x128xf32>
    %cst_148 = arith.constant 5.000000e-01 : f32
    %269 = vector.broadcast %cst_148 : f32 to vector<8x128xf32>
    %270 = arith.addf %268, %269 : vector<8x128xf32>
    %271 = arith.mulf %260, %238 : vector<8x128xf32>
    %272 = arith.mulf %252, %262 : vector<8x128xf32>
    %273 = arith.addf %271, %272 : vector<8x128xf32>
    %274 = math.tanh %273 : vector<8x128xf32>
    %275 = arith.mulf %270, %274 : vector<8x128xf32>
    %c0_149 = arith.constant 0 : index
    %c0_150 = arith.constant 0 : index
    %276 = vector.load %arg8[%c0_149, %c0_150] : memref<8x128xf32, #tpu.memory_space<vmem>>, vector<8x128xf32>
    tpu.vector_store %arg8[%c0_149, %c0_150], %273 {strides = array<i32>} : memref<8x128xf32, #tpu.memory_space<vmem>>, vector<8x128xf32>,
    %c0_151 = arith.constant 0 : index
    %c0_152 = arith.constant 0 : index
    %277 = vector.load %arg7[%c0_151, %c0_152] : memref<8x128xf32, #tpu.memory_space<vmem>>, vector<8x128xf32>
    tpu.vector_store %arg7[%c0_151, %c0_152], %275 {strides = array<i32>} : memref<8x128xf32, #tpu.memory_space<vmem>>, vector<8x128xf32>,
    %278 = arith.index_cast %c5_i32 : i32 to index
    %c0_153 = arith.constant 0 : index
    %c0_154 = arith.constant 0 : index
    %279 = vector.load %arg5[%278, %c0_153, %c0_154] : memref<8x8x128xf32, #tpu.memory_space<vmem>>, vector<1x8x128xf32>
    %280 = vector.shape_cast %279 : vector<1x8x128xf32> to vector<8x128xf32>
    %281 = vector.shape_cast %275 : vector<8x128xf32> to vector<1x8x128xf32>
    tpu.vector_store %arg5[%278, %c0_153, %c0_154], %281 {strides = array<i32>} : memref<8x8x128xf32, #tpu.memory_space<vmem>>, vector<1x8x128xf32>,
    %c6_i32 = arith.constant 6 : i32
    %c0_155 = arith.constant 0 : index
    %c0_156 = arith.constant 0 : index
    %282 = vector.load %arg7[%c0_155, %c0_156] : memref<8x128xf32, #tpu.memory_space<vmem>>, vector<8x128xf32>
    %c0_157 = arith.constant 0 : index
    %c0_158 = arith.constant 0 : index
    %283 = vector.load %arg8[%c0_157, %c0_158] : memref<8x128xf32, #tpu.memory_space<vmem>>, vector<8x128xf32>
    %284 = arith.index_cast %c6_i32 : i32 to index
    %c0_159 = arith.constant 0 : index
    %c0_160 = arith.constant 0 : index
    %285 = vector.load %arg6[%284, %c0_159, %c0_160] : memref<8x8x512xf32, #tpu.memory_space<vmem>>, vector<1x8x512xf32>
    %286 = vector.shape_cast %285 : vector<1x8x512xf32> to vector<8x512xf32>
    %c0_161 = arith.constant 0 : index
    %c0_162 = arith.constant 0 : index
    %287 = vector.load %arg3[%c0_161, %c0_162] : memref<128x512xf32, #tpu.memory_space<vmem>>, vector<128x512xf32>
    %cst_163 = arith.constant dense<0.000000e+00> : vector<8x512xf32>
    %288 = tpu.matmul %282, %287, %cst_163 {dimension_numbers = #tpu.dot_dimension_numbers<[1], [0], [0], [1], [0, 0, 1, 1], [], []>} : vector<8x128xf32>, vector<128x512xf32>, vector<8x512xf32> -> vector<8x512xf32>
    %289 = arith.addf %286, %288 : vector<8x512xf32>
    %290 = vector.extract_strided_slice %289 {offsets = [0, 0], sizes = [8, 128], strides = [1, 1]} : vector<8x512xf32> to vector<8x128xf32>
    %cst_164 = arith.constant 5.000000e-01 : f32
    %291 = vector.broadcast %cst_164 : f32 to vector<8x128xf32>
    %292 = arith.mulf %291, %290 : vector<8x128xf32>
    %293 = math.tanh %292 : vector<8x128xf32>
    %cst_165 = arith.constant 5.000000e-01 : f32
    %294 = vector.broadcast %cst_165 : f32 to vector<8x128xf32>
    %295 = arith.mulf %294, %293 : vector<8x128xf32>
    %cst_166 = arith.constant 5.000000e-01 : f32
    %296 = vector.broadcast %cst_166 : f32 to vector<8x128xf32>
    %297 = arith.addf %295, %296 : vector<8x128xf32>
    %298 = vector.extract_strided_slice %289 {offsets = [0, 128], sizes = [8, 128], strides = [1, 1]} : vector<8x512xf32> to vector<8x128xf32>
    %cst_167 = arith.constant 5.000000e-01 : f32
    %299 = vector.broadcast %cst_167 : f32 to vector<8x128xf32>
    %300 = arith.mulf %299, %298 : vector<8x128xf32>
    %301 = math.tanh %300 : vector<8x128xf32>
    %cst_168 = arith.constant 5.000000e-01 : f32
    %302 = vector.broadcast %cst_168 : f32 to vector<8x128xf32>
    %303 = arith.mulf %302, %301 : vector<8x128xf32>
    %cst_169 = arith.constant 5.000000e-01 : f32
    %304 = vector.broadcast %cst_169 : f32 to vector<8x128xf32>
    %305 = arith.addf %303, %304 : vector<8x128xf32>
    %306 = vector.extract_strided_slice %289 {offsets = [0, 256], sizes = [8, 128], strides = [1, 1]} : vector<8x512xf32> to vector<8x128xf32>
    %307 = math.tanh %306 : vector<8x128xf32>
    %308 = vector.extract_strided_slice %289 {offsets = [0, 384], sizes = [8, 128], strides = [1, 1]} : vector<8x512xf32> to vector<8x128xf32>
    %cst_170 = arith.constant 5.000000e-01 : f32
    %309 = vector.broadcast %cst_170 : f32 to vector<8x128xf32>
    %310 = arith.mulf %309, %308 : vector<8x128xf32>
    %311 = math.tanh %310 : vector<8x128xf32>
    %cst_171 = arith.constant 5.000000e-01 : f32
    %312 = vector.broadcast %cst_171 : f32 to vector<8x128xf32>
    %313 = arith.mulf %312, %311 : vector<8x128xf32>
    %cst_172 = arith.constant 5.000000e-01 : f32
    %314 = vector.broadcast %cst_172 : f32 to vector<8x128xf32>
    %315 = arith.addf %313, %314 : vector<8x128xf32>
    %316 = arith.mulf %305, %283 : vector<8x128xf32>
    %317 = arith.mulf %297, %307 : vector<8x128xf32>
    %318 = arith.addf %316, %317 : vector<8x128xf32>
    %319 = math.tanh %318 : vector<8x128xf32>
    %320 = arith.mulf %315, %319 : vector<8x128xf32>
    %c0_173 = arith.constant 0 : index
    %c0_174 = arith.constant 0 : index
    %321 = vector.load %arg8[%c0_173, %c0_174] : memref<8x128xf32, #tpu.memory_space<vmem>>, vector<8x128xf32>
    tpu.vector_store %arg8[%c0_173, %c0_174], %318 {strides = array<i32>} : memref<8x128xf32, #tpu.memory_space<vmem>>, vector<8x128xf32>,
    %c0_175 = arith.constant 0 : index
    %c0_176 = arith.constant 0 : index
    %322 = vector.load %arg7[%c0_175, %c0_176] : memref<8x128xf32, #tpu.memory_space<vmem>>, vector<8x128xf32>
    tpu.vector_store %arg7[%c0_175, %c0_176], %320 {strides = array<i32>} : memref<8x128xf32, #tpu.memory_space<vmem>>, vector<8x128xf32>,
    %323 = arith.index_cast %c6_i32 : i32 to index
    %c0_177 = arith.constant 0 : index
    %c0_178 = arith.constant 0 : index
    %324 = vector.load %arg5[%323, %c0_177, %c0_178] : memref<8x8x128xf32, #tpu.memory_space<vmem>>, vector<1x8x128xf32>
    %325 = vector.shape_cast %324 : vector<1x8x128xf32> to vector<8x128xf32>
    %326 = vector.shape_cast %320 : vector<8x128xf32> to vector<1x8x128xf32>
    tpu.vector_store %arg5[%323, %c0_177, %c0_178], %326 {strides = array<i32>} : memref<8x8x128xf32, #tpu.memory_space<vmem>>, vector<1x8x128xf32>,
    %c7_i32 = arith.constant 7 : i32
    %c0_179 = arith.constant 0 : index
    %c0_180 = arith.constant 0 : index
    %327 = vector.load %arg7[%c0_179, %c0_180] : memref<8x128xf32, #tpu.memory_space<vmem>>, vector<8x128xf32>
    %c0_181 = arith.constant 0 : index
    %c0_182 = arith.constant 0 : index
    %328 = vector.load %arg8[%c0_181, %c0_182] : memref<8x128xf32, #tpu.memory_space<vmem>>, vector<8x128xf32>
    %329 = arith.index_cast %c7_i32 : i32 to index
    %c0_183 = arith.constant 0 : index
    %c0_184 = arith.constant 0 : index
    %330 = vector.load %arg6[%329, %c0_183, %c0_184] : memref<8x8x512xf32, #tpu.memory_space<vmem>>, vector<1x8x512xf32>
    %331 = vector.shape_cast %330 : vector<1x8x512xf32> to vector<8x512xf32>
    %c0_185 = arith.constant 0 : index
    %c0_186 = arith.constant 0 : index
    %332 = vector.load %arg3[%c0_185, %c0_186] : memref<128x512xf32, #tpu.memory_space<vmem>>, vector<128x512xf32>
    %cst_187 = arith.constant dense<0.000000e+00> : vector<8x512xf32>
    %333 = tpu.matmul %327, %332, %cst_187 {dimension_numbers = #tpu.dot_dimension_numbers<[1], [0], [0], [1], [0, 0, 1, 1], [], []>} : vector<8x128xf32>, vector<128x512xf32>, vector<8x512xf32> -> vector<8x512xf32>
    %334 = arith.addf %331, %333 : vector<8x512xf32>
    %335 = vector.extract_strided_slice %334 {offsets = [0, 0], sizes = [8, 128], strides = [1, 1]} : vector<8x512xf32> to vector<8x128xf32>
    %cst_188 = arith.constant 5.000000e-01 : f32
    %336 = vector.broadcast %cst_188 : f32 to vector<8x128xf32>
    %337 = arith.mulf %336, %335 : vector<8x128xf32>
    %338 = math.tanh %337 : vector<8x128xf32>
    %cst_189 = arith.constant 5.000000e-01 : f32
    %339 = vector.broadcast %cst_189 : f32 to vector<8x128xf32>
    %340 = arith.mulf %339, %338 : vector<8x128xf32>
    %cst_190 = arith.constant 5.000000e-01 : f32
    %341 = vector.broadcast %cst_190 : f32 to vector<8x128xf32>
    %342 = arith.addf %340, %341 : vector<8x128xf32>
    %343 = vector.extract_strided_slice %334 {offsets = [0, 128], sizes = [8, 128], strides = [1, 1]} : vector<8x512xf32> to vector<8x128xf32>
    %cst_191 = arith.constant 5.000000e-01 : f32
    %344 = vector.broadcast %cst_191 : f32 to vector<8x128xf32>
    %345 = arith.mulf %344, %343 : vector<8x128xf32>
    %346 = math.tanh %345 : vector<8x128xf32>
    %cst_192 = arith.constant 5.000000e-01 : f32
    %347 = vector.broadcast %cst_192 : f32 to vector<8x128xf32>
    %348 = arith.mulf %347, %346 : vector<8x128xf32>
    %cst_193 = arith.constant 5.000000e-01 : f32
    %349 = vector.broadcast %cst_193 : f32 to vector<8x128xf32>
    %350 = arith.addf %348, %349 : vector<8x128xf32>
    %351 = vector.extract_strided_slice %334 {offsets = [0, 256], sizes = [8, 128], strides = [1, 1]} : vector<8x512xf32> to vector<8x128xf32>
    %352 = math.tanh %351 : vector<8x128xf32>
    %353 = vector.extract_strided_slice %334 {offsets = [0, 384], sizes = [8, 128], strides = [1, 1]} : vector<8x512xf32> to vector<8x128xf32>
    %cst_194 = arith.constant 5.000000e-01 : f32
    %354 = vector.broadcast %cst_194 : f32 to vector<8x128xf32>
    %355 = arith.mulf %354, %353 : vector<8x128xf32>
    %356 = math.tanh %355 : vector<8x128xf32>
    %cst_195 = arith.constant 5.000000e-01 : f32
    %357 = vector.broadcast %cst_195 : f32 to vector<8x128xf32>
    %358 = arith.mulf %357, %356 : vector<8x128xf32>
    %cst_196 = arith.constant 5.000000e-01 : f32
    %359 = vector.broadcast %cst_196 : f32 to vector<8x128xf32>
    %360 = arith.addf %358, %359 : vector<8x128xf32>
    %361 = arith.mulf %350, %328 : vector<8x128xf32>
    %362 = arith.mulf %342, %352 : vector<8x128xf32>
    %363 = arith.addf %361, %362 : vector<8x128xf32>
    %364 = math.tanh %363 : vector<8x128xf32>
    %365 = arith.mulf %360, %364 : vector<8x128xf32>
    %c0_197 = arith.constant 0 : index
    %c0_198 = arith.constant 0 : index
    %366 = vector.load %arg8[%c0_197, %c0_198] : memref<8x128xf32, #tpu.memory_space<vmem>>, vector<8x128xf32>
    tpu.vector_store %arg8[%c0_197, %c0_198], %363 {strides = array<i32>} : memref<8x128xf32, #tpu.memory_space<vmem>>, vector<8x128xf32>,
    %c0_199 = arith.constant 0 : index
    %c0_200 = arith.constant 0 : index
    %367 = vector.load %arg7[%c0_199, %c0_200] : memref<8x128xf32, #tpu.memory_space<vmem>>, vector<8x128xf32>
    tpu.vector_store %arg7[%c0_199, %c0_200], %365 {strides = array<i32>} : memref<8x128xf32, #tpu.memory_space<vmem>>, vector<8x128xf32>,
    %368 = arith.index_cast %c7_i32 : i32 to index
    %c0_201 = arith.constant 0 : index
    %c0_202 = arith.constant 0 : index
    %369 = vector.load %arg5[%368, %c0_201, %c0_202] : memref<8x8x128xf32, #tpu.memory_space<vmem>>, vector<1x8x128xf32>
    %370 = vector.shape_cast %369 : vector<1x8x128xf32> to vector<8x128xf32>
    %371 = vector.shape_cast %365 : vector<8x128xf32> to vector<1x8x128xf32>
    tpu.vector_store %arg5[%368, %c0_201, %c0_202], %371 {strides = array<i32>} : memref<8x8x128xf32, #tpu.memory_space<vmem>>, vector<1x8x128xf32>,
    %c8_i32 = arith.constant 8 : i32
    return
  }
  func.func @transform_0(%arg0: i32) -> (i32, i32, i32) {
    %c0_i32 = arith.constant 0 : i32
    %c0_i32_0 = arith.constant 0 : i32
    %c0_i32_1 = arith.constant 0 : i32
    return %arg0, %c0_i32, %c0_i32_0 : i32, i32, i32
  }
  func.func @transform_1(%arg0: i32) -> (i32, i32) {
    %c0_i32 = arith.constant 0 : i32
    %c0_i32_0 = arith.constant 0 : i32
    %c0_i32_1 = arith.constant 0 : i32
    return %c0_i32, %c0_i32_0 : i32, i32
  }
  func.func @transform_2(%arg0: i32) -> (i32, i32) {
    %c0_i32 = arith.constant 0 : i32
    %c0_i32_0 = arith.constant 0 : i32
    %c0_i32_1 = arith.constant 0 : i32
    return %c0_i32, %c0_i32_0 : i32, i32
  }
  func.func @transform_3(%arg0: i32) -> (i32, i32) {
    %c0_i32 = arith.constant 0 : i32
    %c0_i32_0 = arith.constant 0 : i32
    %c0_i32_1 = arith.constant 0 : i32
    return %c0_i32, %c0_i32_0 : i32, i32
  }
  func.func @transform_4(%arg0: i32) -> (i32, i32, i32) {
    %c0_i32 = arith.constant 0 : i32
    %c0_i32_0 = arith.constant 0 : i32
    %c0_i32_1 = arith.constant 0 : i32
    return %arg0, %c0_i32, %c0_i32_0 : i32, i32, i32
  }
}

</mosaic_0001>

<llo_original>
// kernel: lstm_model_forward.1
$region0: #{lstm_model_forward.1}
  #allocation0 [shape = 'u32[]', space=smem, size = 0x4, offset = 0x4, fixed_abs, tag = 'smem constant byte address 0x4 - core index']
  #allocation1 [shape = 'u32[144,128]{1,0:T(1,128)}', space=vmem, size = 0x12000, scoped, tag = 'internal scratch']
  #allocation2 [shape = 'f32[8,8,512]{2,1,0:T(8,128)}', space=vmem, size = 0x20000, scoped, tag = 'scratch operand']
  #allocation3 [shape = 'f32[8,128]{1,0:T(8,128)}', space=vmem, size = 0x1000, scoped, tag = 'scratch operand']
  #allocation4 [shape = 'f32[8,128]{1,0:T(8,128)}', space=vmem, size = 0x1000, scoped, tag = 'scratch operand']
  %s0 = inlined_call_operand.vmem [shape: f32[8,8,16], index: 0, kind: input, shape index: {}]
  %s1 = inlined_call_operand.vmem [shape: f32[16,512], index: 1, kind: input, shape index: {}]
  %s2 = inlined_call_operand.hbm [shape: f32[128,512], index: 2, kind: input, shape index: {}]
  %s3 = inlined_call_operand.vmem [shape: f32[1,512], index: 3, kind: input, shape index: {}]
  %s4 = inlined_call_operand.vmem [shape: f32[8,8,128], index: 4, kind: output, shape index: {}]
  %s5 = sld [smem:[#allocation0]]
  $region34: #{lstm_model_forward.1} parent=0
    _
  %s7 = ssub.s32 1, %s5
  %s8 = scalar_select 0, %s7, %s5
  $region1: #{lstm_model_forward.1} parent=0
    #allocation5 [shape = 'u8[262144]{0}', space=vmem, size = 0x40000, scoped, tag = 'input window, operand 2, single buffered']
    #allocation6 [shape = 's32[1]{0}', space=sflag, size = 0x4, scoped, tag = 'scoped memory for lstm_model_forward.1']
    %9 = vsyncpa [#allocation6], 0
    // Predicated region
    $region2: #{lstm_model_forward.1} parent=1 // pred_check
      _
    $region3: #{lstm_model_forward.1} parent=1 // pred_check_branch
      %11 = sbr.rel (0) target = $region5
    $region4: #{lstm_model_forward.1} parent=1 // pred_region
      _
    $region5: #{lstm_model_forward.1} parent=1 // pred_fallthru
      _
    // Predicated region
    $region6: #{lstm_model_forward.1} parent=1 // pred_check
      _
    $region7: #{lstm_model_forward.1} parent=1 // pred_check_branch
      %13 = sbr.rel (0) target = $region9
    $region8: #{lstm_model_forward.1} parent=1 // pred_region
      _
    $region9: #{lstm_model_forward.1} parent=1 // pred_fallthru
      _
    // Predicated region
    $region10: #{lstm_model_forward.1} parent=1 // pred_check
      _
    $region11: #{lstm_model_forward.1} parent=1 // pred_check_branch
      %15 = sbr.rel (0) target = $region13
    $region12: #{lstm_model_forward.1} parent=1 // pred_region
      %s17 = ssub.s32 8192, 8192
      %18 = vsyncadd [#allocation6], %s17
      %s19 = sshll.u32 [#allocation5], 4
      %s20 = int_to_ptr.vmem [resolvable:$true] %s19
      %25 = dma.hbm_to_vmem [thread:$0]  %s2, 8192, %s20, [#allocation6], 512, 512, 32
    $region13: #{lstm_model_forward.1} parent=1 // pred_fallthru
      _
    // Predicated region
    $region14: #{lstm_model_forward.1} parent=1 // pred_check
      _
    $region15: #{lstm_model_forward.1} parent=1 // pred_check_branch
      %27 = sbr.rel (0) target = $region17
    $region16: #{lstm_model_forward.1} parent=1 // pred_region
      _
    $region17: #{lstm_model_forward.1} parent=1 // pred_fallthru
      _
    // Predicated region
    $region18: #{lstm_model_forward.1} parent=1 // pred_check
      _
    $region19: #{lstm_model_forward.1} parent=1 // pred_check_branch
      %29 = sbr.rel (0) target = $region21
    $region20: #{lstm_model_forward.1} parent=1 // pred_region
      %30 = dma.done [#allocation6], 8192
    $region21: #{lstm_model_forward.1} parent=1 // pred_fallthru
      _
    %p31 = scmp.eq.s32.totalorder 0, 0
    // Predicated region
    $region22: #{lstm_model_forward.1} parent=1 // pred_check
      %p32 = pneg %p31
    $region23: #{lstm_model_forward.1} parent=1 // pred_check_branch
      %34 = sbr.rel (%p32) target = $region25
    $region24: #{lstm_model_forward.1} parent=1 // pred_region
      %35 = vst [vmem:[#allocation3] sm:$0xff] 0.0
      %36 = vst [vmem:[#allocation4] sm:$0xff] 0.0
    $region25: #{lstm_model_forward.1} parent=1 // pred_fallthru
      _
    %v37 = vld [vmem:[%s0] sm:$0xff]
    %v38 = vld [vmem:[%s0 + $0x8] sm:$0xff]
    %v39 = vld [vmem:[%s0 + $0x10] sm:$0xff]
    %v40 = vld [vmem:[%s0 + $0x18] sm:$0xff]
    %v41 = vld [vmem:[%s0 + $0x20] sm:$0xff]
    %v42 = vld [vmem:[%s0 + $0x28] sm:$0xff]
    %v43 = vld [vmem:[%s0 + $0x30] sm:$0xff]
    %v44 = vld [vmem:[%s0 + $0x38] sm:$0xff]
    %v45 = vld [vmem:[%s1] sm:$0xff]
    %v46 = vld [vmem:[%s1 + $0x8] sm:$0xff]
    %v47 = vld [vmem:[%s1 + $0x10] sm:$0xff]
    %v48 = vld [vmem:[%s1 + $0x18] sm:$0xff]
    %v49 = vld [vmem:[%s1 + $0x20] sm:$0xff]
    %v50 = vld [vmem:[%s1 + $0x28] sm:$0xff]
    %v51 = vld [vmem:[%s1 + $0x30] sm:$0xff]
    %v52 = vld [vmem:[%s1 + $0x38] sm:$0xff]
    %v53 = vld [vmem:[%s3] sm:$0xf]
    %v55 = vlaneseq
    %v56 = vshrl.u32 %v55, 7
    %v57 = vsub.s32 0, %v56
    %v58 = vrot.slane %v53, %v57
    %v59 = vlaneseq
    %v60 = vshrl.u32 %v59, 7
    %v61 = vsub.s32 1, %v60
    %v62 = vrot.slane %v53, %v61
    %v63 = vlaneseq
    %v64 = vshrl.u32 %v63, 7
    %v65 = vsub.s32 2, %v64
    %v66 = vrot.slane %v53, %v65
    %v67 = vlaneseq
    %v68 = vshrl.u32 %v67, 7
    %v69 = vsub.s32 3, %v68
    %v70 = vrot.slane %v53, %v69
    %vm75 = vcmask 130048
    %v77 = vsel %vm75, %v37, 0
    %v80 = vsel %vm75, %v38, 0
    %v83 = vsel %vm75, %v39, 0
    %v86 = vsel %vm75, %v40, 0
    %v89 = vsel %vm75, %v41, 0
    %v92 = vsel %vm75, %v42, 0
    %v95 = vsel %vm75, %v43, 0
    %v98 = vsel %vm75, %v44, 0
    %100 = vmatprep.subr.mxu0 %v46
    %101 = vmatpush1.msra.mxu0 %v45
    %102 = vmatprep.subr.mxu0 %v50
    %103 = vmatpush1.msra.mxu0 %v49
    %104 = vmatprep.subr.mxu0 0.0
    %105 = vmatpush1.msra.mxu0 0.0
    %106 = vmatprep.subr.mxu0 0.0
    %107 = vmatpush1.msra.mxu0 0.0
    %108 = vmatprep.subr.mxu0 0.0
    %109 = vmatpush1.msra.mxu0 0.0
    %110 = vmatprep.subr.mxu0 0.0
    %111 = vmatpush1.msra.mxu0 0.0
    %112 = vmatprep.subr.mxu0 0.0
    %113 = vmatpush1.msra.mxu0 0.0
    %114 = vmatprep.subr.mxu0 0.0
    %115 = vmatpush1.msra.mxu0 0.0
    %116 = vmatprep.subr.mxu0 0.0
    %117 = vmatpush1.msra.mxu0 0.0
    %118 = vmatprep.subr.mxu0 0.0
    %119 = vmatpush1.msra.mxu0 0.0
    %120 = vmatprep.subr.mxu0 0.0
    %121 = vmatpush1.msra.mxu0 0.0
    %122 = vmatprep.subr.mxu0 0.0
    %123 = vmatpush1.msra.mxu0 0.0
    %124 = vmatprep.subr.mxu0 0.0
    %125 = vmatpush1.msra.mxu0 0.0
    %126 = vmatprep.subr.mxu0 0.0
    %127 = vmatpush1.msra.mxu0 0.0
    %128 = vmatprep.subr.mxu0 0.0
    %129 = vmatpush1.msra.mxu0 0.0
    %130 = vmatprep.subr.mxu0 0.0
    %131 = vmatpush1.msra.mxu0 0.0
    %132 = vmatprep.subr.mxu0 0.0
    %133 = vmatpush1.msra.mxu0 0.0
    %134 = vmatprep.subr.mxu0 0.0
    %135 = vmatpush1.msra.mxu0 0.0
    %136 = vmatprep.subr.mxu0 0.0
    %137 = vmatpush1.msra.mxu0 0.0
    %138 = vmatprep.subr.mxu0 0.0
    %139 = vmatpush1.msra.mxu0 0.0
    %140 = vmatprep.subr.mxu0 0.0
    %141 = vmatpush1.msra.mxu0 0.0
    %142 = vmatprep.subr.mxu0 0.0
    %143 = vmatpush1.msra.mxu0 0.0
    %144 = vmatprep.subr.mxu0 0.0
    %145 = vmatpush1.msra.mxu0 0.0
    %146 = vmatprep.subr.mxu0 0.0
    %147 = vmatpush1.msra.mxu0 0.0
    %148 = vmatprep.subr.mxu0 0.0
    %149 = vmatpush1.msra.mxu0 0.0
    %150 = vmatprep.subr.mxu0 0.0
    %151 = vmatpush1.msra.mxu0 0.0
    %152 = vmatprep.subr.mxu0 0.0
    %153 = vmatpush1.msra.mxu0 0.0
    %154 = vmatprep.subr.mxu0 0.0
    %155 = vmatpush1.msra.mxu0 0.0
    %156 = vmatprep.subr.mxu0 0.0
    %157 = vmatpush1.msra.mxu0 0.0
    %158 = vmatprep.subr.mxu0 0.0
    %159 = vmatpush1.msra.mxu0 0.0
    %160 = vmatprep.subr.mxu0 0.0
    %161 = vmatpush1.msra.mxu0 0.0
    %162 = vmatprep.subr.mxu0 0.0
    %163 = vmatpush1.msra.mxu0 0.0
    %164 = vmatprep.mubr.f32.mxu0 0.0
    %165 = vmatmul.mubr.f32.gmra.mrb[0].mxu0 %v77
    %v166 = vpop.f32.mrb[0].mxu0
    %v167 = vadd.f32 %v58, %v166
    %v168 = vpop.f32.mrb[0].mxu0
    %v169 = vadd.f32 %v62, %v168
    %170 = vmatprep.mubr.f32.mxu0 0.0
    %171 = vmatmul.mubr.f32.gmra.mrb[0].mxu0 %v80
    %v172 = vpop.f32.mrb[0].mxu0
    %v173 = vadd.f32 %v58, %v172
    %v174 = vpop.f32.mrb[0].mxu0
    %v175 = vadd.f32 %v62, %v174
    %176 = vmatprep.mubr.f32.mxu0 0.0
    %177 = vmatmul.mubr.f32.gmra.mrb[0].mxu0 %v83
    %v178 = vpop.f32.mrb[0].mxu0
    %v179 = vadd.f32 %v58, %v178
    %v180 = vpop.f32.mrb[0].mxu0
    %v181 = vadd.f32 %v62, %v180
    %182 = vmatprep.mubr.f32.mxu0 0.0
    %183 = vmatmul.mubr.f32.gmra.mrb[0].mxu0 %v86
    %v184 = vpop.f32.mrb[0].mxu0
    %v185 = vadd.f32 %v58, %v184
    %v186 = vpop.f32.mrb[0].mxu0
    %v187 = vadd.f32 %v62, %v186
    %188 = vmatprep.mubr.f32.mxu0 0.0
    %189 = vmatmul.mubr.f32.gmra.mrb[0].mxu0 %v89
    %v190 = vpop.f32.mrb[0].mxu0
    %v191 = vadd.f32 %v58, %v190
    %v192 = vpop.f32.mrb[0].mxu0
    %v193 = vadd.f32 %v62, %v192
    %194 = vmatprep.mubr.f32.mxu0 0.0
    %195 = vmatmul.mubr.f32.gmra.mrb[0].mxu0 %v92
    %v196 = vpop.f32.mrb[0].mxu0
    %v197 = vadd.f32 %v58, %v196
    %v198 = vpop.f32.mrb[0].mxu0
    %v199 = vadd.f32 %v62, %v198
    %200 = vmatprep.mubr.f32.mxu0 0.0
    %201 = vmatmul.mubr.f32.gmra.mrb[0].mxu0 %v95
    %v202 = vpop.f32.mrb[0].mxu0
    %v203 = vadd.f32 %v58, %v202
    %v204 = vpop.f32.mrb[0].mxu0
    %v205 = vadd.f32 %v62, %v204
    %206 = vmatprep.mubr.f32.mxu0 0.0
    %207 = vmatmul.mubr.f32.gmra.mrb[0].mxu0 %v98
    %v208 = vpop.f32.mrb[0].mxu0
    %v209 = vadd.f32 %v58, %v208
    %v210 = vpop.f32.mrb[0].mxu0
    %v211 = vadd.f32 %v62, %v210
    %212 = vdwg.mxu0
    %213 = vmatprep.subr.mxu0 %v48
    %214 = vmatpush1.msra.mxu0 %v47
    %215 = vmatprep.subr.mxu0 %v52
    %216 = vmatpush1.msra.mxu0 %v51
    %217 = vmatprep.subr.mxu0 0.0
    %218 = vmatpush1.msra.mxu0 0.0
    %219 = vmatprep.subr.mxu0 0.0
    %220 = vmatpush1.msra.mxu0 0.0
    %221 = vmatprep.subr.mxu0 0.0
    %222 = vmatpush1.msra.mxu0 0.0
    %223 = vmatprep.subr.mxu0 0.0
    %224 = vmatpush1.msra.mxu0 0.0
    %225 = vmatprep.subr.mxu0 0.0
    %226 = vmatpush1.msra.mxu0 0.0
    %227 = vmatprep.subr.mxu0 0.0
    %228 = vmatpush1.msra.mxu0 0.0
    %229 = vmatprep.subr.mxu0 0.0
    %230 = vmatpush1.msra.mxu0 0.0
    %231 = vmatprep.subr.mxu0 0.0
    %232 = vmatpush1.msra.mxu0 0.0
    %233 = vmatprep.subr.mxu0 0.0
    %234 = vmatpush1.msra.mxu0 0.0
    %235 = vmatprep.subr.mxu0 0.0
    %236 = vmatpush1.msra.mxu0 0.0
    %237 = vmatprep.subr.mxu0 0.0
    %238 = vmatpush1.msra.mxu0 0.0
    %239 = vmatprep.subr.mxu0 0.0
    %240 = vmatpush1.msra.mxu0 0.0
    %241 = vmatprep.subr.mxu0 0.0
    %242 = vmatpush1.msra.mxu0 0.0
    %243 = vmatprep.subr.mxu0 0.0
    %244 = vmatpush1.msra.mxu0 0.0
    %245 = vmatprep.subr.mxu0 0.0
    %246 = vmatpush1.msra.mxu0 0.0
    %247 = vmatprep.subr.mxu0 0.0
    %248 = vmatpush1.msra.mxu0 0.0
    %249 = vmatprep.subr.mxu0 0.0
    %250 = vmatpush1.msra.mxu0 0.0
    %251 = vmatprep.subr.mxu0 0.0
    %252 = vmatpush1.msra.mxu0 0.0
    %253 = vmatprep.subr.mxu0 0.0
    %254 = vmatpush1.msra.mxu0 0.0
    %255 = vmatprep.subr.mxu0 0.0
    %256 = vmatpush1.msra.mxu0 0.0
    %257 = vmatprep.subr.mxu0 0.0
    %258 = vmatpush1.msra.mxu0 0.0
    %259 = vmatprep.subr.mxu0 0.0
    %260 = vmatpush1.msra.mxu0 0.0
    %261 = vmatprep.subr.mxu0 0.0
    %262 = vmatpush1.msra.mxu0 0.0
    %263 = vmatprep.subr.mxu0 0.0
    %264 = vmatpush1.msra.mxu0 0.0
    %265 = vmatprep.subr.mxu0 0.0
    %266 = vmatpush1.msra.mxu0 0.0
    %267 = vmatprep.subr.mxu0 0.0
    %268 = vmatpush1.msra.mxu0 0.0
    %269 = vmatprep.subr.mxu0 0.0
    %270 = vmatpush1.msra.mxu0 0.0
    %271 = vmatprep.subr.mxu0 0.0
    %272 = vmatpush1.msra.mxu0 0.0
    %273 = vmatprep.subr.mxu0 0.0
    %274 = vmatpush1.msra.mxu0 0.0
    %275 = vmatprep.subr.mxu0 0.0
    %276 = vmatpush1.msra.mxu0 0.0
    %277 = vmatprep.mubr.f32.mxu0 0.0
    %278 = vmatmul.mubr.f32.gmra.mrb[0].mxu0 %v77
    %v279 = vpop.f32.mrb[0].mxu0
    %v280 = vadd.f32 %v66, %v279
    %v281 = vpop.f32.mrb[0].mxu0
    %v282 = vadd.f32 %v70, %v281
    %283 = vmatprep.mubr.f32.mxu0 0.0
    %284 = vmatmul.mubr.f32.gmra.mrb[0].mxu0 %v80
    %v285 = vpop.f32.mrb[0].mxu0
    %v286 = vadd.f32 %v66, %v285
    %v287 = vpop.f32.mrb[0].mxu0
    %v288 = vadd.f32 %v70, %v287
    %289 = vmatprep.mubr.f32.mxu0 0.0
    %290 = vmatmul.mubr.f32.gmra.mrb[0].mxu0 %v83
    %v291 = vpop.f32.mrb[0].mxu0
    %v292 = vadd.f32 %v66, %v291
    %v293 = vpop.f32.mrb[0].mxu0
    %v294 = vadd.f32 %v70, %v293
    %295 = vmatprep.mubr.f32.mxu0 0.0
    %296 = vmatmul.mubr.f32.gmra.mrb[0].mxu0 %v86
    %v297 = vpop.f32.mrb[0].mxu0
    %v298 = vadd.f32 %v66, %v297
    %v299 = vpop.f32.mrb[0].mxu0
    %v300 = vadd.f32 %v70, %v299
    %301 = vmatprep.mubr.f32.mxu0 0.0
    %302 = vmatmul.mubr.f32.gmra.mrb[0].mxu0 %v89
    %v303 = vpop.f32.mrb[0].mxu0
    %v304 = vadd.f32 %v66, %v303
    %v305 = vpop.f32.mrb[0].mxu0
    %v306 = vadd.f32 %v70, %v305
    %307 = vmatprep.mubr.f32.mxu0 0.0
    %308 = vmatmul.mubr.f32.gmra.mrb[0].mxu0 %v92
    %v309 = vpop.f32.mrb[0].mxu0
    %v310 = vadd.f32 %v66, %v309
    %v311 = vpop.f32.mrb[0].mxu0
    %v312 = vadd.f32 %v70, %v311
    %313 = vmatprep.mubr.f32.mxu0 0.0
    %314 = vmatmul.mubr.f32.gmra.mrb[0].mxu0 %v95
    %v315 = vpop.f32.mrb[0].mxu0
    %v316 = vadd.f32 %v66, %v315
    %v317 = vpop.f32.mrb[0].mxu0
    %v318 = vadd.f32 %v70, %v317
    %319 = vmatprep.mubr.f32.mxu0 0.0
    %320 = vmatmul.mubr.f32.gmra.mrb[0].mxu0 %v98
    %v321 = vpop.f32.mrb[0].mxu0
    %v322 = vadd.f32 %v66, %v321
    %v323 = vpop.f32.mrb[0].mxu0
    %v324 = vadd.f32 %v70, %v323
    %325 = vdwg.mxu0
    %326 = vst [vmem:[#allocation2] sm:$0xff] %v167
    %327 = vst [vmem:[#allocation2 + $0x8] sm:$0xff] %v169
    %328 = vst [vmem:[#allocation2 + $0x10] sm:$0xff] %v280
    %329 = vst [vmem:[#allocation2 + $0x18] sm:$0xff] %v282
    %330 = vst [vmem:[#allocation2 + $0x20] sm:$0xff] %v173
    %331 = vst [vmem:[#allocation2 + $0x28] sm:$0xff] %v175
    %332 = vst [vmem:[#allocation2 + $0x30] sm:$0xff] %v286
    %333 = vst [vmem:[#allocation2 + $0x38] sm:$0xff] %v288
    %334 = vst [vmem:[#allocation2 + $0x40] sm:$0xff] %v179
    %335 = vst [vmem:[#allocation2 + $0x48] sm:$0xff] %v181
    %336 = vst [vmem:[#allocation2 + $0x50] sm:$0xff] %v292
    %337 = vst [vmem:[#allocation2 + $0x58] sm:$0xff] %v294
    %338 = vst [vmem:[#allocation2 + $0x60] sm:$0xff] %v185
    %339 = vst [vmem:[#allocation2 + $0x68] sm:$0xff] %v187
    %340 = vst [vmem:[#allocation2 + $0x70] sm:$0xff] %v298
    %341 = vst [vmem:[#allocation2 + $0x78] sm:$0xff] %v300
    %342 = vst [vmem:[#allocation2 + $0x80] sm:$0xff] %v191
    %343 = vst [vmem:[#allocation2 + $0x88] sm:$0xff] %v193
    %344 = vst [vmem:[#allocation2 + $0x90] sm:$0xff] %v304
    %345 = vst [vmem:[#allocation2 + $0x98] sm:$0xff] %v306
    %346 = vst [vmem:[#allocation2 + $0xa0] sm:$0xff] %v197
    %347 = vst [vmem:[#allocation2 + $0xa8] sm:$0xff] %v199
    %348 = vst [vmem:[#allocation2 + $0xb0] sm:$0xff] %v310
    %349 = vst [vmem:[#allocation2 + $0xb8] sm:$0xff] %v312
    %350 = vst [vmem:[#allocation2 + $0xc0] sm:$0xff] %v203
    %351 = vst [vmem:[#allocation2 + $0xc8] sm:$0xff] %v205
    %352 = vst [vmem:[#allocation2 + $0xd0] sm:$0xff] %v316
    %353 = vst [vmem:[#allocation2 + $0xd8] sm:$0xff] %v318
    %354 = vst [vmem:[#allocation2 + $0xe0] sm:$0xff] %v209
    %355 = vst [vmem:[#allocation2 + $0xe8] sm:$0xff] %v211
    %356 = vst [vmem:[#allocation2 + $0xf0] sm:$0xff] %v322
    %357 = vst [vmem:[#allocation2 + $0xf8] sm:$0xff] %v324
    %v358 = vld [vmem:[#allocation3] sm:$0xff]
    %v359 = vld [vmem:[#allocation4] sm:$0xff]
    %v360 = vld [vmem:[#allocation2] sm:$0xff]
    %v361 = vld [vmem:[#allocation2 + $0x8] sm:$0xff]
    %v362 = vld [vmem:[#allocation2 + $0x10] sm:$0xff]
    %v363 = vld [vmem:[#allocation2 + $0x18] sm:$0xff]
    %v364 = vld [vmem:[#allocation5] sm:$0xff]
    %v365 = vld [vmem:[#allocation5 + $0x8] sm:$0xff]
    %v366 = vld [vmem:[#allocation5 + $0x10] sm:$0xff]
    %v367 = vld [vmem:[#allocation5 + $0x18] sm:$0xff]
    %v368 = vld [vmem:[#allocation5 + $0x20] sm:$0xff]
    %v369 = vld [vmem:[#allocation5 + $0x28] sm:$0xff]
    %v370 = vld [vmem:[#allocation5 + $0x30] sm:$0xff]
    %v371 = vld [vmem:[#allocation5 + $0x38] sm:$0xff]
    %v372 = vld [vmem:[#allocation5 + $0x40] sm:$0xff]
    %v373 = vld [vmem:[#allocation5 + $0x48] sm:$0xff]
    %v374 = vld [vmem:[#allocation5 + $0x50] sm:$0xff]
    %v375 = vld [vmem:[#allocation5 + $0x58] sm:$0xff]
    %v376 = vld [vmem:[#allocation5 + $0x60] sm:$0xff]
    %v377 = vld [vmem:[#allocation5 + $0x68] sm:$0xff]
    %v378 = vld [vmem:[#allocation5 + $0x70] sm:$0xff]
    %v379 = vld [vmem:[#allocation5 + $0x78] sm:$0xff]
    %v380 = vld [vmem:[#allocation5 + $0x80] sm:$0xff]
    %v381 = vld [vmem:[#allocation5 + $0x88] sm:$0xff]
    %v382 = vld [vmem:[#allocation5 + $0x90] sm:$0xff]
    %v383 = vld [vmem:[#allocation5 + $0x98] sm:$0xff]
    %v384 = vld [vmem:[#allocation5 + $0xa0] sm:$0xff]
    %v385 = vld [vmem:[#allocation5 + $0xa8] sm:$0xff]
    %v386 = vld [vmem:[#allocation5 + $0xb0] sm:$0xff]
    %v387 = vld [vmem:[#allocation5 + $0xb8] sm:$0xff]
    %v388 = vld [vmem:[#allocation5 + $0xc0] sm:$0xff]
    %v389 = vld [vmem:[#allocation5 + $0xc8] sm:$0xff]
    %v390 = vld [vmem:[#allocation5 + $0xd0] sm:$0xff]
    %v391 = vld [vmem:[#allocation5 + $0xd8] sm:$0xff]
    %v392 = vld [vmem:[#allocation5 + $0xe0] sm:$0xff]
    %v393 = vld [vmem:[#allocation5 + $0xe8] sm:$0xff]
    %v394 = vld [vmem:[#allocation5 + $0xf0] sm:$0xff]
    %v395 = vld [vmem:[#allocation5 + $0xf8] sm:$0xff]
    %v396 = vld [vmem:[#allocation5 + $0x100] sm:$0xff]
    %v397 = vld [vmem:[#allocation5 + $0x108] sm:$0xff]
    %v398 = vld [vmem:[#allocation5 + $0x110] sm:$0xff]
    %v399 = vld [vmem:[#allocation5 + $0x118] sm:$0xff]
    %v400 = vld [vmem:[#allocation5 + $0x120] sm:$0xff]
    %v401 = vld [vmem:[#allocation5 + $0x128] sm:$0xff]
    %v402 = vld [vmem:[#allocation5 + $0x130] sm:$0xff]
    %v403 = vld [vmem:[#allocation5 + $0x138] sm:$0xff]
    %v404 = vld [vmem:[#allocation5 + $0x140] sm:$0xff]
    %v405 = vld [vmem:[#allocation5 + $0x148] sm:$0xff]
    %v406 = vld [vmem:[#allocation5 + $0x150] sm:$0xff]
    %v407 = vld [vmem:[#allocation5 + $0x158] sm:$0xff]
    %v408 = vld [vmem:[#allocation5 + $0x160] sm:$0xff]
    %v409 = vld [vmem:[#allocation5 + $0x168] sm:$0xff]
    %v410 = vld [vmem:[#allocation5 + $0x170] sm:$0xff]
    %v411 = vld [vmem:[#allocation5 + $0x178] sm:$0xff]
    %v412 = vld [vmem:[#allocation5 + $0x180] sm:$0xff]
    %v413 = vld [vmem:[#allocation5 + $0x188] sm:$0xff]
    %v414 = vld [vmem:[#allocation5 + $0x190] sm:$0xff]
    %v415 = vld [vmem:[#allocation5 + $0x198] sm:$0xff]
    %v416 = vld [vmem:[#allocation5 + $0x1a0] sm:$0xff]
    %v417 = vld [vmem:[#allocation5 + $0x1a8] sm:$0xff]
    %v418 = vld [vmem:[#allocation5 + $0x1b0] sm:$0xff]
    %v419 = vld [vmem:[#allocation5 + $0x1b8] sm:$0xff]
    %v420 = vld [vmem:[#allocation5 + $0x1c0] sm:$0xff]
    %v421 = vld [vmem:[#allocation5 + $0x1c8] sm:$0xff]
    %v422 = vld [vmem:[#allocation5 + $0x1d0] sm:$0xff]
    %v423 = vld [vmem:[#allocation5 + $0x1d8] sm:$0xff]
    %v424 = vld [vmem:[#allocation5 + $0x1e0] sm:$0xff]
    %v425 = vld [vmem:[#allocation5 + $0x1e8] sm:$0xff]
    %v426 = vld [vmem:[#allocation5 + $0x1f0] sm:$0xff]
    %v427 = vld [vmem:[#allocation5 + $0x1f8] sm:$0xff]
    %428 = vmatprep.subr.mxu0 %v365
    %429 = vmatpush1.msra.mxu0 %v364
    %430 = vmatprep.subr.mxu0 %v369
    %431 = vmatpush1.msra.mxu0 %v368
    %432 = vmatprep.subr.mxu0 %v373
    %433 = vmatpush1.msra.mxu0 %v372
    %434 = vmatprep.subr.mxu0 %v377
    %435 = vmatpush1.msra.mxu0 %v376
    %436 = vmatprep.subr.mxu0 %v381
    %437 = vmatpush1.msra.mxu0 %v380
    %438 = vmatprep.subr.mxu0 %v385
    %439 = vmatpush1.msra.mxu0 %v384
    %440 = vmatprep.subr.mxu0 %v389
    %441 = vmatpush1.msra.mxu0 %v388
    %442 = vmatprep.subr.mxu0 %v393
    %443 = vmatpush1.msra.mxu0 %v392
    %444 = vmatprep.subr.mxu0 %v397
    %445 = vmatpush1.msra.mxu0 %v396
    %446 = vmatprep.subr.mxu0 %v401
    %447 = vmatpush1.msra.mxu0 %v400
    %448 = vmatprep.subr.mxu0 %v405
    %449 = vmatpush1.msra.mxu0 %v404
    %450 = vmatprep.subr.mxu0 %v409
    %451 = vmatpush1.msra.mxu0 %v408
    %452 = vmatprep.subr.mxu0 %v413
    %453 = vmatpush1.msra.mxu0 %v412
    %454 = vmatprep.subr.mxu0 %v417
    %455 = vmatpush1.msra.mxu0 %v416
    %456 = vmatprep.subr.mxu0 %v421
    %457 = vmatpush1.msra.mxu0 %v420
    %458 = vmatprep.subr.mxu0 %v425
    %459 = vmatpush1.msra.mxu0 %v424
    %460 = vmatprep.subr.mxu0 0.0
    %461 = vmatpush1.msra.mxu0 0.0
    %462 = vmatprep.subr.mxu0 0.0
    %463 = vmatpush1.msra.mxu0 0.0
    %464 = vmatprep.subr.mxu0 0.0
    %465 = vmatpush1.msra.mxu0 0.0
    %466 = vmatprep.subr.mxu0 0.0
    %467 = vmatpush1.msra.mxu0 0.0
    %468 = vmatprep.subr.mxu0 0.0
    %469 = vmatpush1.msra.mxu0 0.0
    %470 = vmatprep.subr.mxu0 0.0
    %471 = vmatpush1.msra.mxu0 0.0
    %472 = vmatprep.subr.mxu0 0.0
    %473 = vmatpush1.msra.mxu0 0.0
    %474 = vmatprep.subr.mxu0 0.0
    %475 = vmatpush1.msra.mxu0 0.0
    %476 = vmatprep.subr.mxu0 0.0
    %477 = vmatpush1.msra.mxu0 0.0
    %478 = vmatprep.subr.mxu0 0.0
    %479 = vmatpush1.msra.mxu0 0.0
    %480 = vmatprep.subr.mxu0 0.0
    %481 = vmatpush1.msra.mxu0 0.0
    %482 = vmatprep.subr.mxu0 0.0
    %483 = vmatpush1.msra.mxu0 0.0
    %484 = vmatprep.subr.mxu0 0.0
    %485 = vmatpush1.msra.mxu0 0.0
    %486 = vmatprep.subr.mxu0 0.0
    %487 = vmatpush1.msra.mxu0 0.0
    %488 = vmatprep.subr.mxu0 0.0
    %489 = vmatpush1.msra.mxu0 0.0
    %490 = vmatprep.subr.mxu0 0.0
    %491 = vmatpush1.msra.mxu0 0.0
    %492 = vmatprep.mubr.f32.mxu0 0.0
    %493 = vmatmul.mubr.f32.gmra.mrb[0].mxu0 %v358
    %v494 = vpop.f32.mrb[0].mxu0
    %v495 = vadd.f32 0.0, %v494
    %v496 = vpop.f32.mrb[0].mxu0
    %v497 = vadd.f32 0.0, %v496
    %498 = vdwg.mxu0
    %499 = vmatprep.subr.mxu0 %v367
    %500 = vmatpush1.msra.mxu0 %v366
    %501 = vmatprep.subr.mxu0 %v371
    %502 = vmatpush1.msra.mxu0 %v370
    %503 = vmatprep.subr.mxu0 %v375
    %504 = vmatpush1.msra.mxu0 %v374
    %505 = vmatprep.subr.mxu0 %v379
    %506 = vmatpush1.msra.mxu0 %v378
    %507 = vmatprep.subr.mxu0 %v383
    %508 = vmatpush1.msra.mxu0 %v382
    %509 = vmatprep.subr.mxu0 %v387
    %510 = vmatpush1.msra.mxu0 %v386
    %511 = vmatprep.subr.mxu0 %v391
    %512 = vmatpush1.msra.mxu0 %v390
    %513 = vmatprep.subr.mxu0 %v395
    %514 = vmatpush1.msra.mxu0 %v394
    %515 = vmatprep.subr.mxu0 %v399
    %516 = vmatpush1.msra.mxu0 %v398
    %517 = vmatprep.subr.mxu0 %v403
    %518 = vmatpush1.msra.mxu0 %v402
    %519 = vmatprep.subr.mxu0 %v407
    %520 = vmatpush1.msra.mxu0 %v406
    %521 = vmatprep.subr.mxu0 %v411
    %522 = vmatpush1.msra.mxu0 %v410
    %523 = vmatprep.subr.mxu0 %v415
    %524 = vmatpush1.msra.mxu0 %v414
    %525 = vmatprep.subr.mxu0 %v419
    %526 = vmatpush1.msra.mxu0 %v418
    %527 = vmatprep.subr.mxu0 %v423
    %528 = vmatpush1.msra.mxu0 %v422
    %529 = vmatprep.subr.mxu0 %v427
    %530 = vmatpush1.msra.mxu0 %v426
    %531 = vmatprep.subr.mxu0 0.0
    %532 = vmatpush1.msra.mxu0 0.0
    %533 = vmatprep.subr.mxu0 0.0
    %534 = vmatpush1.msra.mxu0 0.0
    %535 = vmatprep.subr.mxu0 0.0
    %536 = vmatpush1.msra.mxu0 0.0
    %537 = vmatprep.subr.mxu0 0.0
    %538 = vmatpush1.msra.mxu0 0.0
    %539 = vmatprep.subr.mxu0 0.0
    %540 = vmatpush1.msra.mxu0 0.0
    %541 = vmatprep.subr.mxu0 0.0
    %542 = vmatpush1.msra.mxu0 0.0
    %543 = vmatprep.subr.mxu0 0.0
    %544 = vmatpush1.msra.mxu0 0.0
    %545 = vmatprep.subr.mxu0 0.0
    %546 = vmatpush1.msra.mxu0 0.0
    %547 = vmatprep.subr.mxu0 0.0
    %548 = vmatpush1.msra.mxu0 0.0
    %549 = vmatprep.subr.mxu0 0.0
    %550 = vmatpush1.msra.mxu0 0.0
    %551 = vmatprep.subr.mxu0 0.0
    %552 = vmatpush1.msra.mxu0 0.0
    %553 = vmatprep.subr.mxu0 0.0
    %554 = vmatpush1.msra.mxu0 0.0
    %555 = vmatprep.subr.mxu0 0.0
    %556 = vmatpush1.msra.mxu0 0.0
    %557 = vmatprep.subr.mxu0 0.0
    %558 = vmatpush1.msra.mxu0 0.0
    %559 = vmatprep.subr.mxu0 0.0
    %560 = vmatpush1.msra.mxu0 0.0
    %561 = vmatprep.subr.mxu0 0.0
    %562 = vmatpush1.msra.mxu0 0.0
    %563 = vmatprep.mubr.f32.mxu0 0.0
    %564 = vmatmul.mubr.f32.gmra.mrb[0].mxu0 %v358
    %v565 = vpop.f32.mrb[0].mxu0
    %v566 = vadd.f32 0.0, %v565
    %v567 = vpop.f32.mrb[0].mxu0
    %v568 = vadd.f32 0.0, %v567
    %569 = vdwg.mxu0
    %v570 = vadd.f32 %v360, %v495
    %v571 = vadd.f32 %v361, %v497
    %v572 = vadd.f32 %v362, %v566
    %v573 = vadd.f32 %v363, %v568
    %v574 = vmul.f32 %v570, 0.5
    %v575 = vtanh.pop %v574
    %v576 = vmul.f32 %v575, 0.5
    %v577 = vadd.f32 %v576, 0.5
    %v578 = vmul.f32 %v571, 0.5
    %v579 = vtanh.pop %v578
    %v580 = vmul.f32 %v579, 0.5
    %v581 = vadd.f32 %v580, 0.5
    %v582 = vtanh.pop %v572
    %v583 = vmul.f32 %v573, 0.5
    %v584 = vtanh.pop %v583
    %v585 = vmul.f32 %v584, 0.5
    %v586 = vadd.f32 %v585, 0.5
    %v587 = vmul.f32 %v581, %v359
    %v588 = vmul.f32 %v577, %v582
    %v589 = vadd.f32 %v587, %v588
    %v590 = vtanh.pop %v589
    %v591 = vmul.f32 %v586, %v590
    %592 = vst [vmem:[#allocation4] sm:$0xff] %v589
    %593 = vst [vmem:[#allocation3] sm:$0xff] %v591
    %594 = vst [vmem:[%s4] sm:$0xff] %v591
    %v595 = vld [vmem:[#allocation3] sm:$0xff]
    %v596 = vld [vmem:[#allocation4] sm:$0xff]
    %s597 = scalar_lea.vmem [#allocation2], 32
    %v598 = vld [vmem:[%s597] sm:$0xff]
    %v599 = vld [vmem:[%s597 + $0x8] sm:$0xff]
    %v600 = vld [vmem:[%s597 + $0x10] sm:$0xff]
    %v601 = vld [vmem:[%s597 + $0x18] sm:$0xff]
    %v602 = vld [vmem:[#allocation5] sm:$0xff]
    %v603 = vld [vmem:[#allocation5 + $0x8] sm:$0xff]
    %v604 = vld [vmem:[#allocation5 + $0x10] sm:$0xff]
    %v605 = vld [vmem:[#allocation5 + $0x18] sm:$0xff]
    %v606 = vld [vmem:[#allocation5 + $0x20] sm:$0xff]
    %v607 = vld [vmem:[#allocation5 + $0x28] sm:$0xff]
    %v608 = vld [vmem:[#allocation5 + $0x30] sm:$0xff]
    %v609 = vld [vmem:[#allocation5 + $0x38] sm:$0xff]
    %v610 = vld [vmem:[#allocation5 + $0x40] sm:$0xff]
    %v611 = vld [vmem:[#allocation5 + $0x48] sm:$0xff]
    %v612 = vld [vmem:[#allocation5 + $0x50] sm:$0xff]
    %v613 = vld [vmem:[#allocation5 + $0x58] sm:$0xff]
    %v614 = vld [vmem:[#allocation5 + $0x60] sm:$0xff]
    %v615 = vld [vmem:[#allocation5 + $0x68] sm:$0xff]
    %v616 = vld [vmem:[#allocation5 + $0x70] sm:$0xff]
    %v617 = vld [vmem:[#allocation5 + $0x78] sm:$0xff]
    %v618 = vld [vmem:[#allocation5 + $0x80] sm:$0xff]
    %v619 = vld [vmem:[#allocation5 + $0x88] sm:$0xff]
    %v620 = vld [vmem:[#allocation5 + $0x90] sm:$0xff]
    %v621 = vld [vmem:[#allocation5 + $0x98] sm:$0xff]
    %v622 = vld [vmem:[#allocation5 + $0xa0] sm:$0xff]
    %v623 = vld [vmem:[#allocation5 + $0xa8] sm:$0xff]
    %v624 = vld [vmem:[#allocation5 + $0xb0] sm:$0xff]
    %v625 = vld [vmem:[#allocation5 + $0xb8] sm:$0xff]
    %v626 = vld [vmem:[#allocation5 + $0xc0] sm:$0xff]
    %v627 = vld [vmem:[#allocation5 + $0xc8] sm:$0xff]
    %v628 = vld [vmem:[#allocation5 + $0xd0] sm:$0xff]
    %v629 = vld [vmem:[#allocation5 + $0xd8] sm:$0xff]
    %v630 = vld [vmem:[#allocation5 + $0xe0] sm:$0xff]
    %v631 = vld [vmem:[#allocation5 + $0xe8] sm:$0xff]
    %v632 = vld [vmem:[#allocation5 + $0xf0] sm:$0xff]
    %v633 = vld [vmem:[#allocation5 + $0xf8] sm:$0xff]
    %v634 = vld [vmem:[#allocation5 + $0x100] sm:$0xff]
    %v635 = vld [vmem:[#allocation5 + $0x108] sm:$0xff]
    %v636 = vld [vmem:[#allocation5 + $0x110] sm:$0xff]
    %v637 = vld [vmem:[#allocation5 + $0x118] sm:$0xff]
    %v638 = vld [vmem:[#allocation5 + $0x120] sm:$0xff]
    %v639 = vld [vmem:[#allocation5 + $0x128] sm:$0xff]
    %v640 = vld [vmem:[#allocation5 + $0x130] sm:$0xff]
    %v641 = vld [vmem:[#allocation5 + $0x138] sm:$0xff]
    %v642 = vld [vmem:[#allocation5 + $0x140] sm:$0xff]
    %v643 = vld [vmem:[#allocation5 + $0x148] sm:$0xff]
    %v644 = vld [vmem:[#allocation5 + $0x150] sm:$0xff]
    %v645 = vld [vmem:[#allocation5 + $0x158] sm:$0xff]
    %v646 = vld [vmem:[#allocation5 + $0x160] sm:$0xff]
    %v647 = vld [vmem:[#allocation5 + $0x168] sm:$0xff]
    %v648 = vld [vmem:[#allocation5 + $0x170] sm:$0xff]
    %v649 = vld [vmem:[#allocation5 + $0x178] sm:$0xff]
    %v650 = vld [vmem:[#allocation5 + $0x180] sm:$0xff]
    %v651 = vld [vmem:[#allocation5 + $0x188] sm:$0xff]
    %v652 = vld [vmem:[#allocation5 + $0x190] sm:$0xff]
    %v653 = vld [vmem:[#allocation5 + $0x198] sm:$0xff]
    %v654 = vld [vmem:[#allocation5 + $0x1a0] sm:$0xff]
    %v655 = vld [vmem:[#allocation5 + $0x1a8] sm:$0xff]
    %v656 = vld [vmem:[#allocation5 + $0x1b0] sm:$0xff]
    %v657 = vld [vmem:[#allocation5 + $0x1b8] sm:$0xff]
    %v658 = vld [vmem:[#allocation5 + $0x1c0] sm:$0xff]
    %v659 = vld [vmem:[#allocation5 + $0x1c8] sm:$0xff]
    %v660 = vld [vmem:[#allocation5 + $0x1d0] sm:$0xff]
    %v661 = vld [vmem:[#allocation5 + $0x1d8] sm:$0xff]
    %v662 = vld [vmem:[#allocation5 + $0x1e0] sm:$0xff]
    %v663 = vld [vmem:[#allocation5 + $0x1e8] sm:$0xff]
    %v664 = vld [vmem:[#allocation5 + $0x1f0] sm:$0xff]
    %v665 = vld [vmem:[#allocation5 + $0x1f8] sm:$0xff]
    %666 = vmatprep.subr.mxu0 %v603
    %667 = vmatpush1.msra.mxu0 %v602
    %668 = vmatprep.subr.mxu0 %v607
    %669 = vmatpush1.msra.mxu0 %v606
    %670 = vmatprep.subr.mxu0 %v611
    %671 = vmatpush1.msra.mxu0 %v610
    %672 = vmatprep.subr.mxu0 %v615
    %673 = vmatpush1.msra.mxu0 %v614
    %674 = vmatprep.subr.mxu0 %v619
    %675 = vmatpush1.msra.mxu0 %v618
    %676 = vmatprep.subr.mxu0 %v623
    %677 = vmatpush1.msra.mxu0 %v622
    %678 = vmatprep.subr.mxu0 %v627
    %679 = vmatpush1.msra.mxu0 %v626
    %680 = vmatprep.subr.mxu0 %v631
    %681 = vmatpush1.msra.mxu0 %v630
    %682 = vmatprep.subr.mxu0 %v635
    %683 = vmatpush1.msra.mxu0 %v634
    %684 = vmatprep.subr.mxu0 %v639
    %685 = vmatpush1.msra.mxu0 %v638
    %686 = vmatprep.subr.mxu0 %v643
    %687 = vmatpush1.msra.mxu0 %v642
    %688 = vmatprep.subr.mxu0 %v647
    %689 = vmatpush1.msra.mxu0 %v646
    %690 = vmatprep.subr.mxu0 %v651
    %691 = vmatpush1.msra.mxu0 %v650
    %692 = vmatprep.subr.mxu0 %v655
    %693 = vmatpush1.msra.mxu0 %v654
    %694 = vmatprep.subr.mxu0 %v659
    %695 = vmatpush1.msra.mxu0 %v658
    %696 = vmatprep.subr.mxu0 %v663
    %697 = vmatpush1.msra.mxu0 %v662
    %698 = vmatprep.subr.mxu0 0.0
    %699 = vmatpush1.msra.mxu0 0.0
    %700 = vmatprep.subr.mxu0 0.0
    %701 = vmatpush1.msra.mxu0 0.0
    %702 = vmatprep.subr.mxu0 0.0
    %703 = vmatpush1.msra.mxu0 0.0
    %704 = vmatprep.subr.mxu0 0.0
    %705 = vmatpush1.msra.mxu0 0.0
    %706 = vmatprep.subr.mxu0 0.0
    %707 = vmatpush1.msra.mxu0 0.0
    %708 = vmatprep.subr.mxu0 0.0
    %709 = vmatpush1.msra.mxu0 0.0
    %710 = vmatprep.subr.mxu0 0.0
    %711 = vmatpush1.msra.mxu0 0.0
    %712 = vmatprep.subr.mxu0 0.0
    %713 = vmatpush1.msra.mxu0 0.0
    %714 = vmatprep.subr.mxu0 0.0
    %715 = vmatpush1.msra.mxu0 0.0
    %716 = vmatprep.subr.mxu0 0.0
    %717 = vmatpush1.msra.mxu0 0.0
    %718 = vmatprep.subr.mxu0 0.0
    %719 = vmatpush1.msra.mxu0 0.0
    %720 = vmatprep.subr.mxu0 0.0
    %721 = vmatpush1.msra.mxu0 0.0
    %722 = vmatprep.subr.mxu0 0.0
    %723 = vmatpush1.msra.mxu0 0.0
    %724 = vmatprep.subr.mxu0 0.0
    %725 = vmatpush1.msra.mxu0 0.0
    %726 = vmatprep.subr.mxu0 0.0
    %727 = vmatpush1.msra.mxu0 0.0
    %728 = vmatprep.subr.mxu0 0.0
    %729 = vmatpush1.msra.mxu0 0.0
    %730 = vmatprep.mubr.f32.mxu0 0.0
    %731 = vmatmul.mubr.f32.gmra.mrb[0].mxu0 %v595
    %v732 = vpop.f32.mrb[0].mxu0
    %v733 = vadd.f32 0.0, %v732
    %v734 = vpop.f32.mrb[0].mxu0
    %v735 = vadd.f32 0.0, %v734
    %736 = vdwg.mxu0
    %737 = vmatprep.subr.mxu0 %v605
    %738 = vmatpush1.msra.mxu0 %v604
    %739 = vmatprep.subr.mxu0 %v609
    %740 = vmatpush1.msra.mxu0 %v608
    %741 = vmatprep.subr.mxu0 %v613
    %742 = vmatpush1.msra.mxu0 %v612
    %743 = vmatprep.subr.mxu0 %v617
    %744 = vmatpush1.msra.mxu0 %v616
    %745 = vmatprep.subr.mxu0 %v621
    %746 = vmatpush1.msra.mxu0 %v620
    %747 = vmatprep.subr.mxu0 %v625
    %748 = vmatpush1.msra.mxu0 %v624
    %749 = vmatprep.subr.mxu0 %v629
    %750 = vmatpush1.msra.mxu0 %v628
    %751 = vmatprep.subr.mxu0 %v633
    %752 = vmatpush1.msra.mxu0 %v632
    %753 = vmatprep.subr.mxu0 %v637
    %754 = vmatpush1.msra.mxu0 %v636
    %755 = vmatprep.subr.mxu0 %v641
    %756 = vmatpush1.msra.mxu0 %v640
    %757 = vmatprep.subr.mxu0 %v645
    %758 = vmatpush1.msra.mxu0 %v644
    %759 = vmatprep.subr.mxu0 %v649
    %760 = vmatpush1.msra.mxu0 %v648
    %761 = vmatprep.subr.mxu0 %v653
    %762 = vmatpush1.msra.mxu0 %v652
    %763 = vmatprep.subr.mxu0 %v657
    %764 = vmatpush1.msra.mxu0 %v656
    %765 = vmatprep.subr.mxu0 %v661
    %766 = vmatpush1.msra.mxu0 %v660
    %767 = vmatprep.subr.mxu0 %v665
    %768 = vmatpush1.msra.mxu0 %v664
    %769 = vmatprep.subr.mxu0 0.0
    %770 = vmatpush1.msra.mxu0 0.0
    %771 = vmatprep.subr.mxu0 0.0
    %772 = vmatpush1.msra.mxu0 0.0
    %773 = vmatprep.subr.mxu0 0.0
    %774 = vmatpush1.msra.mxu0 0.0
    %775 = vmatprep.subr.mxu0 0.0
    %776 = vmatpush1.msra.mxu0 0.0
    %777 = vmatprep.subr.mxu0 0.0
    %778 = vmatpush1.msra.mxu0 0.0
    %779 = vmatprep.subr.mxu0 0.0
    %780 = vmatpush1.msra.mxu0 0.0
    %781 = vmatprep.subr.mxu0 0.0
    %782 = vmatpush1.msra.mxu0 0.0
    %783 = vmatprep.subr.mxu0 0.0
    %784 = vmatpush1.msra.mxu0 0.0
    %785 = vmatprep.subr.mxu0 0.0
    %786 = vmatpush1.msra.mxu0 0.0
    %787 = vmatprep.subr.mxu0 0.0
    %788 = vmatpush1.msra.mxu0 0.0
    %789 = vmatprep.subr.mxu0 0.0
    %790 = vmatpush1.msra.mxu0 0.0
    %791 = vmatprep.subr.mxu0 0.0
    %792 = vmatpush1.msra.mxu0 0.0
    %793 = vmatprep.subr.mxu0 0.0
    %794 = vmatpush1.msra.mxu0 0.0
    %795 = vmatprep.subr.mxu0 0.0
    %796 = vmatpush1.msra.mxu0 0.0
    %797 = vmatprep.subr.mxu0 0.0
    %798 = vmatpush1.msra.mxu0 0.0
    %799 = vmatprep.subr.mxu0 0.0
    %800 = vmatpush1.msra.mxu0 0.0
    %801 = vmatprep.mubr.f32.mxu0 0.0
    %802 = vmatmul.mubr.f32.gmra.mrb[0].mxu0 %v595
    %v803 = vpop.f32.mrb[0].mxu0
    %v804 = vadd.f32 0.0, %v803
    %v805 = vpop.f32.mrb[0].mxu0
    %v806 = vadd.f32 0.0, %v805
    %807 = vdwg.mxu0
    %v808 = vadd.f32 %v598, %v733
    %v809 = vadd.f32 %v599, %v735
    %v810 = vadd.f32 %v600, %v804
    %v811 = vadd.f32 %v601, %v806
    %v812 = vmul.f32 %v808, 0.5
    %v813 = vtanh.pop %v812
    %v814 = vmul.f32 %v813, 0.5
    %v815 = vadd.f32 %v814, 0.5
    %v816 = vmul.f32 %v809, 0.5
    %v817 = vtanh.pop %v816
    %v818 = vmul.f32 %v817, 0.5
    %v819 = vadd.f32 %v818, 0.5
    %v820 = vtanh.pop %v810
    %v821 = vmul.f32 %v811, 0.5
    %v822 = vtanh.pop %v821
    %v823 = vmul.f32 %v822, 0.5
    %v824 = vadd.f32 %v823, 0.5
    %v825 = vmul.f32 %v819, %v596
    %v826 = vmul.f32 %v815, %v820
    %v827 = vadd.f32 %v825, %v826
    %v828 = vtanh.pop %v827
    %v829 = vmul.f32 %v824, %v828
    %830 = vst [vmem:[#allocation4] sm:$0xff] %v827
    %831 = vst [vmem:[#allocation3] sm:$0xff] %v829
    %s832 = scalar_lea.vmem %s4, 8
    %833 = vst [vmem:[%s832] sm:$0xff] %v829
    %v834 = vld [vmem:[#allocation3] sm:$0xff]
    %v835 = vld [vmem:[#allocation4] sm:$0xff]
    %s836 = scalar_lea.vmem [#allocation2], 64
    %v837 = vld [vmem:[%s836] sm:$0xff]
    %v838 = vld [vmem:[%s836 + $0x8] sm:$0xff]
    %v839 = vld [vmem:[%s836 + $0x10] sm:$0xff]
    %v840 = vld [vmem:[%s836 + $0x18] sm:$0xff]
    %v841 = vld [vmem:[#allocation5] sm:$0xff]
    %v842 = vld [vmem:[#allocation5 + $0x8] sm:$0xff]
    %v843 = vld [vmem:[#allocation5 + $0x10] sm:$0xff]
    %v844 = vld [vmem:[#allocation5 + $0x18] sm:$0xff]
    %v845 = vld [vmem:[#allocation5 + $0x20] sm:$0xff]
    %v846 = vld [vmem:[#allocation5 + $0x28] sm:$0xff]
    %v847 = vld [vmem:[#allocation5 + $0x30] sm:$0xff]
    %v848 = vld [vmem:[#allocation5 + $0x38] sm:$0xff]
    %v849 = vld [vmem:[#allocation5 + $0x40] sm:$0xff]
    %v850 = vld [vmem:[#allocation5 + $0x48] sm:$0xff]
    %v851 = vld [vmem:[#allocation5 + $0x50] sm:$0xff]
    %v852 = vld [vmem:[#allocation5 + $0x58] sm:$0xff]
    %v853 = vld [vmem:[#allocation5 + $0x60] sm:$0xff]
    %v854 = vld [vmem:[#allocation5 + $0x68] sm:$0xff]
    %v855 = vld [vmem:[#allocation5 + $0x70] sm:$0xff]
    %v856 = vld [vmem:[#allocation5 + $0x78] sm:$0xff]
    %v857 = vld [vmem:[#allocation5 + $0x80] sm:$0xff]
    %v858 = vld [vmem:[#allocation5 + $0x88] sm:$0xff]
    %v859 = vld [vmem:[#allocation5 + $0x90] sm:$0xff]
    %v860 = vld [vmem:[#allocation5 + $0x98] sm:$0xff]
    %v861 = vld [vmem:[#allocation5 + $0xa0] sm:$0xff]
    %v862 = vld [vmem:[#allocation5 + $0xa8] sm:$0xff]
    %v863 = vld [vmem:[#allocation5 + $0xb0] sm:$0xff]
    %v864 = vld [vmem:[#allocation5 + $0xb8] sm:$0xff]
    %v865 = vld [vmem:[#allocation5 + $0xc0] sm:$0xff]
    %v866 = vld [vmem:[#allocation5 + $0xc8] sm:$0xff]
    %v867 = vld [vmem:[#allocation5 + $0xd0] sm:$0xff]
    %v868 = vld [vmem:[#allocation5 + $0xd8] sm:$0xff]
    %v869 = vld [vmem:[#allocation5 + $0xe0] sm:$0xff]
    %v870 = vld [vmem:[#allocation5 + $0xe8] sm:$0xff]
    %v871 = vld [vmem:[#allocation5 + $0xf0] sm:$0xff]
    %v872 = vld [vmem:[#allocation5 + $0xf8] sm:$0xff]
    %v873 = vld [vmem:[#allocation5 + $0x100] sm:$0xff]
    %v874 = vld [vmem:[#allocation5 + $0x108] sm:$0xff]
    %v875 = vld [vmem:[#allocation5 + $0x110] sm:$0xff]
    %v876 = vld [vmem:[#allocation5 + $0x118] sm:$0xff]
    %v877 = vld [vmem:[#allocation5 + $0x120] sm:$0xff]
    %v878 = vld [vmem:[#allocation5 + $0x128] sm:$0xff]
    %v879 = vld [vmem:[#allocation5 + $0x130] sm:$0xff]
    %v880 = vld [vmem:[#allocation5 + $0x138] sm:$0xff]
    %v881 = vld [vmem:[#allocation5 + $0x140] sm:$0xff]
    %v882 = vld [vmem:[#allocation5 + $0x148] sm:$0xff]
    %v883 = vld [vmem:[#allocation5 + $0x150] sm:$0xff]
    %v884 = vld [vmem:[#allocation5 + $0x158] sm:$0xff]
    %v885 = vld [vmem:[#allocation5 + $0x160] sm:$0xff]
    %v886 = vld [vmem:[#allocation5 + $0x168] sm:$0xff]
    %v887 = vld [vmem:[#allocation5 + $0x170] sm:$0xff]
    %v888 = vld [vmem:[#allocation5 + $0x178] sm:$0xff]
    %v889 = vld [vmem:[#allocation5 + $0x180] sm:$0xff]
    %v890 = vld [vmem:[#allocation5 + $0x188] sm:$0xff]
    %v891 = vld [vmem:[#allocation5 + $0x190] sm:$0xff]
    %v892 = vld [vmem:[#allocation5 + $0x198] sm:$0xff]
    %v893 = vld [vmem:[#allocation5 + $0x1a0] sm:$0xff]
    %v894 = vld [vmem:[#allocation5 + $0x1a8] sm:$0xff]
    %v895 = vld [vmem:[#allocation5 + $0x1b0] sm:$0xff]
    %v896 = vld [vmem:[#allocation5 + $0x1b8] sm:$0xff]
    %v897 = vld [vmem:[#allocation5 + $0x1c0] sm:$0xff]
    %v898 = vld [vmem:[#allocation5 + $0x1c8] sm:$0xff]
    %v899 = vld [vmem:[#allocation5 + $0x1d0] sm:$0xff]
    %v900 = vld [vmem:[#allocation5 + $0x1d8] sm:$0xff]
    %v901 = vld [vmem:[#allocation5 + $0x1e0] sm:$0xff]
    %v902 = vld [vmem:[#allocation5 + $0x1e8] sm:$0xff]
    %v903 = vld [vmem:[#allocation5 + $0x1f0] sm:$0xff]
    %v904 = vld [vmem:[#allocation5 + $0x1f8] sm:$0xff]
    %905 = vmatprep.subr.mxu0 %v842
    %906 = vmatpush1.msra.mxu0 %v841
    %907 = vmatprep.subr.mxu0 %v846
    %908 = vmatpush1.msra.mxu0 %v845
    %909 = vmatprep.subr.mxu0 %v850
    %910 = vmatpush1.msra.mxu0 %v849
    %911 = vmatprep.subr.mxu0 %v854
    %912 = vmatpush1.msra.mxu0 %v853
    %913 = vmatprep.subr.mxu0 %v858
    %914 = vmatpush1.msra.mxu0 %v857
    %915 = vmatprep.subr.mxu0 %v862
    %916 = vmatpush1.msra.mxu0 %v861
    %917 = vmatprep.subr.mxu0 %v866
    %918 = vmatpush1.msra.mxu0 %v865
    %919 = vmatprep.subr.mxu0 %v870
    %920 = vmatpush1.msra.mxu0 %v869
    %921 = vmatprep.subr.mxu0 %v874
    %922 = vmatpush1.msra.mxu0 %v873
    %923 = vmatprep.subr.mxu0 %v878
    %924 = vmatpush1.msra.mxu0 %v877
    %925 = vmatprep.subr.mxu0 %v882
    %926 = vmatpush1.msra.mxu0 %v881
    %927 = vmatprep.subr.mxu0 %v886
    %928 = vmatpush1.msra.mxu0 %v885
    %929 = vmatprep.subr.mxu0 %v890
    %930 = vmatpush1.msra.mxu0 %v889
    %931 = vmatprep.subr.mxu0 %v894
    %932 = vmatpush1.msra.mxu0 %v893
    %933 = vmatprep.subr.mxu0 %v898
    %934 = vmatpush1.msra.mxu0 %v897
    %935 = vmatprep.subr.mxu0 %v902
    %936 = vmatpush1.msra.mxu0 %v901
    %937 = vmatprep.subr.mxu0 0.0
    %938 = vmatpush1.msra.mxu0 0.0
    %939 = vmatprep.subr.mxu0 0.0
    %940 = vmatpush1.msra.mxu0 0.0
    %941 = vmatprep.subr.mxu0 0.0
    %942 = vmatpush1.msra.mxu0 0.0
    %943 = vmatprep.subr.mxu0 0.0
    %944 = vmatpush1.msra.mxu0 0.0
    %945 = vmatprep.subr.mxu0 0.0
    %946 = vmatpush1.msra.mxu0 0.0
    %947 = vmatprep.subr.mxu0 0.0
    %948 = vmatpush1.msra.mxu0 0.0
    %949 = vmatprep.subr.mxu0 0.0
    %950 = vmatpush1.msra.mxu0 0.0
    %951 = vmatprep.subr.mxu0 0.0
    %952 = vmatpush1.msra.mxu0 0.0
    %953 = vmatprep.subr.mxu0 0.0
    %954 = vmatpush1.msra.mxu0 0.0
    %955 = vmatprep.subr.mxu0 0.0
    %956 = vmatpush1.msra.mxu0 0.0
    %957 = vmatprep.subr.mxu0 0.0
    %958 = vmatpush1.msra.mxu0 0.0
    %959 = vmatprep.subr.mxu0 0.0
    %960 = vmatpush1.msra.mxu0 0.0
    %961 = vmatprep.subr.mxu0 0.0
    %962 = vmatpush1.msra.mxu0 0.0
    %963 = vmatprep.subr.mxu0 0.0
    %964 = vmatpush1.msra.mxu0 0.0
    %965 = vmatprep.subr.mxu0 0.0
    %966 = vmatpush1.msra.mxu0 0.0
    %967 = vmatprep.subr.mxu0 0.0
    %968 = vmatpush1.msra.mxu0 0.0
    %969 = vmatprep.mubr.f32.mxu0 0.0
    %970 = vmatmul.mubr.f32.gmra.mrb[0].mxu0 %v834
    %v971 = vpop.f32.mrb[0].mxu0
    %v972 = vadd.f32 0.0, %v971
    %v973 = vpop.f32.mrb[0].mxu0
    %v974 = vadd.f32 0.0, %v973
    %975 = vdwg.mxu0
    %976 = vmatprep.subr.mxu0 %v844
    %977 = vmatpush1.msra.mxu0 %v843
    %978 = vmatprep.subr.mxu0 %v848
    %979 = vmatpush1.msra.mxu0 %v847
    %980 = vmatprep.subr.mxu0 %v852
    %981 = vmatpush1.msra.mxu0 %v851
    %982 = vmatprep.subr.mxu0 %v856
    %983 = vmatpush1.msra.mxu0 %v855
    %984 = vmatprep.subr.mxu0 %v860
    %985 = vmatpush1.msra.mxu0 %v859
    %986 = vmatprep.subr.mxu0 %v864
    %987 = vmatpush1.msra.mxu0 %v863
    %988 = vmatprep.subr.mxu0 %v868
    %989 = vmatpush1.msra.mxu0 %v867
    %990 = vmatprep.subr.mxu0 %v872
    %991 = vmatpush1.msra.mxu0 %v871
    %992 = vmatprep.subr.mxu0 %v876
    %993 = vmatpush1.msra.mxu0 %v875
    %994 = vmatprep.subr.mxu0 %v880
    %995 = vmatpush1.msra.mxu0 %v879
    %996 = vmatprep.subr.mxu0 %v884
    %997 = vmatpush1.msra.mxu0 %v883
    %998 = vmatprep.subr.mxu0 %v888
    %999 = vmatpush1.msra.mxu0 %v887
    %1000 = vmatprep.subr.mxu0 %v892
    %1001 = vmatpush1.msra.mxu0 %v891
    %1002 = vmatprep.subr.mxu0 %v896
    %1003 = vmatpush1.msra.mxu0 %v895
    %1004 = vmatprep.subr.mxu0 %v900
    %1005 = vmatpush1.msra.mxu0 %v899
    %1006 = vmatprep.subr.mxu0 %v904
    %1007 = vmatpush1.msra.mxu0 %v903
    %1008 = vmatprep.subr.mxu0 0.0
    %1009 = vmatpush1.msra.mxu0 0.0
    %1010 = vmatprep.subr.mxu0 0.0
    %1011 = vmatpush1.msra.mxu0 0.0
    %1012 = vmatprep.subr.mxu0 0.0
    %1013 = vmatpush1.msra.mxu0 0.0
    %1014 = vmatprep.subr.mxu0 0.0
    %1015 = vmatpush1.msra.mxu0 0.0
    %1016 = vmatprep.subr.mxu0 0.0
    %1017 = vmatpush1.msra.mxu0 0.0
    %1018 = vmatprep.subr.mxu0 0.0
    %1019 = vmatpush1.msra.mxu0 0.0
    %1020 = vmatprep.subr.mxu0 0.0
    %1021 = vmatpush1.msra.mxu0 0.0
    %1022 = vmatprep.subr.mxu0 0.0
    %1023 = vmatpush1.msra.mxu0 0.0
    %1024 = vmatprep.subr.mxu0 0.0
    %1025 = vmatpush1.msra.mxu0 0.0
    %1026 = vmatprep.subr.mxu0 0.0
    %1027 = vmatpush1.msra.mxu0 0.0
    %1028 = vmatprep.subr.mxu0 0.0
    %1029 = vmatpush1.msra.mxu0 0.0
    %1030 = vmatprep.subr.mxu0 0.0
    %1031 = vmatpush1.msra.mxu0 0.0
    %1032 = vmatprep.subr.mxu0 0.0
    %1033 = vmatpush1.msra.mxu0 0.0
    %1034 = vmatprep.subr.mxu0 0.0
    %1035 = vmatpush1.msra.mxu0 0.0
    %1036 = vmatprep.subr.mxu0 0.0
    %1037 = vmatpush1.msra.mxu0 0.0
    %1038 = vmatprep.subr.mxu0 0.0
    %1039 = vmatpush1.msra.mxu0 0.0
    %1040 = vmatprep.mubr.f32.mxu0 0.0
    %1041 = vmatmul.mubr.f32.gmra.mrb[0].mxu0 %v834
    %v1042 = vpop.f32.mrb[0].mxu0
    %v1043 = vadd.f32 0.0, %v1042
    %v1044 = vpop.f32.mrb[0].mxu0
    %v1045 = vadd.f32 0.0, %v1044
    %1046 = vdwg.mxu0
    %v1047 = vadd.f32 %v837, %v972
    %v1048 = vadd.f32 %v838, %v974
    %v1049 = vadd.f32 %v839, %v1043
    %v1050 = vadd.f32 %v840, %v1045
    %v1051 = vmul.f32 %v1047, 0.5
    %v1052 = vtanh.pop %v1051
    %v1053 = vmul.f32 %v1052, 0.5
    %v1054 = vadd.f32 %v1053, 0.5
    %v1055 = vmul.f32 %v1048, 0.5
    %v1056 = vtanh.pop %v1055
    %v1057 = vmul.f32 %v1056, 0.5
    %v1058 = vadd.f32 %v1057, 0.5
    %v1059 = vtanh.pop %v1049
    %v1060 = vmul.f32 %v1050, 0.5
    %v1061 = vtanh.pop %v1060
    %v1062 = vmul.f32 %v1061, 0.5
    %v1063 = vadd.f32 %v1062, 0.5
    %v1064 = vmul.f32 %v1058, %v835
    %v1065 = vmul.f32 %v1054, %v1059
    %v1066 = vadd.f32 %v1064, %v1065
    %v1067 = vtanh.pop %v1066
    %v1068 = vmul.f32 %v1063, %v1067
    %1069 = vst [vmem:[#allocation4] sm:$0xff] %v1066
    %1070 = vst [vmem:[#allocation3] sm:$0xff] %v1068
    %s1071 = scalar_lea.vmem %s4, 16
    %1072 = vst [vmem:[%s1071] sm:$0xff] %v1068
    %v1073 = vld [vmem:[#allocation3] sm:$0xff]
    %v1074 = vld [vmem:[#allocation4] sm:$0xff]
    %s1075 = scalar_lea.vmem [#allocation2], 96
    %v1076 = vld [vmem:[%s1075] sm:$0xff]
    %v1077 = vld [vmem:[%s1075 + $0x8] sm:$0xff]
    %v1078 = vld [vmem:[%s1075 + $0x10] sm:$0xff]
    %v1079 = vld [vmem:[%s1075 + $0x18] sm:$0xff]
    %v1080 = vld [vmem:[#allocation5] sm:$0xff]
    %v1081 = vld [vmem:[#allocation5 + $0x8] sm:$0xff]
    %v1082 = vld [vmem:[#allocation5 + $0x10] sm:$0xff]
    %v1083 = vld [vmem:[#allocation5 + $0x18] sm:$0xff]
    %v1084 = vld [vmem:[#allocation5 + $0x20] sm:$0xff]
    %v1085 = vld [vmem:[#allocation5 + $0x28] sm:$0xff]
    %v1086 = vld [vmem:[#allocation5 + $0x30] sm:$0xff]
    %v1087 = vld [vmem:[#allocation5 + $0x38] sm:$0xff]
    %v1088 = vld [vmem:[#allocation5 + $0x40] sm:$0xff]
    %v1089 = vld [vmem:[#allocation5 + $0x48] sm:$0xff]
    %v1090 = vld [vmem:[#allocation5 + $0x50] sm:$0xff]
    %v1091 = vld [vmem:[#allocation5 + $0x58] sm:$0xff]
    %v1092 = vld [vmem:[#allocation5 + $0x60] sm:$0xff]
    %v1093 = vld [vmem:[#allocation5 + $0x68] sm:$0xff]
    %v1094 = vld [vmem:[#allocation5 + $0x70] sm:$0xff]
    %v1095 = vld [vmem:[#allocation5 + $0x78] sm:$0xff]
    %v1096 = vld [vmem:[#allocation5 + $0x80] sm:$0xff]
    %v1097 = vld [vmem:[#allocation5 + $0x88] sm:$0xff]
    %v1098 = vld [vmem:[#allocation5 + $0x90] sm:$0xff]
    %v1099 = vld [vmem:[#allocation5 + $0x98] sm:$0xff]
    %v1100 = vld [vmem:[#allocation5 + $0xa0] sm:$0xff]
    %v1101 = vld [vmem:[#allocation5 + $0xa8] sm:$0xff]
    %v1102 = vld [vmem:[#allocation5 + $0xb0] sm:$0xff]
    %v1103 = vld [vmem:[#allocation5 + $0xb8] sm:$0xff]
    %v1104 = vld [vmem:[#allocation5 + $0xc0] sm:$0xff]
    %v1105 = vld [vmem:[#allocation5 + $0xc8] sm:$0xff]
    %v1106 = vld [vmem:[#allocation5 + $0xd0] sm:$0xff]
    %v1107 = vld [vmem:[#allocation5 + $0xd8] sm:$0xff]
    %v1108 = vld [vmem:[#allocation5 + $0xe0] sm:$0xff]
    %v1109 = vld [vmem:[#allocation5 + $0xe8] sm:$0xff]
    %v1110 = vld [vmem:[#allocation5 + $0xf0] sm:$0xff]
    %v1111 = vld [vmem:[#allocation5 + $0xf8] sm:$0xff]
    %v1112 = vld [vmem:[#allocation5 + $0x100] sm:$0xff]
    %v1113 = vld [vmem:[#allocation5 + $0x108] sm:$0xff]
    %v1114 = vld [vmem:[#allocation5 + $0x110] sm:$0xff]
    %v1115 = vld [vmem:[#allocation5 + $0x118] sm:$0xff]
    %v1116 = vld [vmem:[#allocation5 + $0x120] sm:$0xff]
    %v1117 = vld [vmem:[#allocation5 + $0x128] sm:$0xff]
    %v1118 = vld [vmem:[#allocation5 + $0x130] sm:$0xff]
    %v1119 = vld [vmem:[#allocation5 + $0x138] sm:$0xff]
    %v1120 = vld [vmem:[#allocation5 + $0x140] sm:$0xff]
    %v1121 = vld [vmem:[#allocation5 + $0x148] sm:$0xff]
    %v1122 = vld [vmem:[#allocation5 + $0x150] sm:$0xff]
    %v1123 = vld [vmem:[#allocation5 + $0x158] sm:$0xff]
    %v1124 = vld [vmem:[#allocation5 + $0x160] sm:$0xff]
    %v1125 = vld [vmem:[#allocation5 + $0x168] sm:$0xff]
    %v1126 = vld [vmem:[#allocation5 + $0x170] sm:$0xff]
    %v1127 = vld [vmem:[#allocation5 + $0x178] sm:$0xff]
    %v1128 = vld [vmem:[#allocation5 + $0x180] sm:$0xff]
    %v1129 = vld [vmem:[#allocation5 + $0x188] sm:$0xff]
    %v1130 = vld [vmem:[#allocation5 + $0x190] sm:$0xff]
    %v1131 = vld [vmem:[#allocation5 + $0x198] sm:$0xff]
    %v1132 = vld [vmem:[#allocation5 + $0x1a0] sm:$0xff]
    %v1133 = vld [vmem:[#allocation5 + $0x1a8] sm:$0xff]
    %v1134 = vld [vmem:[#allocation5 + $0x1b0] sm:$0xff]
    %v1135 = vld [vmem:[#allocation5 + $0x1b8] sm:$0xff]
    %v1136 = vld [vmem:[#allocation5 + $0x1c0] sm:$0xff]
    %v1137 = vld [vmem:[#allocation5 + $0x1c8] sm:$0xff]
    %v1138 = vld [vmem:[#allocation5 + $0x1d0] sm:$0xff]
    %v1139 = vld [vmem:[#allocation5 + $0x1d8] sm:$0xff]
    %v1140 = vld [vmem:[#allocation5 + $0x1e0] sm:$0xff]
    %v1141 = vld [vmem:[#allocation5 + $0x1e8] sm:$0xff]
    %v1142 = vld [vmem:[#allocation5 + $0x1f0] sm:$0xff]
    %v1143 = vld [vmem:[#allocation5 + $0x1f8] sm:$0xff]
    %1144 = vmatprep.subr.mxu0 %v1081
    %1145 = vmatpush1.msra.mxu0 %v1080
    %1146 = vmatprep.subr.mxu0 %v1085
    %1147 = vmatpush1.msra.mxu0 %v1084
    %1148 = vmatprep.subr.mxu0 %v1089
    %1149 = vmatpush1.msra.mxu0 %v1088
    %1150 = vmatprep.subr.mxu0 %v1093
    %1151 = vmatpush1.msra.mxu0 %v1092
    %1152 = vmatprep.subr.mxu0 %v1097
    %1153 = vmatpush1.msra.mxu0 %v1096
    %1154 = vmatprep.subr.mxu0 %v1101
    %1155 = vmatpush1.msra.mxu0 %v1100
    %1156 = vmatprep.subr.mxu0 %v1105
    %1157 = vmatpush1.msra.mxu0 %v1104
    %1158 = vmatprep.subr.mxu0 %v1109
    %1159 = vmatpush1.msra.mxu0 %v1108
    %1160 = vmatprep.subr.mxu0 %v1113
    %1161 = vmatpush1.msra.mxu0 %v1112
    %1162 = vmatprep.subr.mxu0 %v1117
    %1163 = vmatpush1.msra.mxu0 %v1116
    %1164 = vmatprep.subr.mxu0 %v1121
    %1165 = vmatpush1.msra.mxu0 %v1120
    %1166 = vmatprep.subr.mxu0 %v1125
    %1167 = vmatpush1.msra.mxu0 %v1124
    %1168 = vmatprep.subr.mxu0 %v1129
    %1169 = vmatpush1.msra.mxu0 %v1128
    %1170 = vmatprep.subr.mxu0 %v1133
    %1171 = vmatpush1.msra.mxu0 %v1132
    %1172 = vmatprep.subr.mxu0 %v1137
    %1173 = vmatpush1.msra.mxu0 %v1136
    %1174 = vmatprep.subr.mxu0 %v1141
    %1175 = vmatpush1.msra.mxu0 %v1140
    %1176 = vmatprep.subr.mxu0 0.0
    %1177 = vmatpush1.msra.mxu0 0.0
    %1178 = vmatprep.subr.mxu0 0.0
    %1179 = vmatpush1.msra.mxu0 0.0
    %1180 = vmatprep.subr.mxu0 0.0
    %1181 = vmatpush1.msra.mxu0 0.0
    %1182 = vmatprep.subr.mxu0 0.0
    %1183 = vmatpush1.msra.mxu0 0.0
    %1184 = vmatprep.subr.mxu0 0.0
    %1185 = vmatpush1.msra.mxu0 0.0
    %1186 = vmatprep.subr.mxu0 0.0
    %1187 = vmatpush1.msra.mxu0 0.0
    %1188 = vmatprep.subr.mxu0 0.0
    %1189 = vmatpush1.msra.mxu0 0.0
    %1190 = vmatprep.subr.mxu0 0.0
    %1191 = vmatpush1.msra.mxu0 0.0
    %1192 = vmatprep.subr.mxu0 0.0
    %1193 = vmatpush1.msra.mxu0 0.0
    %1194 = vmatprep.subr.mxu0 0.0
    %1195 = vmatpush1.msra.mxu0 0.0
    %1196 = vmatprep.subr.mxu0 0.0
    %1197 = vmatpush1.msra.mxu0 0.0
    %1198 = vmatprep.subr.mxu0 0.0
    %1199 = vmatpush1.msra.mxu0 0.0
    %1200 = vmatprep.subr.mxu0 0.0
    %1201 = vmatpush1.msra.mxu0 0.0
    %1202 = vmatprep.subr.mxu0 0.0
    %1203 = vmatpush1.msra.mxu0 0.0
    %1204 = vmatprep.subr.mxu0 0.0
    %1205 = vmatpush1.msra.mxu0 0.0
    %1206 = vmatprep.subr.mxu0 0.0
    %1207 = vmatpush1.msra.mxu0 0.0
    %1208 = vmatprep.mubr.f32.mxu0 0.0
    %1209 = vmatmul.mubr.f32.gmra.mrb[0].mxu0 %v1073
    %v1210 = vpop.f32.mrb[0].mxu0
    %v1211 = vadd.f32 0.0, %v1210
    %v1212 = vpop.f32.mrb[0].mxu0
    %v1213 = vadd.f32 0.0, %v1212
    %1214 = vdwg.mxu0
    %1215 = vmatprep.subr.mxu0 %v1083
    %1216 = vmatpush1.msra.mxu0 %v1082
    %1217 = vmatprep.subr.mxu0 %v1087
    %1218 = vmatpush1.msra.mxu0 %v1086
    %1219 = vmatprep.subr.mxu0 %v1091
    %1220 = vmatpush1.msra.mxu0 %v1090
    %1221 = vmatprep.subr.mxu0 %v1095
    %1222 = vmatpush1.msra.mxu0 %v1094
    %1223 = vmatprep.subr.mxu0 %v1099
    %1224 = vmatpush1.msra.mxu0 %v1098
    %1225 = vmatprep.subr.mxu0 %v1103
    %1226 = vmatpush1.msra.mxu0 %v1102
    %1227 = vmatprep.subr.mxu0 %v1107
    %1228 = vmatpush1.msra.mxu0 %v1106
    %1229 = vmatprep.subr.mxu0 %v1111
    %1230 = vmatpush1.msra.mxu0 %v1110
    %1231 = vmatprep.subr.mxu0 %v1115
    %1232 = vmatpush1.msra.mxu0 %v1114
    %1233 = vmatprep.subr.mxu0 %v1119
    %1234 = vmatpush1.msra.mxu0 %v1118
    %1235 = vmatprep.subr.mxu0 %v1123
    %1236 = vmatpush1.msra.mxu0 %v1122
    %1237 = vmatprep.subr.mxu0 %v1127
    %1238 = vmatpush1.msra.mxu0 %v1126
    %1239 = vmatprep.subr.mxu0 %v1131
    %1240 = vmatpush1.msra.mxu0 %v1130
    %1241 = vmatprep.subr.mxu0 %v1135
    %1242 = vmatpush1.msra.mxu0 %v1134
    %1243 = vmatprep.subr.mxu0 %v1139
    %1244 = vmatpush1.msra.mxu0 %v1138
    %1245 = vmatprep.subr.mxu0 %v1143
    %1246 = vmatpush1.msra.mxu0 %v1142
    %1247 = vmatprep.subr.mxu0 0.0
    %1248 = vmatpush1.msra.mxu0 0.0
    %1249 = vmatprep.subr.mxu0 0.0
    %1250 = vmatpush1.msra.mxu0 0.0
    %1251 = vmatprep.subr.mxu0 0.0
    %1252 = vmatpush1.msra.mxu0 0.0
    %1253 = vmatprep.subr.mxu0 0.0
    %1254 = vmatpush1.msra.mxu0 0.0
    %1255 = vmatprep.subr.mxu0 0.0
    %1256 = vmatpush1.msra.mxu0 0.0
    %1257 = vmatprep.subr.mxu0 0.0
    %1258 = vmatpush1.msra.mxu0 0.0
    %1259 = vmatprep.subr.mxu0 0.0
    %1260 = vmatpush1.msra.mxu0 0.0
    %1261 = vmatprep.subr.mxu0 0.0
    %1262 = vmatpush1.msra.mxu0 0.0
    %1263 = vmatprep.subr.mxu0 0.0
    %1264 = vmatpush1.msra.mxu0 0.0
    %1265 = vmatprep.subr.mxu0 0.0
    %1266 = vmatpush1.msra.mxu0 0.0
    %1267 = vmatprep.subr.mxu0 0.0
    %1268 = vmatpush1.msra.mxu0 0.0
    %1269 = vmatprep.subr.mxu0 0.0
    %1270 = vmatpush1.msra.mxu0 0.0
    %1271 = vmatprep.subr.mxu0 0.0
    %1272 = vmatpush1.msra.mxu0 0.0
    %1273 = vmatprep.subr.mxu0 0.0
    %1274 = vmatpush1.msra.mxu0 0.0
    %1275 = vmatprep.subr.mxu0 0.0
    %1276 = vmatpush1.msra.mxu0 0.0
    %1277 = vmatprep.subr.mxu0 0.0
    %1278 = vmatpush1.msra.mxu0 0.0
    %1279 = vmatprep.mubr.f32.mxu0 0.0
    %1280 = vmatmul.mubr.f32.gmra.mrb[0].mxu0 %v1073
    %v1281 = vpop.f32.mrb[0].mxu0
    %v1282 = vadd.f32 0.0, %v1281
    %v1283 = vpop.f32.mrb[0].mxu0
    %v1284 = vadd.f32 0.0, %v1283
    %1285 = vdwg.mxu0
    %v1286 = vadd.f32 %v1076, %v1211
    %v1287 = vadd.f32 %v1077, %v1213
    %v1288 = vadd.f32 %v1078, %v1282
    %v1289 = vadd.f32 %v1079, %v1284
    %v1290 = vmul.f32 %v1286, 0.5
    %v1291 = vtanh.pop %v1290
    %v1292 = vmul.f32 %v1291, 0.5
    %v1293 = vadd.f32 %v1292, 0.5
    %v1294 = vmul.f32 %v1287, 0.5
    %v1295 = vtanh.pop %v1294
    %v1296 = vmul.f32 %v1295, 0.5
    %v1297 = vadd.f32 %v1296, 0.5
    %v1298 = vtanh.pop %v1288
    %v1299 = vmul.f32 %v1289, 0.5
    %v1300 = vtanh.pop %v1299
    %v1301 = vmul.f32 %v1300, 0.5
    %v1302 = vadd.f32 %v1301, 0.5
    %v1303 = vmul.f32 %v1297, %v1074
    %v1304 = vmul.f32 %v1293, %v1298
    %v1305 = vadd.f32 %v1303, %v1304
    %v1306 = vtanh.pop %v1305
    %v1307 = vmul.f32 %v1302, %v1306
    %1308 = vst [vmem:[#allocation4] sm:$0xff] %v1305
    %1309 = vst [vmem:[#allocation3] sm:$0xff] %v1307
    %s1310 = scalar_lea.vmem %s4, 24
    %1311 = vst [vmem:[%s1310] sm:$0xff] %v1307
    %v1312 = vld [vmem:[#allocation3] sm:$0xff]
    %v1313 = vld [vmem:[#allocation4] sm:$0xff]
    %s1314 = scalar_lea.vmem [#allocation2], 128
    %v1315 = vld [vmem:[%s1314] sm:$0xff]
    %v1316 = vld [vmem:[%s1314 + $0x8] sm:$0xff]
    %v1317 = vld [vmem:[%s1314 + $0x10] sm:$0xff]
    %v1318 = vld [vmem:[%s1314 + $0x18] sm:$0xff]
    %v1319 = vld [vmem:[#allocation5] sm:$0xff]
    %v1320 = vld [vmem:[#allocation5 + $0x8] sm:$0xff]
    %v1321 = vld [vmem:[#allocation5 + $0x10] sm:$0xff]
    %v1322 = vld [vmem:[#allocation5 + $0x18] sm:$0xff]
    %v1323 = vld [vmem:[#allocation5 + $0x20] sm:$0xff]
    %v1324 = vld [vmem:[#allocation5 + $0x28] sm:$0xff]
    %v1325 = vld [vmem:[#allocation5 + $0x30] sm:$0xff]
    %v1326 = vld [vmem:[#allocation5 + $0x38] sm:$0xff]
    %v1327 = vld [vmem:[#allocation5 + $0x40] sm:$0xff]
    %v1328 = vld [vmem:[#allocation5 + $0x48] sm:$0xff]
    %v1329 = vld [vmem:[#allocation5 + $0x50] sm:$0xff]
    %v1330 = vld [vmem:[#allocation5 + $0x58] sm:$0xff]
    %v1331 = vld [vmem:[#allocation5 + $0x60] sm:$0xff]
    %v1332 = vld [vmem:[#allocation5 + $0x68] sm:$0xff]
    %v1333 = vld [vmem:[#allocation5 + $0x70] sm:$0xff]
    %v1334 = vld [vmem:[#allocation5 + $0x78] sm:$0xff]
    %v1335 = vld [vmem:[#allocation5 + $0x80] sm:$0xff]
    %v1336 = vld [vmem:[#allocation5 + $0x88] sm:$0xff]
    %v1337 = vld [vmem:[#allocation5 + $0x90] sm:$0xff]
    %v1338 = vld [vmem:[#allocation5 + $0x98] sm:$0xff]
    %v1339 = vld [vmem:[#allocation5 + $0xa0] sm:$0xff]
    %v1340 = vld [vmem:[#allocation5 + $0xa8] sm:$0xff]
    %v1341 = vld [vmem:[#allocation5 + $0xb0] sm:$0xff]
    %v1342 = vld [vmem:[#allocation5 + $0xb8] sm:$0xff]
    %v1343 = vld [vmem:[#allocation5 + $0xc0] sm:$0xff]
    %v1344 = vld [vmem:[#allocation5 + $0xc8] sm:$0xff]
    %v1345 = vld [vmem:[#allocation5 + $0xd0] sm:$0xff]
    %v1346 = vld [vmem:[#allocation5 + $0xd8] sm:$0xff]
    %v1347 = vld [vmem:[#allocation5 + $0xe0] sm:$0xff]
    %v1348 = vld [vmem:[#allocation5 + $0xe8] sm:$0xff]
    %v1349 = vld [vmem:[#allocation5 + $0xf0] sm:$0xff]
    %v1350 = vld [vmem:[#allocation5 + $0xf8] sm:$0xff]
    %v1351 = vld [vmem:[#allocation5 + $0x100] sm:$0xff]
    %v1352 = vld [vmem:[#allocation5 + $0x108] sm:$0xff]
    %v1353 = vld [vmem:[#allocation5 + $0x110] sm:$0xff]
    %v1354 = vld [vmem:[#allocation5 + $0x118] sm:$0xff]
    %v1355 = vld [vmem:[#allocation5 + $0x120] sm:$0xff]
    %v1356 = vld [vmem:[#allocation5 + $0x128] sm:$0xff]
    %v1357 = vld [vmem:[#allocation5 + $0x130] sm:$0xff]
    %v1358 = vld [vmem:[#allocation5 + $0x138] sm:$0xff]
    %v1359 = vld [vmem:[#allocation5 + $0x140] sm:$0xff]
    %v1360 = vld [vmem:[#allocation5 + $0x148] sm:$0xff]
    %v1361 = vld [vmem:[#allocation5 + $0x150] sm:$0xff]
    %v1362 = vld [vmem:[#allocation5 + $0x158] sm:$0xff]
    %v1363 = vld [vmem:[#allocation5 + $0x160] sm:$0xff]
    %v1364 = vld [vmem:[#allocation5 + $0x168] sm:$0xff]
    %v1365 = vld [vmem:[#allocation5 + $0x170] sm:$0xff]
    %v1366 = vld [vmem:[#allocation5 + $0x178] sm:$0xff]
    %v1367 = vld [vmem:[#allocation5 + $0x180] sm:$0xff]
    %v1368 = vld [vmem:[#allocation5 + $0x188] sm:$0xff]
    %v1369 = vld [vmem:[#allocation5 + $0x190] sm:$0xff]
    %v1370 = vld [vmem:[#allocation5 + $0x198] sm:$0xff]
    %v1371 = vld [vmem:[#allocation5 + $0x1a0] sm:$0xff]
    %v1372 = vld [vmem:[#allocation5 + $0x1a8] sm:$0xff]
    %v1373 = vld [vmem:[#allocation5 + $0x1b0] sm:$0xff]
    %v1374 = vld [vmem:[#allocation5 + $0x1b8] sm:$0xff]
    %v1375 = vld [vmem:[#allocation5 + $0x1c0] sm:$0xff]
    %v1376 = vld [vmem:[#allocation5 + $0x1c8] sm:$0xff]
    %v1377 = vld [vmem:[#allocation5 + $0x1d0] sm:$0xff]
    %v1378 = vld [vmem:[#allocation5 + $0x1d8] sm:$0xff]
    %v1379 = vld [vmem:[#allocation5 + $0x1e0] sm:$0xff]
    %v1380 = vld [vmem:[#allocation5 + $0x1e8] sm:$0xff]
    %v1381 = vld [vmem:[#allocation5 + $0x1f0] sm:$0xff]
    %v1382 = vld [vmem:[#allocation5 + $0x1f8] sm:$0xff]
    %1383 = vmatprep.subr.mxu0 %v1320
    %1384 = vmatpush1.msra.mxu0 %v1319
    %1385 = vmatprep.subr.mxu0 %v1324
    %1386 = vmatpush1.msra.mxu0 %v1323
    %1387 = vmatprep.subr.mxu0 %v1328
    %1388 = vmatpush1.msra.mxu0 %v1327
    %1389 = vmatprep.subr.mxu0 %v1332
    %1390 = vmatpush1.msra.mxu0 %v1331
    %1391 = vmatprep.subr.mxu0 %v1336
    %1392 = vmatpush1.msra.mxu0 %v1335
    %1393 = vmatprep.subr.mxu0 %v1340
    %1394 = vmatpush1.msra.mxu0 %v1339
    %1395 = vmatprep.subr.mxu0 %v1344
    %1396 = vmatpush1.msra.mxu0 %v1343
    %1397 = vmatprep.subr.mxu0 %v1348
    %1398 = vmatpush1.msra.mxu0 %v1347
    %1399 = vmatprep.subr.mxu0 %v1352
    %1400 = vmatpush1.msra.mxu0 %v1351
    %1401 = vmatprep.subr.mxu0 %v1356
    %1402 = vmatpush1.msra.mxu0 %v1355
    %1403 = vmatprep.subr.mxu0 %v1360
    %1404 = vmatpush1.msra.mxu0 %v1359
    %1405 = vmatprep.subr.mxu0 %v1364
    %1406 = vmatpush1.msra.mxu0 %v1363
    %1407 = vmatprep.subr.mxu0 %v1368
    %1408 = vmatpush1.msra.mxu0 %v1367
    %1409 = vmatprep.subr.mxu0 %v1372
    %1410 = vmatpush1.msra.mxu0 %v1371
    %1411 = vmatprep.subr.mxu0 %v1376
    %1412 = vmatpush1.msra.mxu0 %v1375
    %1413 = vmatprep.subr.mxu0 %v1380
    %1414 = vmatpush1.msra.mxu0 %v1379
    %1415 = vmatprep.subr.mxu0 0.0
    %1416 = vmatpush1.msra.mxu0 0.0
    %1417 = vmatprep.subr.mxu0 0.0
    %1418 = vmatpush1.msra.mxu0 0.0
    %1419 = vmatprep.subr.mxu0 0.0
    %1420 = vmatpush1.msra.mxu0 0.0
    %1421 = vmatprep.subr.mxu0 0.0
    %1422 = vmatpush1.msra.mxu0 0.0
    %1423 = vmatprep.subr.mxu0 0.0
    %1424 = vmatpush1.msra.mxu0 0.0
    %1425 = vmatprep.subr.mxu0 0.0
    %1426 = vmatpush1.msra.mxu0 0.0
    %1427 = vmatprep.subr.mxu0 0.0
    %1428 = vmatpush1.msra.mxu0 0.0
    %1429 = vmatprep.subr.mxu0 0.0
    %1430 = vmatpush1.msra.mxu0 0.0
    %1431 = vmatprep.subr.mxu0 0.0
    %1432 = vmatpush1.msra.mxu0 0.0
    %1433 = vmatprep.subr.mxu0 0.0
    %1434 = vmatpush1.msra.mxu0 0.0
    %1435 = vmatprep.subr.mxu0 0.0
    %1436 = vmatpush1.msra.mxu0 0.0
    %1437 = vmatprep.subr.mxu0 0.0
    %1438 = vmatpush1.msra.mxu0 0.0
    %1439 = vmatprep.subr.mxu0 0.0
    %1440 = vmatpush1.msra.mxu0 0.0
    %1441 = vmatprep.subr.mxu0 0.0
    %1442 = vmatpush1.msra.mxu0 0.0
    %1443 = vmatprep.subr.mxu0 0.0
    %1444 = vmatpush1.msra.mxu0 0.0
    %1445 = vmatprep.subr.mxu0 0.0
    %1446 = vmatpush1.msra.mxu0 0.0
    %1447 = vmatprep.mubr.f32.mxu0 0.0
    %1448 = vmatmul.mubr.f32.gmra.mrb[0].mxu0 %v1312
    %v1449 = vpop.f32.mrb[0].mxu0
    %v1450 = vadd.f32 0.0, %v1449
    %v1451 = vpop.f32.mrb[0].mxu0
    %v1452 = vadd.f32 0.0, %v1451
    %1453 = vdwg.mxu0
    %1454 = vmatprep.subr.mxu0 %v1322
    %1455 = vmatpush1.msra.mxu0 %v1321
    %1456 = vmatprep.subr.mxu0 %v1326
    %1457 = vmatpush1.msra.mxu0 %v1325
    %1458 = vmatprep.subr.mxu0 %v1330
    %1459 = vmatpush1.msra.mxu0 %v1329
    %1460 = vmatprep.subr.mxu0 %v1334
    %1461 = vmatpush1.msra.mxu0 %v1333
    %1462 = vmatprep.subr.mxu0 %v1338
    %1463 = vmatpush1.msra.mxu0 %v1337
    %1464 = vmatprep.subr.mxu0 %v1342
    %1465 = vmatpush1.msra.mxu0 %v1341
    %1466 = vmatprep.subr.mxu0 %v1346
    %1467 = vmatpush1.msra.mxu0 %v1345
    %1468 = vmatprep.subr.mxu0 %v1350
    %1469 = vmatpush1.msra.mxu0 %v1349
    %1470 = vmatprep.subr.mxu0 %v1354
    %1471 = vmatpush1.msra.mxu0 %v1353
    %1472 = vmatprep.subr.mxu0 %v1358
    %1473 = vmatpush1.msra.mxu0 %v1357
    %1474 = vmatprep.subr.mxu0 %v1362
    %1475 = vmatpush1.msra.mxu0 %v1361
    %1476 = vmatprep.subr.mxu0 %v1366
    %1477 = vmatpush1.msra.mxu0 %v1365
    %1478 = vmatprep.subr.mxu0 %v1370
    %1479 = vmatpush1.msra.mxu0 %v1369
    %1480 = vmatprep.subr.mxu0 %v1374
    %1481 = vmatpush1.msra.mxu0 %v1373
    %1482 = vmatprep.subr.mxu0 %v1378
    %1483 = vmatpush1.msra.mxu0 %v1377
    %1484 = vmatprep.subr.mxu0 %v1382
    %1485 = vmatpush1.msra.mxu0 %v1381
    %1486 = vmatprep.subr.mxu0 0.0
    %1487 = vmatpush1.msra.mxu0 0.0
    %1488 = vmatprep.subr.mxu0 0.0
    %1489 = vmatpush1.msra.mxu0 0.0
    %1490 = vmatprep.subr.mxu0 0.0
    %1491 = vmatpush1.msra.mxu0 0.0
    %1492 = vmatprep.subr.mxu0 0.0
    %1493 = vmatpush1.msra.mxu0 0.0
    %1494 = vmatprep.subr.mxu0 0.0
    %1495 = vmatpush1.msra.mxu0 0.0
    %1496 = vmatprep.subr.mxu0 0.0
    %1497 = vmatpush1.msra.mxu0 0.0
    %1498 = vmatprep.subr.mxu0 0.0
    %1499 = vmatpush1.msra.mxu0 0.0
    %1500 = vmatprep.subr.mxu0 0.0
    %1501 = vmatpush1.msra.mxu0 0.0
    %1502 = vmatprep.subr.mxu0 0.0
    %1503 = vmatpush1.msra.mxu0 0.0
    %1504 = vmatprep.subr.mxu0 0.0
    %1505 = vmatpush1.msra.mxu0 0.0
    %1506 = vmatprep.subr.mxu0 0.0
    %1507 = vmatpush1.msra.mxu0 0.0
    %1508 = vmatprep.subr.mxu0 0.0
    %1509 = vmatpush1.msra.mxu0 0.0
    %1510 = vmatprep.subr.mxu0 0.0
    %1511 = vmatpush1.msra.mxu0 0.0
    %1512 = vmatprep.subr.mxu0 0.0
    %1513 = vmatpush1.msra.mxu0 0.0
    %1514 = vmatprep.subr.mxu0 0.0
    %1515 = vmatpush1.msra.mxu0 0.0
    %1516 = vmatprep.subr.mxu0 0.0
    %1517 = vmatpush1.msra.mxu0 0.0
    %1518 = vmatprep.mubr.f32.mxu0 0.0
    %1519 = vmatmul.mubr.f32.gmra.mrb[0].mxu0 %v1312
    %v1520 = vpop.f32.mrb[0].mxu0
    %v1521 = vadd.f32 0.0, %v1520
    %v1522 = vpop.f32.mrb[0].mxu0
    %v1523 = vadd.f32 0.0, %v1522
    %1524 = vdwg.mxu0
    %v1525 = vadd.f32 %v1315, %v1450
    %v1526 = vadd.f32 %v1316, %v1452
    %v1527 = vadd.f32 %v1317, %v1521
    %v1528 = vadd.f32 %v1318, %v1523
    %v1529 = vmul.f32 %v1525, 0.5
    %v1530 = vtanh.pop %v1529
    %v1531 = vmul.f32 %v1530, 0.5
    %v1532 = vadd.f32 %v1531, 0.5
    %v1533 = vmul.f32 %v1526, 0.5
    %v1534 = vtanh.pop %v1533
    %v1535 = vmul.f32 %v1534, 0.5
    %v1536 = vadd.f32 %v1535, 0.5
    %v1537 = vtanh.pop %v1527
    %v1538 = vmul.f32 %v1528, 0.5
    %v1539 = vtanh.pop %v1538
    %v1540 = vmul.f32 %v1539, 0.5
    %v1541 = vadd.f32 %v1540, 0.5
    %v1542 = vmul.f32 %v1536, %v1313
    %v1543 = vmul.f32 %v1532, %v1537
    %v1544 = vadd.f32 %v1542, %v1543
    %v1545 = vtanh.pop %v1544
    %v1546 = vmul.f32 %v1541, %v1545
    %1547 = vst [vmem:[#allocation4] sm:$0xff] %v1544
    %1548 = vst [vmem:[#allocation3] sm:$0xff] %v1546
    %s1549 = scalar_lea.vmem %s4, 32
    %1550 = vst [vmem:[%s1549] sm:$0xff] %v1546
    %v1551 = vld [vmem:[#allocation3] sm:$0xff]
    %v1552 = vld [vmem:[#allocation4] sm:$0xff]
    %s1553 = scalar_lea.vmem [#allocation2], 160
    %v1554 = vld [vmem:[%s1553] sm:$0xff]
    %v1555 = vld [vmem:[%s1553 + $0x8] sm:$0xff]
    %v1556 = vld [vmem:[%s1553 + $0x10] sm:$0xff]
    %v1557 = vld [vmem:[%s1553 + $0x18] sm:$0xff]
    %v1558 = vld [vmem:[#allocation5] sm:$0xff]
    %v1559 = vld [vmem:[#allocation5 + $0x8] sm:$0xff]
    %v1560 = vld [vmem:[#allocation5 + $0x10] sm:$0xff]
    %v1561 = vld [vmem:[#allocation5 + $0x18] sm:$0xff]
    %v1562 = vld [vmem:[#allocation5 + $0x20] sm:$0xff]
    %v1563 = vld [vmem:[#allocation5 + $0x28] sm:$0xff]
    %v1564 = vld [vmem:[#allocation5 + $0x30] sm:$0xff]
    %v1565 = vld [vmem:[#allocation5 + $0x38] sm:$0xff]
    %v1566 = vld [vmem:[#allocation5 + $0x40] sm:$0xff]
    %v1567 = vld [vmem:[#allocation5 + $0x48] sm:$0xff]
    %v1568 = vld [vmem:[#allocation5 + $0x50] sm:$0xff]
    %v1569 = vld [vmem:[#allocation5 + $0x58] sm:$0xff]
    %v1570 = vld [vmem:[#allocation5 + $0x60] sm:$0xff]
    %v1571 = vld [vmem:[#allocation5 + $0x68] sm:$0xff]
    %v1572 = vld [vmem:[#allocation5 + $0x70] sm:$0xff]
    %v1573 = vld [vmem:[#allocation5 + $0x78] sm:$0xff]
    %v1574 = vld [vmem:[#allocation5 + $0x80] sm:$0xff]
    %v1575 = vld [vmem:[#allocation5 + $0x88] sm:$0xff]
    %v1576 = vld [vmem:[#allocation5 + $0x90] sm:$0xff]
    %v1577 = vld [vmem:[#allocation5 + $0x98] sm:$0xff]
    %v1578 = vld [vmem:[#allocation5 + $0xa0] sm:$0xff]
    %v1579 = vld [vmem:[#allocation5 + $0xa8] sm:$0xff]
    %v1580 = vld [vmem:[#allocation5 + $0xb0] sm:$0xff]
    %v1581 = vld [vmem:[#allocation5 + $0xb8] sm:$0xff]
    %v1582 = vld [vmem:[#allocation5 + $0xc0] sm:$0xff]
    %v1583 = vld [vmem:[#allocation5 + $0xc8] sm:$0xff]
    %v1584 = vld [vmem:[#allocation5 + $0xd0] sm:$0xff]
    %v1585 = vld [vmem:[#allocation5 + $0xd8] sm:$0xff]
    %v1586 = vld [vmem:[#allocation5 + $0xe0] sm:$0xff]
    %v1587 = vld [vmem:[#allocation5 + $0xe8] sm:$0xff]
    %v1588 = vld [vmem:[#allocation5 + $0xf0] sm:$0xff]
    %v1589 = vld [vmem:[#allocation5 + $0xf8] sm:$0xff]
    %v1590 = vld [vmem:[#allocation5 + $0x100] sm:$0xff]
    %v1591 = vld [vmem:[#allocation5 + $0x108] sm:$0xff]
    %v1592 = vld [vmem:[#allocation5 + $0x110] sm:$0xff]
    %v1593 = vld [vmem:[#allocation5 + $0x118] sm:$0xff]
    %v1594 = vld [vmem:[#allocation5 + $0x120] sm:$0xff]
    %v1595 = vld [vmem:[#allocation5 + $0x128] sm:$0xff]
    %v1596 = vld [vmem:[#allocation5 + $0x130] sm:$0xff]
    %v1597 = vld [vmem:[#allocation5 + $0x138] sm:$0xff]
    %v1598 = vld [vmem:[#allocation5 + $0x140] sm:$0xff]
    %v1599 = vld [vmem:[#allocation5 + $0x148] sm:$0xff]
    %v1600 = vld [vmem:[#allocation5 + $0x150] sm:$0xff]
    %v1601 = vld [vmem:[#allocation5 + $0x158] sm:$0xff]
    %v1602 = vld [vmem:[#allocation5 + $0x160] sm:$0xff]
    %v1603 = vld [vmem:[#allocation5 + $0x168] sm:$0xff]
    %v1604 = vld [vmem:[#allocation5 + $0x170] sm:$0xff]
    %v1605 = vld [vmem:[#allocation5 + $0x178] sm:$0xff]
    %v1606 = vld [vmem:[#allocation5 + $0x180] sm:$0xff]
    %v1607 = vld [vmem:[#allocation5 + $0x188] sm:$0xff]
    %v1608 = vld [vmem:[#allocation5 + $0x190] sm:$0xff]
    %v1609 = vld [vmem:[#allocation5 + $0x198] sm:$0xff]
    %v1610 = vld [vmem:[#allocation5 + $0x1a0] sm:$0xff]
    %v1611 = vld [vmem:[#allocation5 + $0x1a8] sm:$0xff]
    %v1612 = vld [vmem:[#allocation5 + $0x1b0] sm:$0xff]
    %v1613 = vld [vmem:[#allocation5 + $0x1b8] sm:$0xff]
    %v1614 = vld [vmem:[#allocation5 + $0x1c0] sm:$0xff]
    %v1615 = vld [vmem:[#allocation5 + $0x1c8] sm:$0xff]
    %v1616 = vld [vmem:[#allocation5 + $0x1d0] sm:$0xff]
    %v1617 = vld [vmem:[#allocation5 + $0x1d8] sm:$0xff]
    %v1618 = vld [vmem:[#allocation5 + $0x1e0] sm:$0xff]
    %v1619 = vld [vmem:[#allocation5 + $0x1e8] sm:$0xff]
    %v1620 = vld [vmem:[#allocation5 + $0x1f0] sm:$0xff]
    %v1621 = vld [vmem:[#allocation5 + $0x1f8] sm:$0xff]
    %1622 = vmatprep.subr.mxu0 %v1559
    %1623 = vmatpush1.msra.mxu0 %v1558
    %1624 = vmatprep.subr.mxu0 %v1563
    %1625 = vmatpush1.msra.mxu0 %v1562
    %1626 = vmatprep.subr.mxu0 %v1567
    %1627 = vmatpush1.msra.mxu0 %v1566
    %1628 = vmatprep.subr.mxu0 %v1571
    %1629 = vmatpush1.msra.mxu0 %v1570
    %1630 = vmatprep.subr.mxu0 %v1575
    %1631 = vmatpush1.msra.mxu0 %v1574
    %1632 = vmatprep.subr.mxu0 %v1579
    %1633 = vmatpush1.msra.mxu0 %v1578
    %1634 = vmatprep.subr.mxu0 %v1583
    %1635 = vmatpush1.msra.mxu0 %v1582
    %1636 = vmatprep.subr.mxu0 %v1587
    %1637 = vmatpush1.msra.mxu0 %v1586
    %1638 = vmatprep.subr.mxu0 %v1591
    %1639 = vmatpush1.msra.mxu0 %v1590
    %1640 = vmatprep.subr.mxu0 %v1595
    %1641 = vmatpush1.msra.mxu0 %v1594
    %1642 = vmatprep.subr.mxu0 %v1599
    %1643 = vmatpush1.msra.mxu0 %v1598
    %1644 = vmatprep.subr.mxu0 %v1603
    %1645 = vmatpush1.msra.mxu0 %v1602
    %1646 = vmatprep.subr.mxu0 %v1607
    %1647 = vmatpush1.msra.mxu0 %v1606
    %1648 = vmatprep.subr.mxu0 %v1611
    %1649 = vmatpush1.msra.mxu0 %v1610
    %1650 = vmatprep.subr.mxu0 %v1615
    %1651 = vmatpush1.msra.mxu0 %v1614
    %1652 = vmatprep.subr.mxu0 %v1619
    %1653 = vmatpush1.msra.mxu0 %v1618
    %1654 = vmatprep.subr.mxu0 0.0
    %1655 = vmatpush1.msra.mxu0 0.0
    %1656 = vmatprep.subr.mxu0 0.0
    %1657 = vmatpush1.msra.mxu0 0.0
    %1658 = vmatprep.subr.mxu0 0.0
    %1659 = vmatpush1.msra.mxu0 0.0
    %1660 = vmatprep.subr.mxu0 0.0
    %1661 = vmatpush1.msra.mxu0 0.0
    %1662 = vmatprep.subr.mxu0 0.0
    %1663 = vmatpush1.msra.mxu0 0.0
    %1664 = vmatprep.subr.mxu0 0.0
    %1665 = vmatpush1.msra.mxu0 0.0
    %1666 = vmatprep.subr.mxu0 0.0
    %1667 = vmatpush1.msra.mxu0 0.0
    %1668 = vmatprep.subr.mxu0 0.0
    %1669 = vmatpush1.msra.mxu0 0.0
    %1670 = vmatprep.subr.mxu0 0.0
    %1671 = vmatpush1.msra.mxu0 0.0
    %1672 = vmatprep.subr.mxu0 0.0
    %1673 = vmatpush1.msra.mxu0 0.0
    %1674 = vmatprep.subr.mxu0 0.0
    %1675 = vmatpush1.msra.mxu0 0.0
    %1676 = vmatprep.subr.mxu0 0.0
    %1677 = vmatpush1.msra.mxu0 0.0
    %1678 = vmatprep.subr.mxu0 0.0
    %1679 = vmatpush1.msra.mxu0 0.0
    %1680 = vmatprep.subr.mxu0 0.0
    %1681 = vmatpush1.msra.mxu0 0.0
    %1682 = vmatprep.subr.mxu0 0.0
    %1683 = vmatpush1.msra.mxu0 0.0
    %1684 = vmatprep.subr.mxu0 0.0
    %1685 = vmatpush1.msra.mxu0 0.0
    %1686 = vmatprep.mubr.f32.mxu0 0.0
    %1687 = vmatmul.mubr.f32.gmra.mrb[0].mxu0 %v1551
    %v1688 = vpop.f32.mrb[0].mxu0
    %v1689 = vadd.f32 0.0, %v1688
    %v1690 = vpop.f32.mrb[0].mxu0
    %v1691 = vadd.f32 0.0, %v1690
    %1692 = vdwg.mxu0
    %1693 = vmatprep.subr.mxu0 %v1561
    %1694 = vmatpush1.msra.mxu0 %v1560
    %1695 = vmatprep.subr.mxu0 %v1565
    %1696 = vmatpush1.msra.mxu0 %v1564
    %1697 = vmatprep.subr.mxu0 %v1569
    %1698 = vmatpush1.msra.mxu0 %v1568
    %1699 = vmatprep.subr.mxu0 %v1573
    %1700 = vmatpush1.msra.mxu0 %v1572
    %1701 = vmatprep.subr.mxu0 %v1577
    %1702 = vmatpush1.msra.mxu0 %v1576
    %1703 = vmatprep.subr.mxu0 %v1581
    %1704 = vmatpush1.msra.mxu0 %v1580
    %1705 = vmatprep.subr.mxu0 %v1585
    %1706 = vmatpush1.msra.mxu0 %v1584
    %1707 = vmatprep.subr.mxu0 %v1589
    %1708 = vmatpush1.msra.mxu0 %v1588
    %1709 = vmatprep.subr.mxu0 %v1593
    %1710 = vmatpush1.msra.mxu0 %v1592
    %1711 = vmatprep.subr.mxu0 %v1597
    %1712 = vmatpush1.msra.mxu0 %v1596
    %1713 = vmatprep.subr.mxu0 %v1601
    %1714 = vmatpush1.msra.mxu0 %v1600
    %1715 = vmatprep.subr.mxu0 %v1605
    %1716 = vmatpush1.msra.mxu0 %v1604
    %1717 = vmatprep.subr.mxu0 %v1609
    %1718 = vmatpush1.msra.mxu0 %v1608
    %1719 = vmatprep.subr.mxu0 %v1613
    %1720 = vmatpush1.msra.mxu0 %v1612
    %1721 = vmatprep.subr.mxu0 %v1617
    %1722 = vmatpush1.msra.mxu0 %v1616
    %1723 = vmatprep.subr.mxu0 %v1621
    %1724 = vmatpush1.msra.mxu0 %v1620
    %1725 = vmatprep.subr.mxu0 0.0
    %1726 = vmatpush1.msra.mxu0 0.0
    %1727 = vmatprep.subr.mxu0 0.0
    %1728 = vmatpush1.msra.mxu0 0.0
    %1729 = vmatprep.subr.mxu0 0.0
    %1730 = vmatpush1.msra.mxu0 0.0
    %1731 = vmatprep.subr.mxu0 0.0
    %1732 = vmatpush1.msra.mxu0 0.0
    %1733 = vmatprep.subr.mxu0 0.0
    %1734 = vmatpush1.msra.mxu0 0.0
    %1735 = vmatprep.subr.mxu0 0.0
    %1736 = vmatpush1.msra.mxu0 0.0
    %1737 = vmatprep.subr.mxu0 0.0
    %1738 = vmatpush1.msra.mxu0 0.0
    %1739 = vmatprep.subr.mxu0 0.0
    %1740 = vmatpush1.msra.mxu0 0.0
    %1741 = vmatprep.subr.mxu0 0.0
    %1742 = vmatpush1.msra.mxu0 0.0
    %1743 = vmatprep.subr.mxu0 0.0
    %1744 = vmatpush1.msra.mxu0 0.0
    %1745 = vmatprep.subr.mxu0 0.0
    %1746 = vmatpush1.msra.mxu0 0.0
    %1747 = vmatprep.subr.mxu0 0.0
    %1748 = vmatpush1.msra.mxu0 0.0
    %1749 = vmatprep.subr.mxu0 0.0
    %1750 = vmatpush1.msra.mxu0 0.0
    %1751 = vmatprep.subr.mxu0 0.0
    %1752 = vmatpush1.msra.mxu0 0.0
    %1753 = vmatprep.subr.mxu0 0.0
    %1754 = vmatpush1.msra.mxu0 0.0
    %1755 = vmatprep.subr.mxu0 0.0
    %1756 = vmatpush1.msra.mxu0 0.0
    %1757 = vmatprep.mubr.f32.mxu0 0.0
    %1758 = vmatmul.mubr.f32.gmra.mrb[0].mxu0 %v1551
    %v1759 = vpop.f32.mrb[0].mxu0
    %v1760 = vadd.f32 0.0, %v1759
    %v1761 = vpop.f32.mrb[0].mxu0
    %v1762 = vadd.f32 0.0, %v1761
    %1763 = vdwg.mxu0
    %v1764 = vadd.f32 %v1554, %v1689
    %v1765 = vadd.f32 %v1555, %v1691
    %v1766 = vadd.f32 %v1556, %v1760
    %v1767 = vadd.f32 %v1557, %v1762
    %v1768 = vmul.f32 %v1764, 0.5
    %v1769 = vtanh.pop %v1768
    %v1770 = vmul.f32 %v1769, 0.5
    %v1771 = vadd.f32 %v1770, 0.5
    %v1772 = vmul.f32 %v1765, 0.5
    %v1773 = vtanh.pop %v1772
    %v1774 = vmul.f32 %v1773, 0.5
    %v1775 = vadd.f32 %v1774, 0.5
    %v1776 = vtanh.pop %v1766
    %v1777 = vmul.f32 %v1767, 0.5
    %v1778 = vtanh.pop %v1777
    %v1779 = vmul.f32 %v1778, 0.5
    %v1780 = vadd.f32 %v1779, 0.5
    %v1781 = vmul.f32 %v1775, %v1552
    %v1782 = vmul.f32 %v1771, %v1776
    %v1783 = vadd.f32 %v1781, %v1782
    %v1784 = vtanh.pop %v1783
    %v1785 = vmul.f32 %v1780, %v1784
    %1786 = vst [vmem:[#allocation4] sm:$0xff] %v1783
    %1787 = vst [vmem:[#allocation3] sm:$0xff] %v1785
    %s1788 = scalar_lea.vmem %s4, 40
    %1789 = vst [vmem:[%s1788] sm:$0xff] %v1785
    %v1790 = vld [vmem:[#allocation3] sm:$0xff]
    %v1791 = vld [vmem:[#allocation4] sm:$0xff]
    %s1792 = scalar_lea.vmem [#allocation2], 192
    %v1793 = vld [vmem:[%s1792] sm:$0xff]
    %v1794 = vld [vmem:[%s1792 + $0x8] sm:$0xff]
    %v1795 = vld [vmem:[%s1792 + $0x10] sm:$0xff]
    %v1796 = vld [vmem:[%s1792 + $0x18] sm:$0xff]
    %v1797 = vld [vmem:[#allocation5] sm:$0xff]
    %v1798 = vld [vmem:[#allocation5 + $0x8] sm:$0xff]
    %v1799 = vld [vmem:[#allocation5 + $0x10] sm:$0xff]
    %v1800 = vld [vmem:[#allocation5 + $0x18] sm:$0xff]
    %v1801 = vld [vmem:[#allocation5 + $0x20] sm:$0xff]
    %v1802 = vld [vmem:[#allocation5 + $0x28] sm:$0xff]
    %v1803 = vld [vmem:[#allocation5 + $0x30] sm:$0xff]
    %v1804 = vld [vmem:[#allocation5 + $0x38] sm:$0xff]
    %v1805 = vld [vmem:[#allocation5 + $0x40] sm:$0xff]
    %v1806 = vld [vmem:[#allocation5 + $0x48] sm:$0xff]
    %v1807 = vld [vmem:[#allocation5 + $0x50] sm:$0xff]
    %v1808 = vld [vmem:[#allocation5 + $0x58] sm:$0xff]
    %v1809 = vld [vmem:[#allocation5 + $0x60] sm:$0xff]
    %v1810 = vld [vmem:[#allocation5 + $0x68] sm:$0xff]
    %v1811 = vld [vmem:[#allocation5 + $0x70] sm:$0xff]
    %v1812 = vld [vmem:[#allocation5 + $0x78] sm:$0xff]
    %v1813 = vld [vmem:[#allocation5 + $0x80] sm:$0xff]
    %v1814 = vld [vmem:[#allocation5 + $0x88] sm:$0xff]
    %v1815 = vld [vmem:[#allocation5 + $0x90] sm:$0xff]
    %v1816 = vld [vmem:[#allocation5 + $0x98] sm:$0xff]
    %v1817 = vld [vmem:[#allocation5 + $0xa0] sm:$0xff]
    %v1818 = vld [vmem:[#allocation5 + $0xa8] sm:$0xff]
    %v1819 = vld [vmem:[#allocation5 + $0xb0] sm:$0xff]
    %v1820 = vld [vmem:[#allocation5 + $0xb8] sm:$0xff]
    %v1821 = vld [vmem:[#allocation5 + $0xc0] sm:$0xff]
    %v1822 = vld [vmem:[#allocation5 + $0xc8] sm:$0xff]
    %v1823 = vld [vmem:[#allocation5 + $0xd0] sm:$0xff]
    %v1824 = vld [vmem:[#allocation5 + $0xd8] sm:$0xff]
    %v1825 = vld [vmem:[#allocation5 + $0xe0] sm:$0xff]
    %v1826 = vld [vmem:[#allocation5 + $0xe8] sm:$0xff]
    %v1827 = vld [vmem:[#allocation5 + $0xf0] sm:$0xff]
    %v1828 = vld [vmem:[#allocation5 + $0xf8] sm:$0xff]
    %v1829 = vld [vmem:[#allocation5 + $0x100] sm:$0xff]
    %v1830 = vld [vmem:[#allocation5 + $0x108] sm:$0xff]
    %v1831 = vld [vmem:[#allocation5 + $0x110] sm:$0xff]
    %v1832 = vld [vmem:[#allocation5 + $0x118] sm:$0xff]
    %v1833 = vld [vmem:[#allocation5 + $0x120] sm:$0xff]
    %v1834 = vld [vmem:[#allocation5 + $0x128] sm:$0xff]
    %v1835 = vld [vmem:[#allocation5 + $0x130] sm:$0xff]
    %v1836 = vld [vmem:[#allocation5 + $0x138] sm:$0xff]
    %v1837 = vld [vmem:[#allocation5 + $0x140] sm:$0xff]
    %v1838 = vld [vmem:[#allocation5 + $0x148] sm:$0xff]
    %v1839 = vld [vmem:[#allocation5 + $0x150] sm:$0xff]
    %v1840 = vld [vmem:[#allocation5 + $0x158] sm:$0xff]
    %v1841 = vld [vmem:[#allocation5 + $0x160] sm:$0xff]
    %v1842 = vld [vmem:[#allocation5 + $0x168] sm:$0xff]
    %v1843 = vld [vmem:[#allocation5 + $0x170] sm:$0xff]
    %v1844 = vld [vmem:[#allocation5 + $0x178] sm:$0xff]
    %v1845 = vld [vmem:[#allocation5 + $0x180] sm:$0xff]
    %v1846 = vld [vmem:[#allocation5 + $0x188] sm:$0xff]
    %v1847 = vld [vmem:[#allocation5 + $0x190] sm:$0xff]
    %v1848 = vld [vmem:[#allocation5 + $0x198] sm:$0xff]
    %v1849 = vld [vmem:[#allocation5 + $0x1a0] sm:$0xff]
    %v1850 = vld [vmem:[#allocation5 + $0x1a8] sm:$0xff]
    %v1851 = vld [vmem:[#allocation5 + $0x1b0] sm:$0xff]
    %v1852 = vld [vmem:[#allocation5 + $0x1b8] sm:$0xff]
    %v1853 = vld [vmem:[#allocation5 + $0x1c0] sm:$0xff]
    %v1854 = vld [vmem:[#allocation5 + $0x1c8] sm:$0xff]
    %v1855 = vld [vmem:[#allocation5 + $0x1d0] sm:$0xff]
    %v1856 = vld [vmem:[#allocation5 + $0x1d8] sm:$0xff]
    %v1857 = vld [vmem:[#allocation5 + $0x1e0] sm:$0xff]
    %v1858 = vld [vmem:[#allocation5 + $0x1e8] sm:$0xff]
    %v1859 = vld [vmem:[#allocation5 + $0x1f0] sm:$0xff]
    %v1860 = vld [vmem:[#allocation5 + $0x1f8] sm:$0xff]
    %1861 = vmatprep.subr.mxu0 %v1798
    %1862 = vmatpush1.msra.mxu0 %v1797
    %1863 = vmatprep.subr.mxu0 %v1802
    %1864 = vmatpush1.msra.mxu0 %v1801
    %1865 = vmatprep.subr.mxu0 %v1806
    %1866 = vmatpush1.msra.mxu0 %v1805
    %1867 = vmatprep.subr.mxu0 %v1810
    %1868 = vmatpush1.msra.mxu0 %v1809
    %1869 = vmatprep.subr.mxu0 %v1814
    %1870 = vmatpush1.msra.mxu0 %v1813
    %1871 = vmatprep.subr.mxu0 %v1818
    %1872 = vmatpush1.msra.mxu0 %v1817
    %1873 = vmatprep.subr.mxu0 %v1822
    %1874 = vmatpush1.msra.mxu0 %v1821
    %1875 = vmatprep.subr.mxu0 %v1826
    %1876 = vmatpush1.msra.mxu0 %v1825
    %1877 = vmatprep.subr.mxu0 %v1830
    %1878 = vmatpush1.msra.mxu0 %v1829
    %1879 = vmatprep.subr.mxu0 %v1834
    %1880 = vmatpush1.msra.mxu0 %v1833
    %1881 = vmatprep.subr.mxu0 %v1838
    %1882 = vmatpush1.msra.mxu0 %v1837
    %1883 = vmatprep.subr.mxu0 %v1842
    %1884 = vmatpush1.msra.mxu0 %v1841
    %1885 = vmatprep.subr.mxu0 %v1846
    %1886 = vmatpush1.msra.mxu0 %v1845
    %1887 = vmatprep.subr.mxu0 %v1850
    %1888 = vmatpush1.msra.mxu0 %v1849
    %1889 = vmatprep.subr.mxu0 %v1854
    %1890 = vmatpush1.msra.mxu0 %v1853
    %1891 = vmatprep.subr.mxu0 %v1858
    %1892 = vmatpush1.msra.mxu0 %v1857
    %1893 = vmatprep.subr.mxu0 0.0
    %1894 = vmatpush1.msra.mxu0 0.0
    %1895 = vmatprep.subr.mxu0 0.0
    %1896 = vmatpush1.msra.mxu0 0.0
    %1897 = vmatprep.subr.mxu0 0.0
    %1898 = vmatpush1.msra.mxu0 0.0
    %1899 = vmatprep.subr.mxu0 0.0
    %1900 = vmatpush1.msra.mxu0 0.0
    %1901 = vmatprep.subr.mxu0 0.0
    %1902 = vmatpush1.msra.mxu0 0.0
    %1903 = vmatprep.subr.mxu0 0.0
    %1904 = vmatpush1.msra.mxu0 0.0
    %1905 = vmatprep.subr.mxu0 0.0
    %1906 = vmatpush1.msra.mxu0 0.0
    %1907 = vmatprep.subr.mxu0 0.0
    %1908 = vmatpush1.msra.mxu0 0.0
    %1909 = vmatprep.subr.mxu0 0.0
    %1910 = vmatpush1.msra.mxu0 0.0
    %1911 = vmatprep.subr.mxu0 0.0
    %1912 = vmatpush1.msra.mxu0 0.0
    %1913 = vmatprep.subr.mxu0 0.0
    %1914 = vmatpush1.msra.mxu0 0.0
    %1915 = vmatprep.subr.mxu0 0.0
    %1916 = vmatpush1.msra.mxu0 0.0
    %1917 = vmatprep.subr.mxu0 0.0
    %1918 = vmatpush1.msra.mxu0 0.0
    %1919 = vmatprep.subr.mxu0 0.0
    %1920 = vmatpush1.msra.mxu0 0.0
    %1921 = vmatprep.subr.mxu0 0.0
    %1922 = vmatpush1.msra.mxu0 0.0
    %1923 = vmatprep.subr.mxu0 0.0
    %1924 = vmatpush1.msra.mxu0 0.0
    %1925 = vmatprep.mubr.f32.mxu0 0.0
    %1926 = vmatmul.mubr.f32.gmra.mrb[0].mxu0 %v1790
    %v1927 = vpop.f32.mrb[0].mxu0
    %v1928 = vadd.f32 0.0, %v1927
    %v1929 = vpop.f32.mrb[0].mxu0
    %v1930 = vadd.f32 0.0, %v1929
    %1931 = vdwg.mxu0
    %1932 = vmatprep.subr.mxu0 %v1800
    %1933 = vmatpush1.msra.mxu0 %v1799
    %1934 = vmatprep.subr.mxu0 %v1804
    %1935 = vmatpush1.msra.mxu0 %v1803
    %1936 = vmatprep.subr.mxu0 %v1808
    %1937 = vmatpush1.msra.mxu0 %v1807
    %1938 = vmatprep.subr.mxu0 %v1812
    %1939 = vmatpush1.msra.mxu0 %v1811
    %1940 = vmatprep.subr.mxu0 %v1816
    %1941 = vmatpush1.msra.mxu0 %v1815
    %1942 = vmatprep.subr.mxu0 %v1820
    %1943 = vmatpush1.msra.mxu0 %v1819
    %1944 = vmatprep.subr.mxu0 %v1824
    %1945 = vmatpush1.msra.mxu0 %v1823
    %1946 = vmatprep.subr.mxu0 %v1828
    %1947 = vmatpush1.msra.mxu0 %v1827
    %1948 = vmatprep.subr.mxu0 %v1832
    %1949 = vmatpush1.msra.mxu0 %v1831
    %1950 = vmatprep.subr.mxu0 %v1836
    %1951 = vmatpush1.msra.mxu0 %v1835
    %1952 = vmatprep.subr.mxu0 %v1840
    %1953 = vmatpush1.msra.mxu0 %v1839
    %1954 = vmatprep.subr.mxu0 %v1844
    %1955 = vmatpush1.msra.mxu0 %v1843
    %1956 = vmatprep.subr.mxu0 %v1848
    %1957 = vmatpush1.msra.mxu0 %v1847
    %1958 = vmatprep.subr.mxu0 %v1852
    %1959 = vmatpush1.msra.mxu0 %v1851
    %1960 = vmatprep.subr.mxu0 %v1856
    %1961 = vmatpush1.msra.mxu0 %v1855
    %1962 = vmatprep.subr.mxu0 %v1860
    %1963 = vmatpush1.msra.mxu0 %v1859
    %1964 = vmatprep.subr.mxu0 0.0
    %1965 = vmatpush1.msra.mxu0 0.0
    %1966 = vmatprep.subr.mxu0 0.0
    %1967 = vmatpush1.msra.mxu0 0.0
    %1968 = vmatprep.subr.mxu0 0.0
    %1969 = vmatpush1.msra.mxu0 0.0
    %1970 = vmatprep.subr.mxu0 0.0
    %1971 = vmatpush1.msra.mxu0 0.0
    %1972 = vmatprep.subr.mxu0 0.0
    %1973 = vmatpush1.msra.mxu0 0.0
    %1974 = vmatprep.subr.mxu0 0.0
    %1975 = vmatpush1.msra.mxu0 0.0
    %1976 = vmatprep.subr.mxu0 0.0
    %1977 = vmatpush1.msra.mxu0 0.0
    %1978 = vmatprep.subr.mxu0 0.0
    %1979 = vmatpush1.msra.mxu0 0.0
    %1980 = vmatprep.subr.mxu0 0.0
    %1981 = vmatpush1.msra.mxu0 0.0
    %1982 = vmatprep.subr.mxu0 0.0
    %1983 = vmatpush1.msra.mxu0 0.0
    %1984 = vmatprep.subr.mxu0 0.0
    %1985 = vmatpush1.msra.mxu0 0.0
    %1986 = vmatprep.subr.mxu0 0.0
    %1987 = vmatpush1.msra.mxu0 0.0
    %1988 = vmatprep.subr.mxu0 0.0
    %1989 = vmatpush1.msra.mxu0 0.0
    %1990 = vmatprep.subr.mxu0 0.0
    %1991 = vmatpush1.msra.mxu0 0.0
    %1992 = vmatprep.subr.mxu0 0.0
    %1993 = vmatpush1.msra.mxu0 0.0
    %1994 = vmatprep.subr.mxu0 0.0
    %1995 = vmatpush1.msra.mxu0 0.0
    %1996 = vmatprep.mubr.f32.mxu0 0.0
    %1997 = vmatmul.mubr.f32.gmra.mrb[0].mxu0 %v1790
    %v1998 = vpop.f32.mrb[0].mxu0
    %v1999 = vadd.f32 0.0, %v1998
    %v2000 = vpop.f32.mrb[0].mxu0
    %v2001 = vadd.f32 0.0, %v2000
    %2002 = vdwg.mxu0
    %v2003 = vadd.f32 %v1793, %v1928
    %v2004 = vadd.f32 %v1794, %v1930
    %v2005 = vadd.f32 %v1795, %v1999
    %v2006 = vadd.f32 %v1796, %v2001
    %v2007 = vmul.f32 %v2003, 0.5
    %v2008 = vtanh.pop %v2007
    %v2009 = vmul.f32 %v2008, 0.5
    %v2010 = vadd.f32 %v2009, 0.5
    %v2011 = vmul.f32 %v2004, 0.5
    %v2012 = vtanh.pop %v2011
    %v2013 = vmul.f32 %v2012, 0.5
    %v2014 = vadd.f32 %v2013, 0.5
    %v2015 = vtanh.pop %v2005
    %v2016 = vmul.f32 %v2006, 0.5
    %v2017 = vtanh.pop %v2016
    %v2018 = vmul.f32 %v2017, 0.5
    %v2019 = vadd.f32 %v2018, 0.5
    %v2020 = vmul.f32 %v2014, %v1791
    %v2021 = vmul.f32 %v2010, %v2015
    %v2022 = vadd.f32 %v2020, %v2021
    %v2023 = vtanh.pop %v2022
    %v2024 = vmul.f32 %v2019, %v2023
    %2025 = vst [vmem:[#allocation4] sm:$0xff] %v2022
    %2026 = vst [vmem:[#allocation3] sm:$0xff] %v2024
    %s2027 = scalar_lea.vmem %s4, 48
    %2028 = vst [vmem:[%s2027] sm:$0xff] %v2024
    %v2029 = vld [vmem:[#allocation3] sm:$0xff]
    %v2030 = vld [vmem:[#allocation4] sm:$0xff]
    %s2031 = scalar_lea.vmem [#allocation2], 224
    %v2032 = vld [vmem:[%s2031] sm:$0xff]
    %v2033 = vld [vmem:[%s2031 + $0x8] sm:$0xff]
    %v2034 = vld [vmem:[%s2031 + $0x10] sm:$0xff]
    %v2035 = vld [vmem:[%s2031 + $0x18] sm:$0xff]
    %v2036 = vld [vmem:[#allocation5] sm:$0xff]
    %v2037 = vld [vmem:[#allocation5 + $0x8] sm:$0xff]
    %v2038 = vld [vmem:[#allocation5 + $0x10] sm:$0xff]
    %v2039 = vld [vmem:[#allocation5 + $0x18] sm:$0xff]
    %v2040 = vld [vmem:[#allocation5 + $0x20] sm:$0xff]
    %v2041 = vld [vmem:[#allocation5 + $0x28] sm:$0xff]
    %v2042 = vld [vmem:[#allocation5 + $0x30] sm:$0xff]
    %v2043 = vld [vmem:[#allocation5 + $0x38] sm:$0xff]
    %v2044 = vld [vmem:[#allocation5 + $0x40] sm:$0xff]
    %v2045 = vld [vmem:[#allocation5 + $0x48] sm:$0xff]
    %v2046 = vld [vmem:[#allocation5 + $0x50] sm:$0xff]
    %v2047 = vld [vmem:[#allocation5 + $0x58] sm:$0xff]
    %v2048 = vld [vmem:[#allocation5 + $0x60] sm:$0xff]
    %v2049 = vld [vmem:[#allocation5 + $0x68] sm:$0xff]
    %v2050 = vld [vmem:[#allocation5 + $0x70] sm:$0xff]
    %v2051 = vld [vmem:[#allocation5 + $0x78] sm:$0xff]
    %v2052 = vld [vmem:[#allocation5 + $0x80] sm:$0xff]
    %v2053 = vld [vmem:[#allocation5 + $0x88] sm:$0xff]
    %v2054 = vld [vmem:[#allocation5 + $0x90] sm:$0xff]
    %v2055 = vld [vmem:[#allocation5 + $0x98] sm:$0xff]
    %v2056 = vld [vmem:[#allocation5 + $0xa0] sm:$0xff]
    %v2057 = vld [vmem:[#allocation5 + $0xa8] sm:$0xff]
    %v2058 = vld [vmem:[#allocation5 + $0xb0] sm:$0xff]
    %v2059 = vld [vmem:[#allocation5 + $0xb8] sm:$0xff]
    %v2060 = vld [vmem:[#allocation5 + $0xc0] sm:$0xff]
    %v2061 = vld [vmem:[#allocation5 + $0xc8] sm:$0xff]
    %v2062 = vld [vmem:[#allocation5 + $0xd0] sm:$0xff]
    %v2063 = vld [vmem:[#allocation5 + $0xd8] sm:$0xff]
    %v2064 = vld [vmem:[#allocation5 + $0xe0] sm:$0xff]
    %v2065 = vld [vmem:[#allocation5 + $0xe8] sm:$0xff]
    %v2066 = vld [vmem:[#allocation5 + $0xf0] sm:$0xff]
    %v2067 = vld [vmem:[#allocation5 + $0xf8] sm:$0xff]
    %v2068 = vld [vmem:[#allocation5 + $0x100] sm:$0xff]
    %v2069 = vld [vmem:[#allocation5 + $0x108] sm:$0xff]
    %v2070 = vld [vmem:[#allocation5 + $0x110] sm:$0xff]
    %v2071 = vld [vmem:[#allocation5 + $0x118] sm:$0xff]
    %v2072 = vld [vmem:[#allocation5 + $0x120] sm:$0xff]
    %v2073 = vld [vmem:[#allocation5 + $0x128] sm:$0xff]
    %v2074 = vld [vmem:[#allocation5 + $0x130] sm:$0xff]
    %v2075 = vld [vmem:[#allocation5 + $0x138] sm:$0xff]
    %v2076 = vld [vmem:[#allocation5 + $0x140] sm:$0xff]
    %v2077 = vld [vmem:[#allocation5 + $0x148] sm:$0xff]
    %v2078 = vld [vmem:[#allocation5 + $0x150] sm:$0xff]
    %v2079 = vld [vmem:[#allocation5 + $0x158] sm:$0xff]
    %v2080 = vld [vmem:[#allocation5 + $0x160] sm:$0xff]
    %v2081 = vld [vmem:[#allocation5 + $0x168] sm:$0xff]
    %v2082 = vld [vmem:[#allocation5 + $0x170] sm:$0xff]
    %v2083 = vld [vmem:[#allocation5 + $0x178] sm:$0xff]
    %v2084 = vld [vmem:[#allocation5 + $0x180] sm:$0xff]
    %v2085 = vld [vmem:[#allocation5 + $0x188] sm:$0xff]
    %v2086 = vld [vmem:[#allocation5 + $0x190] sm:$0xff]
    %v2087 = vld [vmem:[#allocation5 + $0x198] sm:$0xff]
    %v2088 = vld [vmem:[#allocation5 + $0x1a0] sm:$0xff]
    %v2089 = vld [vmem:[#allocation5 + $0x1a8] sm:$0xff]
    %v2090 = vld [vmem:[#allocation5 + $0x1b0] sm:$0xff]
    %v2091 = vld [vmem:[#allocation5 + $0x1b8] sm:$0xff]
    %v2092 = vld [vmem:[#allocation5 + $0x1c0] sm:$0xff]
    %v2093 = vld [vmem:[#allocation5 + $0x1c8] sm:$0xff]
    %v2094 = vld [vmem:[#allocation5 + $0x1d0] sm:$0xff]
    %v2095 = vld [vmem:[#allocation5 + $0x1d8] sm:$0xff]
    %v2096 = vld [vmem:[#allocation5 + $0x1e0] sm:$0xff]
    %v2097 = vld [vmem:[#allocation5 + $0x1e8] sm:$0xff]
    %v2098 = vld [vmem:[#allocation5 + $0x1f0] sm:$0xff]
    %v2099 = vld [vmem:[#allocation5 + $0x1f8] sm:$0xff]
    %2100 = vmatprep.subr.mxu0 %v2037
    %2101 = vmatpush1.msra.mxu0 %v2036
    %2102 = vmatprep.subr.mxu0 %v2041
    %2103 = vmatpush1.msra.mxu0 %v2040
    %2104 = vmatprep.subr.mxu0 %v2045
    %2105 = vmatpush1.msra.mxu0 %v2044
    %2106 = vmatprep.subr.mxu0 %v2049
    %2107 = vmatpush1.msra.mxu0 %v2048
    %2108 = vmatprep.subr.mxu0 %v2053
    %2109 = vmatpush1.msra.mxu0 %v2052
    %2110 = vmatprep.subr.mxu0 %v2057
    %2111 = vmatpush1.msra.mxu0 %v2056
    %2112 = vmatprep.subr.mxu0 %v2061
    %2113 = vmatpush1.msra.mxu0 %v2060
    %2114 = vmatprep.subr.mxu0 %v2065
    %2115 = vmatpush1.msra.mxu0 %v2064
    %2116 = vmatprep.subr.mxu0 %v2069
    %2117 = vmatpush1.msra.mxu0 %v2068
    %2118 = vmatprep.subr.mxu0 %v2073
    %2119 = vmatpush1.msra.mxu0 %v2072
    %2120 = vmatprep.subr.mxu0 %v2077
    %2121 = vmatpush1.msra.mxu0 %v2076
    %2122 = vmatprep.subr.mxu0 %v2081
    %2123 = vmatpush1.msra.mxu0 %v2080
    %2124 = vmatprep.subr.mxu0 %v2085
    %2125 = vmatpush1.msra.mxu0 %v2084
    %2126 = vmatprep.subr.mxu0 %v2089
    %2127 = vmatpush1.msra.mxu0 %v2088
    %2128 = vmatprep.subr.mxu0 %v2093
    %2129 = vmatpush1.msra.mxu0 %v2092
    %2130 = vmatprep.subr.mxu0 %v2097
    %2131 = vmatpush1.msra.mxu0 %v2096
    %2132 = vmatprep.subr.mxu0 0.0
    %2133 = vmatpush1.msra.mxu0 0.0
    %2134 = vmatprep.subr.mxu0 0.0
    %2135 = vmatpush1.msra.mxu0 0.0
    %2136 = vmatprep.subr.mxu0 0.0
    %2137 = vmatpush1.msra.mxu0 0.0
    %2138 = vmatprep.subr.mxu0 0.0
    %2139 = vmatpush1.msra.mxu0 0.0
    %2140 = vmatprep.subr.mxu0 0.0
    %2141 = vmatpush1.msra.mxu0 0.0
    %2142 = vmatprep.subr.mxu0 0.0
    %2143 = vmatpush1.msra.mxu0 0.0
    %2144 = vmatprep.subr.mxu0 0.0
    %2145 = vmatpush1.msra.mxu0 0.0
    %2146 = vmatprep.subr.mxu0 0.0
    %2147 = vmatpush1.msra.mxu0 0.0
    %2148 = vmatprep.subr.mxu0 0.0
    %2149 = vmatpush1.msra.mxu0 0.0
    %2150 = vmatprep.subr.mxu0 0.0
    %2151 = vmatpush1.msra.mxu0 0.0
    %2152 = vmatprep.subr.mxu0 0.0
    %2153 = vmatpush1.msra.mxu0 0.0
    %2154 = vmatprep.subr.mxu0 0.0
    %2155 = vmatpush1.msra.mxu0 0.0
    %2156 = vmatprep.subr.mxu0 0.0
    %2157 = vmatpush1.msra.mxu0 0.0
    %2158 = vmatprep.subr.mxu0 0.0
    %2159 = vmatpush1.msra.mxu0 0.0
    %2160 = vmatprep.subr.mxu0 0.0
    %2161 = vmatpush1.msra.mxu0 0.0
    %2162 = vmatprep.subr.mxu0 0.0
    %2163 = vmatpush1.msra.mxu0 0.0
    %2164 = vmatprep.mubr.f32.mxu0 0.0
    %2165 = vmatmul.mubr.f32.gmra.mrb[0].mxu0 %v2029
    %v2166 = vpop.f32.mrb[0].mxu0
    %v2167 = vadd.f32 0.0, %v2166
    %v2168 = vpop.f32.mrb[0].mxu0
    %v2169 = vadd.f32 0.0, %v2168
    %2170 = vdwg.mxu0
    %2171 = vmatprep.subr.mxu0 %v2039
    %2172 = vmatpush1.msra.mxu0 %v2038
    %2173 = vmatprep.subr.mxu0 %v2043
    %2174 = vmatpush1.msra.mxu0 %v2042
    %2175 = vmatprep.subr.mxu0 %v2047
    %2176 = vmatpush1.msra.mxu0 %v2046
    %2177 = vmatprep.subr.mxu0 %v2051
    %2178 = vmatpush1.msra.mxu0 %v2050
    %2179 = vmatprep.subr.mxu0 %v2055
    %2180 = vmatpush1.msra.mxu0 %v2054
    %2181 = vmatprep.subr.mxu0 %v2059
    %2182 = vmatpush1.msra.mxu0 %v2058
    %2183 = vmatprep.subr.mxu0 %v2063
    %2184 = vmatpush1.msra.mxu0 %v2062
    %2185 = vmatprep.subr.mxu0 %v2067
    %2186 = vmatpush1.msra.mxu0 %v2066
    %2187 = vmatprep.subr.mxu0 %v2071
    %2188 = vmatpush1.msra.mxu0 %v2070
    %2189 = vmatprep.subr.mxu0 %v2075
    %2190 = vmatpush1.msra.mxu0 %v2074
    %2191 = vmatprep.subr.mxu0 %v2079
    %2192 = vmatpush1.msra.mxu0 %v2078
    %2193 = vmatprep.subr.mxu0 %v2083
    %2194 = vmatpush1.msra.mxu0 %v2082
    %2195 = vmatprep.subr.mxu0 %v2087
    %2196 = vmatpush1.msra.mxu0 %v2086
    %2197 = vmatprep.subr.mxu0 %v2091
    %2198 = vmatpush1.msra.mxu0 %v2090
    %2199 = vmatprep.subr.mxu0 %v2095
    %2200 = vmatpush1.msra.mxu0 %v2094
    %2201 = vmatprep.subr.mxu0 %v2099
    %2202 = vmatpush1.msra.mxu0 %v2098
    %2203 = vmatprep.subr.mxu0 0.0
    %2204 = vmatpush1.msra.mxu0 0.0
    %2205 = vmatprep.subr.mxu0 0.0
    %2206 = vmatpush1.msra.mxu0 0.0
    %2207 = vmatprep.subr.mxu0 0.0
    %2208 = vmatpush1.msra.mxu0 0.0
    %2209 = vmatprep.subr.mxu0 0.0
    %2210 = vmatpush1.msra.mxu0 0.0
    %2211 = vmatprep.subr.mxu0 0.0
    %2212 = vmatpush1.msra.mxu0 0.0
    %2213 = vmatprep.subr.mxu0 0.0
    %2214 = vmatpush1.msra.mxu0 0.0
    %2215 = vmatprep.subr.mxu0 0.0
    %2216 = vmatpush1.msra.mxu0 0.0
    %2217 = vmatprep.subr.mxu0 0.0
    %2218 = vmatpush1.msra.mxu0 0.0
    %2219 = vmatprep.subr.mxu0 0.0
    %2220 = vmatpush1.msra.mxu0 0.0
    %2221 = vmatprep.subr.mxu0 0.0
    %2222 = vmatpush1.msra.mxu0 0.0
    %2223 = vmatprep.subr.mxu0 0.0
    %2224 = vmatpush1.msra.mxu0 0.0
    %2225 = vmatprep.subr.mxu0 0.0
    %2226 = vmatpush1.msra.mxu0 0.0
    %2227 = vmatprep.subr.mxu0 0.0
    %2228 = vmatpush1.msra.mxu0 0.0
    %2229 = vmatprep.subr.mxu0 0.0
    %2230 = vmatpush1.msra.mxu0 0.0
    %2231 = vmatprep.subr.mxu0 0.0
    %2232 = vmatpush1.msra.mxu0 0.0
    %2233 = vmatprep.subr.mxu0 0.0
    %2234 = vmatpush1.msra.mxu0 0.0
    %2235 = vmatprep.mubr.f32.mxu0 0.0
    %2236 = vmatmul.mubr.f32.gmra.mrb[0].mxu0 %v2029
    %v2237 = vpop.f32.mrb[0].mxu0
    %v2238 = vadd.f32 0.0, %v2237
    %v2239 = vpop.f32.mrb[0].mxu0
    %v2240 = vadd.f32 0.0, %v2239
    %2241 = vdwg.mxu0
    %v2242 = vadd.f32 %v2032, %v2167
    %v2243 = vadd.f32 %v2033, %v2169
    %v2244 = vadd.f32 %v2034, %v2238
    %v2245 = vadd.f32 %v2035, %v2240
    %v2246 = vmul.f32 %v2242, 0.5
    %v2247 = vtanh.pop %v2246
    %v2248 = vmul.f32 %v2247, 0.5
    %v2249 = vadd.f32 %v2248, 0.5
    %v2250 = vmul.f32 %v2243, 0.5
    %v2251 = vtanh.pop %v2250
    %v2252 = vmul.f32 %v2251, 0.5
    %v2253 = vadd.f32 %v2252, 0.5
    %v2254 = vtanh.pop %v2244
    %v2255 = vmul.f32 %v2245, 0.5
    %v2256 = vtanh.pop %v2255
    %v2257 = vmul.f32 %v2256, 0.5
    %v2258 = vadd.f32 %v2257, 0.5
    %v2259 = vmul.f32 %v2253, %v2030
    %v2260 = vmul.f32 %v2249, %v2254
    %v2261 = vadd.f32 %v2259, %v2260
    %v2262 = vtanh.pop %v2261
    %v2263 = vmul.f32 %v2258, %v2262
    %2264 = vst [vmem:[#allocation4] sm:$0xff] %v2261
    %2265 = vst [vmem:[#allocation3] sm:$0xff] %v2263
    %s2266 = scalar_lea.vmem %s4, 56
    %2267 = vst [vmem:[%s2266] sm:$0xff] %v2263
    // Predicated region
    $region26: #{lstm_model_forward.1} parent=1 // pred_check
      _
    $region27: #{lstm_model_forward.1} parent=1 // pred_check_branch
      %2269 = sbr.rel (0) target = $region29
    $region28: #{lstm_model_forward.1} parent=1 // pred_region
      _
    $region29: #{lstm_model_forward.1} parent=1 // pred_fallthru
      _
    // Predicated region
    $region30: #{lstm_model_forward.1} parent=1 // pred_check
      _
    $region31: #{lstm_model_forward.1} parent=1 // pred_check_branch
      %2271 = sbr.rel (0) target = $region33
    $region32: #{lstm_model_forward.1} parent=1 // pred_region
      _
    $region33: #{lstm_model_forward.1} parent=1 // pred_fallthru
      _
    %2272 = vsyncpa [#allocation6], 1

</llo_original>
